<compile_context>
chip_gen: v5e
topology: v5e:2x2
jax: 0.10.0
libtpu: 0.0.40
codegen_flags: <defaults>
</compile_context>

<pallas_src>
import jax
import jax.numpy as jnp
from jax import lax
from jax.experimental import pallas as pl
from jax.experimental.pallas import tpu as pltpu


# Raised scoped-VMEM limit (defaults: 16 MiB v5e / 32 MiB v6e,v7x) so that the
# large tm=512..1024 tiles double-buffer without spilling; kept < 64 MiB so it
# is valid on v7x as well.
_VMEM_LIMIT_BYTES = 48 * 1024 * 1024
_BN_EPS = 1e-5


# -----------------------------------------------------------------------------
# Pallas kernels
# -----------------------------------------------------------------------------
def matmul_bias_silu_kernel(x_ref, w_ref, b_ref, o_ref):
    # x_ref: [tm, Cin] (bf16), w_ref: [Cin, Cout] (bf16, BN scale pre-folded),
    # b_ref: [1, Cout] (f32).  Accumulate + BN bias + SiLU in f32.
    y = jnp.dot(x_ref[...], w_ref[...], preferred_element_type=jnp.float32)
    y = y + b_ref[...]
    o_ref[...] = (y * jax.nn.sigmoid(y)).astype(o_ref.dtype)


def downsample_tail_kernel(c00_ref, c01_ref, c10_ref, c11_ref,
                           a00_ref, a01_ref, a10_ref, a11_ref, a20_ref, a21_ref,
                           w1_ref, w2_ref, b1_ref, b2_ref, o_ref):
    # c**_ref : [1, th, Wo, Cin]   the four corners of each 2x2 pooling window
    # a{kh}{pw}_ref : [1, th, Wo+1, C]  phase-decomposed padded t (row tap kh,
    #                 column phase pw)
    # w1_ref : [Cin, inter]  (bf16, BN-scaled)      -- branch-1 1x1 conv
    # w2_ref : [9, C, inter] (bf16, BN-scaled)      -- branch-2 3x3 conv taps
    # b1_ref / b2_ref : [1, inter] f32 biases
    # o_ref  : [1, th, Wo, 2*inter]  (branch1 | branch2 concatenated)
    _, th, Wo, Cin = c00_ref.shape
    _, C, inter = w2_ref.shape
    rows = th * Wo

    # ---- branch 1: 2x2 max-pool (3 VPU maxes on lane-dense tiles) + 1x1 conv
    pooled = jnp.maximum(
        jnp.maximum(c00_ref[...].reshape(rows, Cin),
                    c01_ref[...].reshape(rows, Cin)),
        jnp.maximum(c10_ref[...].reshape(rows, Cin),
                    c11_ref[...].reshape(rows, Cin)))
    y1 = jnp.dot(pooled, w1_ref[...], preferred_element_type=jnp.float32)
    y1 = y1 + b1_ref[...]
    y1 = y1 * jax.nn.sigmoid(y1)

    # ---- branch 2: fused 3x3 stride-2 conv as 9 tap matmuls, f32 accumulator
    acc = jnp.zeros((rows, inter), jnp.float32)
    a_refs = ((a00_ref, a01_ref), (a10_ref, a11_ref), (a20_ref, a21_ref))
    for kh in range(3):
        s0 = a_refs[kh][0][...].reshape(th, Wo + 1, C)   # column phase 0
        s1 = a_refs[kh][1][...].reshape(th, Wo + 1, C)   # column phase 1
        # (kw, source, column offset): kw=0 -> phase0 off0, kw=1 -> phase1 off0,
        # kw=2 -> phase0 off1.
        for kw, src, js in ((0, s0, 0), (1, s1, 0), (2, s0, 1)):
            tap = src[:, js:js + Wo, :].reshape(rows, C)
            acc = acc + jnp.dot(tap, w2_ref[kh * 3 + kw],
                                preferred_element_type=jnp.float32)
    y2 = acc + b2_ref[...]
    y2 = y2 * jax.nn.sigmoid(y2)

    out = jnp.concatenate([y1, y2], axis=-1).reshape(1, th, Wo, 2 * inter)
    o_ref[...] = out.astype(o_ref.dtype)


# -----------------------------------------------------------------------------
# Pallas wrappers
# -----------------------------------------------------------------------------
def matmul_bias_silu(x2d, w, bias, out_dtype, tm=512):
    """Fused [N,Cin]@[Cin,Cout] + bias + SiLU; pads N so tm is a free choice."""
    N, Cin = x2d.shape
    Cout = w.shape[1]
    tm = min(tm, max(8, pl.cdiv(N, 1)))          # never larger than needed
    Np = pl.cdiv(N, tm) * tm
    xp = x2d if Np == N else jnp.pad(x2d, ((0, Np - N), (0, 0)))

    cost = pl.CostEstimate(
        flops=2 * Np * Cin * Cout,
        transcendentals=Np * Cout,
        bytes_accessed=(xp.size * xp.dtype.itemsize
                        + w.size * w.dtype.itemsize
                        + bias.size * bias.dtype.itemsize
                        + Np * Cout * jnp.dtype(out_dtype).itemsize))

    out = pl.pallas_call(
        matmul_bias_silu_kernel,
        out_shape=jax.ShapeDtypeStruct((Np, Cout), out_dtype),
        grid=(Np // tm,),
        in_specs=[
            pl.BlockSpec((tm, Cin), lambda i: (i, 0)),
            pl.BlockSpec((Cin, Cout), lambda i: (0, 0)),
            pl.BlockSpec((1, Cout), lambda i: (0, 0)),
        ],
        out_specs=pl.BlockSpec((tm, Cout), lambda i: (i, 0)),
        compiler_params=pltpu.CompilerParams(
            dimension_semantics=("parallel",),
            vmem_limit_bytes=_VMEM_LIMIT_BYTES),
        cost_estimate=cost,
    )(xp, w, bias)
    return out if Np == N else out[:N]


def fused_downsample_tail(corners, a_phases, w1, w2, b1, b2, th, out_dtype):
    """Fused {maxpool->1x1 conv} and {3x3 s2 conv}, both +BN+SiLU, concat store."""
    B, Ho_p, Wo, Cin = corners[0].shape
    _, C, inter = w2.shape
    nrt = Ho_p // th
    rows = B * Ho_p * Wo

    cost = pl.CostEstimate(
        flops=2 * rows * (Cin * inter + 9 * C * inter),
        transcendentals=rows * 2 * inter,
        bytes_accessed=(sum(a.size * a.dtype.itemsize for a in corners)
                        + sum(a.size * a.dtype.itemsize for a in a_phases)
                        + w1.size * w1.dtype.itemsize
                        + w2.size * w2.dtype.itemsize
                        + rows * 2 * inter * jnp.dtype(out_dtype).itemsize))

    corner_spec = pl.BlockSpec((1, th, Wo, Cin), lambda b, r: (b, r, 0, 0))
    a_spec = pl.BlockSpec((1, th, Wo + 1, C), lambda b, r: (b, r, 0, 0))

    return pl.pallas_call(
        downsample_tail_kernel,
        out_shape=jax.ShapeDtypeStruct((B, Ho_p, Wo, 2 * inter), out_dtype),
        grid=(B, nrt),
        in_specs=[corner_spec] * 4 + [a_spec] * 6 + [
            pl.BlockSpec((Cin, inter), lambda b, r: (0, 0)),
            pl.BlockSpec((9, C, inter), lambda b, r: (0, 0, 0)),
            pl.BlockSpec((1, inter), lambda b, r: (0, 0)),
            pl.BlockSpec((1, inter), lambda b, r: (0, 0)),
        ],
        out_specs=pl.BlockSpec((1, th, Wo, 2 * inter),
                               lambda b, r: (b, r, 0, 0)),
        compiler_params=pltpu.CompilerParams(
            dimension_semantics=("parallel", "parallel"),
            vmem_limit_bytes=_VMEM_LIMIT_BYTES),
        cost_estimate=cost,
    )(*corners, *a_phases, w1, w2, b1, b2)


# -----------------------------------------------------------------------------
# Parameter folding (plain JAX, one-time work on small weight tensors)
# -----------------------------------------------------------------------------
def _fold_bn_scale_bias(bn, eps=_BN_EPS):
    gamma, beta, mean, var = bn
    scale = gamma / jnp.sqrt(var + eps)
    bias = beta - mean * scale
    return scale, bias[None, :].astype(jnp.float32)


def _fold_1x1(w_oihw, bn):
    scale, bias = _fold_bn_scale_bias(bn)
    w = w_oihw[:, :, 0, 0].T * scale[None, :]          # [Cin, Cout], BN folded
    return w.astype(jnp.bfloat16), bias


def _fold_3x3(w_oihw, bn):
    scale, bias = _fold_bn_scale_bias(bn)
    O, I = w_oihw.shape[0], w_oihw.shape[1]
    w = jnp.transpose(w_oihw, (2, 3, 1, 0)).reshape(9, I, O)   # (kh*3+kw, Cin, Cout)
    w = w * scale[None, None, :]
    return w.astype(jnp.bfloat16), bias


# -----------------------------------------------------------------------------
# DownSample forward (Pallas path)
# -----------------------------------------------------------------------------
def downsample_pallas(x_nchw, params, tm=512, row_tile=128):
    out_dtype = x_nchw.dtype
    # Module contract is NCHW; go lane-dense NHWC + bf16 once on entry.
    x = jnp.transpose(x_nchw, (0, 2, 3, 1)).astype(jnp.bfloat16)
    B, H, W, Cin = x.shape
    Ho, Wo = H // 2, W // 2
    inter = params["w1"].shape[0]

    w1, b1 = _fold_1x1(params["w1"], params["bn1"])
    w2a, b2a = _fold_1x1(params["w2a"], params["bn2a"])
    w2b, b2b = _fold_3x3(params["w2b"], params["bn2b"])

    # ---- branch 2 stage 1: 1x1 conv + BN + SiLU over flattened rows (MXU) ----
    t = matmul_bias_silu(x.reshape(B * H * W, Cin), w2a, b2a,
                         out_dtype=jnp.bfloat16, tm=tm)
    t = t.reshape(B, H, W, inter)

    # ---- phase-decomposed padded t for the fused 3x3 stride-2 conv ----
    # (one pad pass + cheap strided slices: ~1.5x of t in HBM instead of the
    #  9x an im2col materialization would cost)
    tp = jnp.pad(t, ((0, 0), (1, 1), (1, 1), (0, 0)))            # [B,H+2,W+2,C]
    tph = tp.reshape(B, Ho + 1, 2, Wo + 1, 2, inter)             # free reshape
    a00 = tph[:, :Ho, 0, :, 0, :]    # tap kh=0 (rows 0,2,..), col phase 0
    a01 = tph[:, :Ho, 0, :, 1, :]    # tap kh=0,               col phase 1
    a10 = tph[:, :Ho, 1, :, 0, :]    # tap kh=1 (rows 1,3,..)
    a11 = tph[:, :Ho, 1, :, 1, :]
    a20 = tph[:, 1:, 0, :, 0, :]     # tap kh=2 (rows 2,4,..)
    a21 = tph[:, 1:, 0, :, 1, :]

    # ---- branch 1 inputs: the four 2x2-pool corners as lane-dense tensors ----
    c00 = x[:, 0::2, 0::2, :]
    c01 = x[:, 0::2, 1::2, :]
    c10 = x[:, 1::2, 0::2, :]
    c11 = x[:, 1::2, 1::2, :]

    # Row tiling with a padded tail so the tile size is a free perf knob.
    th = max(1, min(row_tile, Ho))
    Ho_p = pl.cdiv(Ho, th) * th

    def pad_rows(a):
        if Ho_p == Ho:
            return a
        return jnp.pad(a, ((0, 0), (0, Ho_p - Ho), (0, 0), (0, 0)))

    corners = [pad_rows(c) for c in (c00, c01, c10, c11)]
    a_phases = [pad_rows(a) for a in (a00, a01, a10, a11, a20, a21)]

    out = fused_downsample_tail(corners, a_phases, w1, w2b, b1, b2b,
                                th=th, out_dtype=out_dtype)
    out = out[:, :Ho]                                  # drop padded rows
    # NHWC -> NCHW to honour the PyTorch module contract (skip if the consumer
    # can take NHWC directly).
    return jnp.transpose(out, (0, 3, 1, 2))


# -----------------------------------------------------------------------------
# Pure-JAX reference (NCHW, eval-mode BN semantics)
# -----------------------------------------------------------------------------
def downsample_ref(x, params, eps=_BN_EPS):
    def conv(x, w, stride, pad):
        return lax.conv_general_dilated(
            x, w, (stride, stride), [(pad, pad), (pad, pad)],
            dimension_numbers=("NCHW", "OIHW", "NCHW"))

    def bn_silu(y, bn):
        gamma, beta, mean, var = bn
        s = gamma / jnp.sqrt(var + eps)
        b = beta - mean * s
        y = y * s[None, :, None, None] + b[None, :, None, None]
        return y * jax.nn.sigmoid(y)

    mp = lax.reduce_window(x, -jnp.inf, lax.max, (1, 1, 2, 2), (1, 1, 2, 2),
                           "VALID")
    x1 = bn_silu(conv(mp, params["w1"], 1, 0), params["bn1"])
    t = bn_silu(conv(x, params["w2a"], 1, 0), params["bn2a"])
    x2 = bn_silu(conv(t, params["w2b"], 2, 1), params["bn2b"])
    return jnp.concatenate([x1, x2], axis=1)


# -----------------------------------------------------------------------------
# Deterministic parameter init
# -----------------------------------------------------------------------------
def make_params(key, in_dim, out_dim):
    inter = out_dim // 2
    ks = jax.random.split(key, 12)

    def bn(k, c):
        k1, k2, k3, k4 = jax.random.split(k, 4)
        gamma = jax.random.uniform(k1, (c,), jnp.float32, 0.5, 1.5)
        beta = 0.1 * jax.random.normal(k2, (c,), jnp.float32)
        mean = 0.1 * jax.random.normal(k3, (c,), jnp.float32)
        var = jax.random.uniform(k4, (c,), jnp.float32, 0.5, 1.5)
        return (gamma, beta, mean, var)

    return {
        "w1": 0.2 * jax.random.normal(ks[0], (inter, in_dim, 1, 1), jnp.float32),
        "bn1": bn(ks[1], inter),
        "w2a": 0.2 * jax.random.normal(ks[2], (inter, in_dim, 1, 1), jnp.float32),
        "bn2a": bn(ks[3], inter),
        "w2b": 0.2 * jax.random.normal(ks[4], (inter, inter, 3, 3), jnp.float32),
        "bn2b": bn(ks[5], inter),
    }


# -----------------------------------------------------------------------------
if __name__ == "__main__":
    B, in_dim, H, W = 2, 4, 16, 16
    out_dim = 8

    key = jax.random.PRNGKey(0)
    kx, kp = jax.random.split(key)
    x = jax.random.normal(kx, (B, in_dim, H, W), jnp.float32)
    params = make_params(kp, in_dim, out_dim)

    out = jax.jit(downsample_pallas)(x, params)
    out = jax.block_until_ready(out)

    ref = downsample_ref(x, params)
    assert out.shape == (B, out_dim, H // 2, W // 2), out.shape
    # bf16 matmul operands with f32 accumulation -> compare with loosened tol.
    assert jnp.allclose(out, ref, rtol=2e-2, atol=2e-2), (
        float(jnp.max(jnp.abs(out - ref))))

    print("KERNEL_OK")
</pallas_src>

<mosaic_0001>
module attributes {stable_mosaic.version = 11 : i64} {
  func.func @matmul_bias_silu_kernel(%arg0: i32, %arg1: memref<512x4xbf16, #tpu.memory_space<vmem>>, %arg2: memref<4x4xbf16, #tpu.memory_space<vmem>>, %arg3: memref<1x4xf32, #tpu.memory_space<vmem>>, %arg4: memref<512x4xbf16, #tpu.memory_space<vmem>>) attributes {dimension_semantics = [#tpu.dimension_semantics<parallel>], iteration_bounds = array<i64: 1>, scalar_prefetch = 0 : i64, scratch_operands = 0 : i64, tpu.core_type = #tpu.core_type<tc>, window_params = [{transform_indices = @transform_0, window_bounds = array<i64: 512, 4>}, {pipeline_mode = #tpu.pipeline_mode<synchronous>, transform_indices = @transform_1, window_bounds = array<i64: 4, 4>}, {pipeline_mode = #tpu.pipeline_mode<synchronous>, transform_indices = @transform_2, window_bounds = array<i64: 1, 4>}, {transform_indices = @transform_3, window_bounds = array<i64: 512, 4>}]} {
    %c0 = arith.constant 0 : index
    %c0_0 = arith.constant 0 : index
    %0 = vector.load %arg1[%c0, %c0_0] : memref<512x4xbf16, #tpu.memory_space<vmem>>, vector<512x4xbf16>
    %c0_1 = arith.constant 0 : index
    %c0_2 = arith.constant 0 : index
    %1 = vector.load %arg2[%c0_1, %c0_2] : memref<4x4xbf16, #tpu.memory_space<vmem>>, vector<4x4xbf16>
    %cst = arith.constant dense<0.000000e+00> : vector<512x4xf32>
    %2 = tpu.matmul %0, %1, %cst {dimension_numbers = #tpu.dot_dimension_numbers<[1], [0], [0], [1], [0, 0, 1, 1], [], []>} : vector<512x4xbf16>, vector<4x4xbf16>, vector<512x4xf32> -> vector<512x4xf32>
    %c0_3 = arith.constant 0 : index
    %c0_4 = arith.constant 0 : index
    %3 = vector.load %arg3[%c0_3, %c0_4] : memref<1x4xf32, #tpu.memory_space<vmem>>, vector<1x4xf32>
    %4 = vector.broadcast %3 : vector<1x4xf32> to vector<512x4xf32>
    %5 = arith.addf %2, %4 : vector<512x4xf32>
    %6 = arith.negf %5 : vector<512x4xf32>
    %7 = math.exp %6 : vector<512x4xf32>
    %cst_5 = arith.constant 1.000000e+00 : f32
    %8 = vector.broadcast %cst_5 : f32 to vector<512x4xf32>
    %9 = arith.addf %8, %7 : vector<512x4xf32>
    %10 = arith.divf %8, %9 : vector<512x4xf32>
    %11 = arith.mulf %5, %10 : vector<512x4xf32>
    %12 = arith.truncf %11 : vector<512x4xf32> to vector<512x4xbf16>
    %c0_6 = arith.constant 0 : index
    %c0_7 = arith.constant 0 : index
    %13 = vector.load %arg4[%c0_6, %c0_7] : memref<512x4xbf16, #tpu.memory_space<vmem>>, vector<512x4xbf16>
    tpu.vector_store %arg4[%c0_6, %c0_7], %12 {strides = array<i32>} : memref<512x4xbf16, #tpu.memory_space<vmem>>, vector<512x4xbf16>,
    return
  }
  func.func @transform_0(%arg0: i32) -> (i32, i32) {
    %c0_i32 = arith.constant 0 : i32
    %c0_i32_0 = arith.constant 0 : i32
    return %arg0, %c0_i32 : i32, i32
  }
  func.func @transform_1(%arg0: i32) -> (i32, i32) {
    %c0_i32 = arith.constant 0 : i32
    %c0_i32_0 = arith.constant 0 : i32
    %c0_i32_1 = arith.constant 0 : i32
    return %c0_i32, %c0_i32_0 : i32, i32
  }
  func.func @transform_2(%arg0: i32) -> (i32, i32) {
    %c0_i32 = arith.constant 0 : i32
    %c0_i32_0 = arith.constant 0 : i32
    %c0_i32_1 = arith.constant 0 : i32
    return %c0_i32, %c0_i32_0 : i32, i32
  }
  func.func @transform_3(%arg0: i32) -> (i32, i32) {
    %c0_i32 = arith.constant 0 : i32
    %c0_i32_0 = arith.constant 0 : i32
    return %arg0, %c0_i32 : i32, i32
  }
}

module attributes {stable_mosaic.version = 11 : i64} {
  func.func @downsample_tail_kernel(%arg0: i32, %arg1: i32, %arg2: memref<1x8x8x4xbf16, #tpu.memory_space<vmem>>, %arg3: memref<1x8x8x4xbf16, #tpu.memory_space<vmem>>, %arg4: memref<1x8x8x4xbf16, #tpu.memory_space<vmem>>, %arg5: memref<1x8x8x4xbf16, #tpu.memory_space<vmem>>, %arg6: memref<1x8x9x4xbf16, #tpu.memory_space<vmem>>, %arg7: memref<1x8x9x4xbf16, #tpu.memory_space<vmem>>, %arg8: memref<1x8x9x4xbf16, #tpu.memory_space<vmem>>, %arg9: memref<1x8x9x4xbf16, #tpu.memory_space<vmem>>, %arg10: memref<1x8x9x4xbf16, #tpu.memory_space<vmem>>, %arg11: memref<1x8x9x4xbf16, #tpu.memory_space<vmem>>, %arg12: memref<4x4xbf16, #tpu.memory_space<vmem>>, %arg13: memref<9x4x4xbf16, #tpu.memory_space<vmem>>, %arg14: memref<1x4xf32, #tpu.memory_space<vmem>>, %arg15: memref<1x4xf32, #tpu.memory_space<vmem>>, %arg16: memref<1x8x8x8xf32, #tpu.memory_space<vmem>>) attributes {dimension_semantics = [#tpu.dimension_semantics<parallel>, #tpu.dimension_semantics<parallel>], iteration_bounds = array<i64: 2, 1>, scalar_prefetch = 0 : i64, scratch_operands = 0 : i64, tpu.core_type = #tpu.core_type<tc>, window_params = [{transform_indices = @transform_0, window_bounds = array<i64: 1, 8, 8, 4>}, {transform_indices = @transform_1, window_bounds = array<i64: 1, 8, 8, 4>}, {transform_indices = @transform_2, window_bounds = array<i64: 1, 8, 8, 4>}, {transform_indices = @transform_3, window_bounds = array<i64: 1, 8, 8, 4>}, {transform_indices = @transform_4, window_bounds = array<i64: 1, 8, 9, 4>}, {transform_indices = @transform_5, window_bounds = array<i64: 1, 8, 9, 4>}, {transform_indices = @transform_6, window_bounds = array<i64: 1, 8, 9, 4>}, {transform_indices = @transform_7, window_bounds = array<i64: 1, 8, 9, 4>}, {transform_indices = @transform_8, window_bounds = array<i64: 1, 8, 9, 4>}, {transform_indices = @transform_9, window_bounds = array<i64: 1, 8, 9, 4>}, {pipeline_mode = #tpu.pipeline_mode<synchronous>, transform_indices = @transform_10, window_bounds = array<i64: 4, 4>}, {pipeline_mode = #tpu.pipeline_mode<synchronous>, transform_indices = @transform_11, window_bounds = array<i64: 9, 4, 4>}, {pipeline_mode = #tpu.pipeline_mode<synchronous>, transform_indices = @transform_12, window_bounds = array<i64: 1, 4>}, {pipeline_mode = #tpu.pipeline_mode<synchronous>, transform_indices = @transform_13, window_bounds = array<i64: 1, 4>}, {transform_indices = @transform_14, window_bounds = array<i64: 1, 8, 8, 8>}]} {
    %c0 = arith.constant 0 : index
    %c0_0 = arith.constant 0 : index
    %c0_1 = arith.constant 0 : index
    %c0_2 = arith.constant 0 : index
    %0 = vector.load %arg2[%c0, %c0_0, %c0_1, %c0_2] : memref<1x8x8x4xbf16, #tpu.memory_space<vmem>>, vector<1x8x8x4xbf16>
    %1 = vector.shape_cast %0 : vector<1x8x8x4xbf16> to vector<64x4xbf16>
    %c0_3 = arith.constant 0 : index
    %c0_4 = arith.constant 0 : index
    %c0_5 = arith.constant 0 : index
    %c0_6 = arith.constant 0 : index
    %2 = vector.load %arg3[%c0_3, %c0_4, %c0_5, %c0_6] : memref<1x8x8x4xbf16, #tpu.memory_space<vmem>>, vector<1x8x8x4xbf16>
    %3 = vector.shape_cast %2 : vector<1x8x8x4xbf16> to vector<64x4xbf16>
    %4 = arith.maximumf %1, %3 : vector<64x4xbf16>
    %c0_7 = arith.constant 0 : index
    %c0_8 = arith.constant 0 : index
    %c0_9 = arith.constant 0 : index
    %c0_10 = arith.constant 0 : index
    %5 = vector.load %arg4[%c0_7, %c0_8, %c0_9, %c0_10] : memref<1x8x8x4xbf16, #tpu.memory_space<vmem>>, vector<1x8x8x4xbf16>
    %6 = vector.shape_cast %5 : vector<1x8x8x4xbf16> to vector<64x4xbf16>
    %c0_11 = arith.constant 0 : index
    %c0_12 = arith.constant 0 : index
    %c0_13 = arith.constant 0 : index
    %c0_14 = arith.constant 0 : index
    %7 = vector.load %arg5[%c0_11, %c0_12, %c0_13, %c0_14] : memref<1x8x8x4xbf16, #tpu.memory_space<vmem>>, vector<1x8x8x4xbf16>
    %8 = vector.shape_cast %7 : vector<1x8x8x4xbf16> to vector<64x4xbf16>
    %9 = arith.maximumf %6, %8 : vector<64x4xbf16>
    %10 = arith.maximumf %4, %9 : vector<64x4xbf16>
    %c0_15 = arith.constant 0 : index
    %c0_16 = arith.constant 0 : index
    %11 = vector.load %arg12[%c0_15, %c0_16] : memref<4x4xbf16, #tpu.memory_space<vmem>>, vector<4x4xbf16>
    %cst = arith.constant dense<0.000000e+00> : vector<64x4xf32>
    %12 = tpu.matmul %10, %11, %cst {dimension_numbers = #tpu.dot_dimension_numbers<[1], [0], [0], [1], [0, 0, 1, 1], [], []>} : vector<64x4xbf16>, vector<4x4xbf16>, vector<64x4xf32> -> vector<64x4xf32>
    %c0_17 = arith.constant 0 : index
    %c0_18 = arith.constant 0 : index
    %13 = vector.load %arg14[%c0_17, %c0_18] : memref<1x4xf32, #tpu.memory_space<vmem>>, vector<1x4xf32>
    %14 = vector.broadcast %13 : vector<1x4xf32> to vector<64x4xf32>
    %15 = arith.addf %12, %14 : vector<64x4xf32>
    %16 = arith.negf %15 : vector<64x4xf32>
    %17 = math.exp %16 : vector<64x4xf32>
    %cst_19 = arith.constant 1.000000e+00 : f32
    %18 = vector.broadcast %cst_19 : f32 to vector<64x4xf32>
    %19 = arith.addf %18, %17 : vector<64x4xf32>
    %20 = arith.divf %18, %19 : vector<64x4xf32>
    %21 = arith.mulf %15, %20 : vector<64x4xf32>
    %cst_20 = arith.constant 0.000000e+00 : f32
    %22 = vector.broadcast %cst_20 : f32 to vector<64x4xf32>
    %c0_21 = arith.constant 0 : index
    %c0_22 = arith.constant 0 : index
    %c0_23 = arith.constant 0 : index
    %c0_24 = arith.constant 0 : index
    %23 = vector.load %arg6[%c0_21, %c0_22, %c0_23, %c0_24] : memref<1x8x9x4xbf16, #tpu.memory_space<vmem>>, vector<1x8x9x4xbf16>
    %24 = vector.shape_cast %23 : vector<1x8x9x4xbf16> to vector<8x9x4xbf16>
    %c0_25 = arith.constant 0 : index
    %c0_26 = arith.constant 0 : index
    %c0_27 = arith.constant 0 : index
    %c0_28 = arith.constant 0 : index
    %25 = vector.load %arg7[%c0_25, %c0_26, %c0_27, %c0_28] : memref<1x8x9x4xbf16, #tpu.memory_space<vmem>>, vector<1x8x9x4xbf16>
    %26 = vector.shape_cast %25 : vector<1x8x9x4xbf16> to vector<8x9x4xbf16>
    %27 = vector.extract_strided_slice %24 {offsets = [0, 0, 0], sizes = [8, 8, 4], strides = [1, 1, 1]} : vector<8x9x4xbf16> to vector<8x8x4xbf16>
    %28 = vector.shape_cast %27 : vector<8x8x4xbf16> to vector<64x4xbf16>
    %c0_29 = arith.constant 0 : index
    %c0_30 = arith.constant 0 : index
    %c0_31 = arith.constant 0 : index
    %29 = vector.load %arg13[%c0_29, %c0_30, %c0_31] : memref<9x4x4xbf16, #tpu.memory_space<vmem>>, vector<1x4x4xbf16>
    %30 = vector.shape_cast %29 : vector<1x4x4xbf16> to vector<4x4xbf16>
    %cst_32 = arith.constant dense<0.000000e+00> : vector<64x4xf32>
    %31 = tpu.matmul %28, %30, %cst_32 {dimension_numbers = #tpu.dot_dimension_numbers<[1], [0], [0], [1], [0, 0, 1, 1], [], []>} : vector<64x4xbf16>, vector<4x4xbf16>, vector<64x4xf32> -> vector<64x4xf32>
    %32 = arith.addf %22, %31 : vector<64x4xf32>
    %33 = vector.extract_strided_slice %26 {offsets = [0, 0, 0], sizes = [8, 8, 4], strides = [1, 1, 1]} : vector<8x9x4xbf16> to vector<8x8x4xbf16>
    %34 = vector.shape_cast %33 : vector<8x8x4xbf16> to vector<64x4xbf16>
    %c1 = arith.constant 1 : index
    %c0_33 = arith.constant 0 : index
    %c0_34 = arith.constant 0 : index
    %35 = vector.load %arg13[%c1, %c0_33, %c0_34] : memref<9x4x4xbf16, #tpu.memory_space<vmem>>, vector<1x4x4xbf16>
    %36 = vector.shape_cast %35 : vector<1x4x4xbf16> to vector<4x4xbf16>
    %cst_35 = arith.constant dense<0.000000e+00> : vector<64x4xf32>
    %37 = tpu.matmul %34, %36, %cst_35 {dimension_numbers = #tpu.dot_dimension_numbers<[1], [0], [0], [1], [0, 0, 1, 1], [], []>} : vector<64x4xbf16>, vector<4x4xbf16>, vector<64x4xf32> -> vector<64x4xf32>
    %38 = arith.addf %32, %37 : vector<64x4xf32>
    %39 = vector.extract_strided_slice %24 {offsets = [0, 1, 0], sizes = [8, 8, 4], strides = [1, 1, 1]} : vector<8x9x4xbf16> to vector<8x8x4xbf16>
    %40 = vector.shape_cast %39 : vector<8x8x4xbf16> to vector<64x4xbf16>
    %c2 = arith.constant 2 : index
    %c0_36 = arith.constant 0 : index
    %c0_37 = arith.constant 0 : index
    %41 = vector.load %arg13[%c2, %c0_36, %c0_37] : memref<9x4x4xbf16, #tpu.memory_space<vmem>>, vector<1x4x4xbf16>
    %42 = vector.shape_cast %41 : vector<1x4x4xbf16> to vector<4x4xbf16>
    %cst_38 = arith.constant dense<0.000000e+00> : vector<64x4xf32>
    %43 = tpu.matmul %40, %42, %cst_38 {dimension_numbers = #tpu.dot_dimension_numbers<[1], [0], [0], [1], [0, 0, 1, 1], [], []>} : vector<64x4xbf16>, vector<4x4xbf16>, vector<64x4xf32> -> vector<64x4xf32>
    %44 = arith.addf %38, %43 : vector<64x4xf32>
    %c0_39 = arith.constant 0 : index
    %c0_40 = arith.constant 0 : index
    %c0_41 = arith.constant 0 : index
    %c0_42 = arith.constant 0 : index
    %45 = vector.load %arg8[%c0_39, %c0_40, %c0_41, %c0_42] : memref<1x8x9x4xbf16, #tpu.memory_space<vmem>>, vector<1x8x9x4xbf16>
    %46 = vector.shape_cast %45 : vector<1x8x9x4xbf16> to vector<8x9x4xbf16>
    %c0_43 = arith.constant 0 : index
    %c0_44 = arith.constant 0 : index
    %c0_45 = arith.constant 0 : index
    %c0_46 = arith.constant 0 : index
    %47 = vector.load %arg9[%c0_43, %c0_44, %c0_45, %c0_46] : memref<1x8x9x4xbf16, #tpu.memory_space<vmem>>, vector<1x8x9x4xbf16>
    %48 = vector.shape_cast %47 : vector<1x8x9x4xbf16> to vector<8x9x4xbf16>
    %49 = vector.extract_strided_slice %46 {offsets = [0, 0, 0], sizes = [8, 8, 4], strides = [1, 1, 1]} : vector<8x9x4xbf16> to vector<8x8x4xbf16>
    %50 = vector.shape_cast %49 : vector<8x8x4xbf16> to vector<64x4xbf16>
    %c3 = arith.constant 3 : index
    %c0_47 = arith.constant 0 : index
    %c0_48 = arith.constant 0 : index
    %51 = vector.load %arg13[%c3, %c0_47, %c0_48] : memref<9x4x4xbf16, #tpu.memory_space<vmem>>, vector<1x4x4xbf16>
    %52 = vector.shape_cast %51 : vector<1x4x4xbf16> to vector<4x4xbf16>
    %cst_49 = arith.constant dense<0.000000e+00> : vector<64x4xf32>
    %53 = tpu.matmul %50, %52, %cst_49 {dimension_numbers = #tpu.dot_dimension_numbers<[1], [0], [0], [1], [0, 0, 1, 1], [], []>} : vector<64x4xbf16>, vector<4x4xbf16>, vector<64x4xf32> -> vector<64x4xf32>
    %54 = arith.addf %44, %53 : vector<64x4xf32>
    %55 = vector.extract_strided_slice %48 {offsets = [0, 0, 0], sizes = [8, 8, 4], strides = [1, 1, 1]} : vector<8x9x4xbf16> to vector<8x8x4xbf16>
    %56 = vector.shape_cast %55 : vector<8x8x4xbf16> to vector<64x4xbf16>
    %c4 = arith.constant 4 : index
    %c0_50 = arith.constant 0 : index
    %c0_51 = arith.constant 0 : index
    %57 = vector.load %arg13[%c4, %c0_50, %c0_51] : memref<9x4x4xbf16, #tpu.memory_space<vmem>>, vector<1x4x4xbf16>
    %58 = vector.shape_cast %57 : vector<1x4x4xbf16> to vector<4x4xbf16>
    %cst_52 = arith.constant dense<0.000000e+00> : vector<64x4xf32>
    %59 = tpu.matmul %56, %58, %cst_52 {dimension_numbers = #tpu.dot_dimension_numbers<[1], [0], [0], [1], [0, 0, 1, 1], [], []>} : vector<64x4xbf16>, vector<4x4xbf16>, vector<64x4xf32> -> vector<64x4xf32>
    %60 = arith.addf %54, %59 : vector<64x4xf32>
    %61 = vector.extract_strided_slice %46 {offsets = [0, 1, 0], sizes = [8, 8, 4], strides = [1, 1, 1]} : vector<8x9x4xbf16> to vector<8x8x4xbf16>
    %62 = vector.shape_cast %61 : vector<8x8x4xbf16> to vector<64x4xbf16>
    %c5 = arith.constant 5 : index
    %c0_53 = arith.constant 0 : index
    %c0_54 = arith.constant 0 : index
    %63 = vector.load %arg13[%c5, %c0_53, %c0_54] : memref<9x4x4xbf16, #tpu.memory_space<vmem>>, vector<1x4x4xbf16>
    %64 = vector.shape_cast %63 : vector<1x4x4xbf16> to vector<4x4xbf16>
    %cst_55 = arith.constant dense<0.000000e+00> : vector<64x4xf32>
    %65 = tpu.matmul %62, %64, %cst_55 {dimension_numbers = #tpu.dot_dimension_numbers<[1], [0], [0], [1], [0, 0, 1, 1], [], []>} : vector<64x4xbf16>, vector<4x4xbf16>, vector<64x4xf32> -> vector<64x4xf32>
    %66 = arith.addf %60, %65 : vector<64x4xf32>
    %c0_56 = arith.constant 0 : index
    %c0_57 = arith.constant 0 : index
    %c0_58 = arith.constant 0 : index
    %c0_59 = arith.constant 0 : index
    %67 = vector.load %arg10[%c0_56, %c0_57, %c0_58, %c0_59] : memref<1x8x9x4xbf16, #tpu.memory_space<vmem>>, vector<1x8x9x4xbf16>
    %68 = vector.shape_cast %67 : vector<1x8x9x4xbf16> to vector<8x9x4xbf16>
    %c0_60 = arith.constant 0 : index
    %c0_61 = arith.constant 0 : index
    %c0_62 = arith.constant 0 : index
    %c0_63 = arith.constant 0 : index
    %69 = vector.load %arg11[%c0_60, %c0_61, %c0_62, %c0_63] : memref<1x8x9x4xbf16, #tpu.memory_space<vmem>>, vector<1x8x9x4xbf16>
    %70 = vector.shape_cast %69 : vector<1x8x9x4xbf16> to vector<8x9x4xbf16>
    %71 = vector.extract_strided_slice %68 {offsets = [0, 0, 0], sizes = [8, 8, 4], strides = [1, 1, 1]} : vector<8x9x4xbf16> to vector<8x8x4xbf16>
    %72 = vector.shape_cast %71 : vector<8x8x4xbf16> to vector<64x4xbf16>
    %c6 = arith.constant 6 : index
    %c0_64 = arith.constant 0 : index
    %c0_65 = arith.constant 0 : index
    %73 = vector.load %arg13[%c6, %c0_64, %c0_65] : memref<9x4x4xbf16, #tpu.memory_space<vmem>>, vector<1x4x4xbf16>
    %74 = vector.shape_cast %73 : vector<1x4x4xbf16> to vector<4x4xbf16>
    %cst_66 = arith.constant dense<0.000000e+00> : vector<64x4xf32>
    %75 = tpu.matmul %72, %74, %cst_66 {dimension_numbers = #tpu.dot_dimension_numbers<[1], [0], [0], [1], [0, 0, 1, 1], [], []>} : vector<64x4xbf16>, vector<4x4xbf16>, vector<64x4xf32> -> vector<64x4xf32>
    %76 = arith.addf %66, %75 : vector<64x4xf32>
    %77 = vector.extract_strided_slice %70 {offsets = [0, 0, 0], sizes = [8, 8, 4], strides = [1, 1, 1]} : vector<8x9x4xbf16> to vector<8x8x4xbf16>
    %78 = vector.shape_cast %77 : vector<8x8x4xbf16> to vector<64x4xbf16>
    %c7 = arith.constant 7 : index
    %c0_67 = arith.constant 0 : index
    %c0_68 = arith.constant 0 : index
    %79 = vector.load %arg13[%c7, %c0_67, %c0_68] : memref<9x4x4xbf16, #tpu.memory_space<vmem>>, vector<1x4x4xbf16>
    %80 = vector.shape_cast %79 : vector<1x4x4xbf16> to vector<4x4xbf16>
    %cst_69 = arith.constant dense<0.000000e+00> : vector<64x4xf32>
    %81 = tpu.matmul %78, %80, %cst_69 {dimension_numbers = #tpu.dot_dimension_numbers<[1], [0], [0], [1], [0, 0, 1, 1], [], []>} : vector<64x4xbf16>, vector<4x4xbf16>, vector<64x4xf32> -> vector<64x4xf32>
    %82 = arith.addf %76, %81 : vector<64x4xf32>
    %83 = vector.extract_strided_slice %68 {offsets = [0, 1, 0], sizes = [8, 8, 4], strides = [1, 1, 1]} : vector<8x9x4xbf16> to vector<8x8x4xbf16>
    %84 = vector.shape_cast %83 : vector<8x8x4xbf16> to vector<64x4xbf16>
    %c8 = arith.constant 8 : index
    %c0_70 = arith.constant 0 : index
    %c0_71 = arith.constant 0 : index
    %85 = vector.load %arg13[%c8, %c0_70, %c0_71] : memref<9x4x4xbf16, #tpu.memory_space<vmem>>, vector<1x4x4xbf16>
    %86 = vector.shape_cast %85 : vector<1x4x4xbf16> to vector<4x4xbf16>
    %cst_72 = arith.constant dense<0.000000e+00> : vector<64x4xf32>
    %87 = tpu.matmul %84, %86, %cst_72 {dimension_numbers = #tpu.dot_dimension_numbers<[1], [0], [0], [1], [0, 0, 1, 1], [], []>} : vector<64x4xbf16>, vector<4x4xbf16>, vector<64x4xf32> -> vector<64x4xf32>
    %88 = arith.addf %82, %87 : vector<64x4xf32>
    %c0_73 = arith.constant 0 : index
    %c0_74 = arith.constant 0 : index
    %89 = vector.load %arg15[%c0_73, %c0_74] : memref<1x4xf32, #tpu.memory_space<vmem>>, vector<1x4xf32>
    %90 = vector.broadcast %89 : vector<1x4xf32> to vector<64x4xf32>
    %91 = arith.addf %88, %90 : vector<64x4xf32>
    %92 = arith.negf %91 : vector<64x4xf32>
    %93 = math.exp %92 : vector<64x4xf32>
    %cst_75 = arith.constant 1.000000e+00 : f32
    %94 = vector.broadcast %cst_75 : f32 to vector<64x4xf32>
    %95 = arith.addf %94, %93 : vector<64x4xf32>
    %96 = arith.divf %94, %95 : vector<64x4xf32>
    %97 = arith.mulf %91, %96 : vector<64x4xf32>
    %98 = tpu.concatenate %21, %97 in 1 : vector<64x4xf32>, vector<64x4xf32> -> vector<64x8xf32>
    %99 = vector.shape_cast %98 : vector<64x8xf32> to vector<1x8x8x8xf32>
    %c0_76 = arith.constant 0 : index
    %c0_77 = arith.constant 0 : index
    %c0_78 = arith.constant 0 : index
    %c0_79 = arith.constant 0 : index
    %100 = vector.load %arg16[%c0_76, %c0_77, %c0_78, %c0_79] : memref<1x8x8x8xf32, #tpu.memory_space<vmem>>, vector<1x8x8x8xf32>
    tpu.vector_store %arg16[%c0_76, %c0_77, %c0_78, %c0_79], %99 {strides = array<i32>} : memref<1x8x8x8xf32, #tpu.memory_space<vmem>>, vector<1x8x8x8xf32>,
    return
  }
  func.func @transform_0(%arg0: i32, %arg1: i32) -> (i32, i32, i32, i32) {
    %c0_i32 = arith.constant 0 : i32
    %c0_i32_0 = arith.constant 0 : i32
    %c0_i32_1 = arith.constant 0 : i32
    return %arg0, %arg1, %c0_i32, %c0_i32_0 : i32, i32, i32, i32
  }
  func.func @transform_1(%arg0: i32, %arg1: i32) -> (i32, i32, i32, i32) {
    %c0_i32 = arith.constant 0 : i32
    %c0_i32_0 = arith.constant 0 : i32
    %c0_i32_1 = arith.constant 0 : i32
    return %arg0, %arg1, %c0_i32, %c0_i32_0 : i32, i32, i32, i32
  }
  func.func @transform_2(%arg0: i32, %arg1: i32) -> (i32, i32, i32, i32) {
    %c0_i32 = arith.constant 0 : i32
    %c0_i32_0 = arith.constant 0 : i32
    %c0_i32_1 = arith.constant 0 : i32
    return %arg0, %arg1, %c0_i32, %c0_i32_0 : i32, i32, i32, i32
  }
  func.func @transform_3(%arg0: i32, %arg1: i32) -> (i32, i32, i32, i32) {
    %c0_i32 = arith.constant 0 : i32
    %c0_i32_0 = arith.constant 0 : i32
    %c0_i32_1 = arith.constant 0 : i32
    return %arg0, %arg1, %c0_i32, %c0_i32_0 : i32, i32, i32, i32
  }
  func.func @transform_4(%arg0: i32, %arg1: i32) -> (i32, i32, i32, i32) {
    %c0_i32 = arith.constant 0 : i32
    %c0_i32_0 = arith.constant 0 : i32
    %c0_i32_1 = arith.constant 0 : i32
    return %arg0, %arg1, %c0_i32, %c0_i32_0 : i32, i32, i32, i32
  }
  func.func @transform_5(%arg0: i32, %arg1: i32) -> (i32, i32, i32, i32) {
    %c0_i32 = arith.constant 0 : i32
    %c0_i32_0 = arith.constant 0 : i32
    %c0_i32_1 = arith.constant 0 : i32
    return %arg0, %arg1, %c0_i32, %c0_i32_0 : i32, i32, i32, i32
  }
  func.func @transform_6(%arg0: i32, %arg1: i32) -> (i32, i32, i32, i32) {
    %c0_i32 = arith.constant 0 : i32
    %c0_i32_0 = arith.constant 0 : i32
    %c0_i32_1 = arith.constant 0 : i32
    return %arg0, %arg1, %c0_i32, %c0_i32_0 : i32, i32, i32, i32
  }
  func.func @transform_7(%arg0: i32, %arg1: i32) -> (i32, i32, i32, i32) {
    %c0_i32 = arith.constant 0 : i32
    %c0_i32_0 = arith.constant 0 : i32
    %c0_i32_1 = arith.constant 0 : i32
    return %arg0, %arg1, %c0_i32, %c0_i32_0 : i32, i32, i32, i32
  }
  func.func @transform_8(%arg0: i32, %arg1: i32) -> (i32, i32, i32, i32) {
    %c0_i32 = arith.constant 0 : i32
    %c0_i32_0 = arith.constant 0 : i32
    %c0_i32_1 = arith.constant 0 : i32
    return %arg0, %arg1, %c0_i32, %c0_i32_0 : i32, i32, i32, i32
  }
  func.func @transform_9(%arg0: i32, %arg1: i32) -> (i32, i32, i32, i32) {
    %c0_i32 = arith.constant 0 : i32
    %c0_i32_0 = arith.constant 0 : i32
    %c0_i32_1 = arith.constant 0 : i32
    return %arg0, %arg1, %c0_i32, %c0_i32_0 : i32, i32, i32, i32
  }
  func.func @transform_10(%arg0: i32, %arg1: i32) -> (i32, i32) {
    %c0_i32 = arith.constant 0 : i32
    %c0_i32_0 = arith.constant 0 : i32
    %c0_i32_1 = arith.constant 0 : i32
    return %c0_i32, %c0_i32_0 : i32, i32
  }
  func.func @transform_11(%arg0: i32, %arg1: i32) -> (i32, i32, i32) {
    %c0_i32 = arith.constant 0 : i32
    %c0_i32_0 = arith.constant 0 : i32
    %c0_i32_1 = arith.constant 0 : i32
    %c0_i32_2 = arith.constant 0 : i32
    return %c0_i32, %c0_i32_0, %c0_i32_1 : i32, i32, i32
  }
  func.func @transform_12(%arg0: i32, %arg1: i32) -> (i32, i32) {
    %c0_i32 = arith.constant 0 : i32
    %c0_i32_0 = arith.constant 0 : i32
    %c0_i32_1 = arith.constant 0 : i32
    return %c0_i32, %c0_i32_0 : i32, i32
  }
  func.func @transform_13(%arg0: i32, %arg1: i32) -> (i32, i32) {
    %c0_i32 = arith.constant 0 : i32
    %c0_i32_0 = arith.constant 0 : i32
    %c0_i32_1 = arith.constant 0 : i32
    return %c0_i32, %c0_i32_0 : i32, i32
  }
  func.func @transform_14(%arg0: i32, %arg1: i32) -> (i32, i32, i32, i32) {
    %c0_i32 = arith.constant 0 : i32
    %c0_i32_0 = arith.constant 0 : i32
    %c0_i32_1 = arith.constant 0 : i32
    return %arg0, %arg1, %c0_i32, %c0_i32_0 : i32, i32, i32, i32
  }
}

</mosaic_0001>

<llo_original>
// kernel: downsample_pallas.2
$region0: #{downsample_pallas.2}
  #allocation0 [shape = 'u32[]', space=smem, size = 0x4, offset = 0x4, fixed_abs, tag = 'smem constant byte address 0x4 - core index']
  #allocation1 [shape = 'u32[72,128]{1,0:T(1,128)}', space=vmem, size = 0x9000, scoped, tag = 'internal scratch']
  %s0 = inlined_call_operand.vmem [shape: bf16[512,4], index: 0, kind: input, shape index: {}]
  %s1 = inlined_call_operand.vmem [shape: bf16[4,4], index: 1, kind: input, shape index: {}]
  %s2 = inlined_call_operand.vmem [shape: f32[1,4], index: 2, kind: input, shape index: {}]
  %s3 = inlined_call_operand.vmem [shape: bf16[512,4], index: 3, kind: output, shape index: {}]
  %s4 = sld [smem:[#allocation0]]
  $region22: #{downsample_pallas.2} parent=0
    _
  %s6 = ssub.s32 1, %s4
  %s7 = scalar_select 0, %s6, %s4
  // Predicated region
  $region2: #{downsample_pallas.2} parent=0 // pred_check
    _
  $region3: #{downsample_pallas.2} parent=0 // pred_check_branch
    %9 = sbr.rel (0) target = $region5
  $region4: #{downsample_pallas.2} parent=0 // pred_region
    _
  $region5: #{downsample_pallas.2} parent=0 // pred_fallthru
    _
  // Predicated region
  $region6: #{downsample_pallas.2} parent=0 // pred_check
    _
  $region7: #{downsample_pallas.2} parent=0 // pred_check_branch
    %11 = sbr.rel (0) target = $region9
  $region8: #{downsample_pallas.2} parent=0 // pred_region
    _
  $region9: #{downsample_pallas.2} parent=0 // pred_fallthru
    _
  // Predicated region
  $region10: #{downsample_pallas.2} parent=0 // pred_check
    _
  $region11: #{downsample_pallas.2} parent=0 // pred_check_branch
    %13 = sbr.rel (0) target = $region13
  $region12: #{downsample_pallas.2} parent=0 // pred_region
    _
  $region13: #{downsample_pallas.2} parent=0 // pred_fallthru
    _
  %v15 = vld [vmem:[%s0] sm:$0xf]
  %v16 = vld [vmem:[%s0 + $0x4] sm:$0xf]
  %v17 = vld [vmem:[%s0 + $0x8] sm:$0xf]
  %v18 = vld [vmem:[%s0 + $0xc] sm:$0xf]
  %v19 = vld [vmem:[%s0 + $0x10] sm:$0xf]
  %v20 = vld [vmem:[%s0 + $0x14] sm:$0xf]
  %v21 = vld [vmem:[%s0 + $0x18] sm:$0xf]
  %v22 = vld [vmem:[%s0 + $0x1c] sm:$0xf]
  %v23 = vld [vmem:[%s0 + $0x20] sm:$0xf]
  %v24 = vld [vmem:[%s0 + $0x24] sm:$0xf]
  %v25 = vld [vmem:[%s0 + $0x28] sm:$0xf]
  %v26 = vld [vmem:[%s0 + $0x2c] sm:$0xf]
  %v27 = vld [vmem:[%s0 + $0x30] sm:$0xf]
  %v28 = vld [vmem:[%s0 + $0x34] sm:$0xf]
  %v29 = vld [vmem:[%s0 + $0x38] sm:$0xf]
  %v30 = vld [vmem:[%s0 + $0x3c] sm:$0xf]
  %v31 = vld [vmem:[%s0 + $0x40] sm:$0xf]
  %v32 = vld [vmem:[%s0 + $0x44] sm:$0xf]
  %v33 = vld [vmem:[%s0 + $0x48] sm:$0xf]
  %v34 = vld [vmem:[%s0 + $0x4c] sm:$0xf]
  %v35 = vld [vmem:[%s0 + $0x50] sm:$0xf]
  %v36 = vld [vmem:[%s0 + $0x54] sm:$0xf]
  %v37 = vld [vmem:[%s0 + $0x58] sm:$0xf]
  %v38 = vld [vmem:[%s0 + $0x5c] sm:$0xf]
  %v39 = vld [vmem:[%s0 + $0x60] sm:$0xf]
  %v40 = vld [vmem:[%s0 + $0x64] sm:$0xf]
  %v41 = vld [vmem:[%s0 + $0x68] sm:$0xf]
  %v42 = vld [vmem:[%s0 + $0x6c] sm:$0xf]
  %v43 = vld [vmem:[%s0 + $0x70] sm:$0xf]
  %v44 = vld [vmem:[%s0 + $0x74] sm:$0xf]
  %v45 = vld [vmem:[%s0 + $0x78] sm:$0xf]
  %v46 = vld [vmem:[%s0 + $0x7c] sm:$0xf]
  %v47 = vld [vmem:[%s0 + $0x80] sm:$0xf]
  %v48 = vld [vmem:[%s0 + $0x84] sm:$0xf]
  %v49 = vld [vmem:[%s0 + $0x88] sm:$0xf]
  %v50 = vld [vmem:[%s0 + $0x8c] sm:$0xf]
  %v51 = vld [vmem:[%s0 + $0x90] sm:$0xf]
  %v52 = vld [vmem:[%s0 + $0x94] sm:$0xf]
  %v53 = vld [vmem:[%s0 + $0x98] sm:$0xf]
  %v54 = vld [vmem:[%s0 + $0x9c] sm:$0xf]
  %v55 = vld [vmem:[%s0 + $0xa0] sm:$0xf]
  %v56 = vld [vmem:[%s0 + $0xa4] sm:$0xf]
  %v57 = vld [vmem:[%s0 + $0xa8] sm:$0xf]
  %v58 = vld [vmem:[%s0 + $0xac] sm:$0xf]
  %v59 = vld [vmem:[%s0 + $0xb0] sm:$0xf]
  %v60 = vld [vmem:[%s0 + $0xb4] sm:$0xf]
  %v61 = vld [vmem:[%s0 + $0xb8] sm:$0xf]
  %v62 = vld [vmem:[%s0 + $0xbc] sm:$0xf]
  %v63 = vld [vmem:[%s0 + $0xc0] sm:$0xf]
  %v64 = vld [vmem:[%s0 + $0xc4] sm:$0xf]
  %v65 = vld [vmem:[%s0 + $0xc8] sm:$0xf]
  %v66 = vld [vmem:[%s0 + $0xcc] sm:$0xf]
  %v67 = vld [vmem:[%s0 + $0xd0] sm:$0xf]
  %v68 = vld [vmem:[%s0 + $0xd4] sm:$0xf]
  %v69 = vld [vmem:[%s0 + $0xd8] sm:$0xf]
  %v70 = vld [vmem:[%s0 + $0xdc] sm:$0xf]
  %v71 = vld [vmem:[%s0 + $0xe0] sm:$0xf]
  %v72 = vld [vmem:[%s0 + $0xe4] sm:$0xf]
  %v73 = vld [vmem:[%s0 + $0xe8] sm:$0xf]
  %v74 = vld [vmem:[%s0 + $0xec] sm:$0xf]
  %v75 = vld [vmem:[%s0 + $0xf0] sm:$0xf]
  %v76 = vld [vmem:[%s0 + $0xf4] sm:$0xf]
  %v77 = vld [vmem:[%s0 + $0xf8] sm:$0xf]
  %v78 = vld [vmem:[%s0 + $0xfc] sm:$0xf]
  %v79 = vld [vmem:[%s1] sm:$0x3]
  %v80 = vld [vmem:[%s2] sm:$0x1]
  %v82 = vperm.slane %v80, 0
  %v148 = vunpack.c.l.b16 %v15
  %v149 = vunpack.c.l.b16 %v16
  %v150 = vunpack.c.l.b16 %v17
  %v151 = vunpack.c.l.b16 %v18
  %v152 = vunpack.c.l.b16 %v19
  %v153 = vunpack.c.l.b16 %v20
  %v154 = vunpack.c.l.b16 %v21
  %v155 = vunpack.c.l.b16 %v22
  %v156 = vunpack.c.l.b16 %v23
  %v157 = vunpack.c.l.b16 %v24
  %v158 = vunpack.c.l.b16 %v25
  %v159 = vunpack.c.l.b16 %v26
  %v160 = vunpack.c.l.b16 %v27
  %v161 = vunpack.c.l.b16 %v28
  %v162 = vunpack.c.l.b16 %v29
  %v163 = vunpack.c.l.b16 %v30
  %v164 = vunpack.c.l.b16 %v31
  %v165 = vunpack.c.l.b16 %v32
  %v166 = vunpack.c.l.b16 %v33
  %v167 = vunpack.c.l.b16 %v34
  %v168 = vunpack.c.l.b16 %v35
  %v169 = vunpack.c.l.b16 %v36
  %v170 = vunpack.c.l.b16 %v37
  %v171 = vunpack.c.l.b16 %v38
  %v172 = vunpack.c.l.b16 %v39
  %v173 = vunpack.c.l.b16 %v40
  %v174 = vunpack.c.l.b16 %v41
  %v175 = vunpack.c.l.b16 %v42
  %v176 = vunpack.c.l.b16 %v43
  %v177 = vunpack.c.l.b16 %v44
  %v178 = vunpack.c.l.b16 %v45
  %v179 = vunpack.c.l.b16 %v46
  %v180 = vunpack.c.l.b16 %v47
  %v181 = vunpack.c.l.b16 %v48
  %v182 = vunpack.c.l.b16 %v49
  %v183 = vunpack.c.l.b16 %v50
  %v184 = vunpack.c.l.b16 %v51
  %v185 = vunpack.c.l.b16 %v52
  %v186 = vunpack.c.l.b16 %v53
  %v187 = vunpack.c.l.b16 %v54
  %v188 = vunpack.c.l.b16 %v55
  %v189 = vunpack.c.l.b16 %v56
  %v190 = vunpack.c.l.b16 %v57
  %v191 = vunpack.c.l.b16 %v58
  %v192 = vunpack.c.l.b16 %v59
  %v193 = vunpack.c.l.b16 %v60
  %v194 = vunpack.c.l.b16 %v61
  %v195 = vunpack.c.l.b16 %v62
  %v196 = vunpack.c.l.b16 %v63
  %v197 = vunpack.c.l.b16 %v64
  %v198 = vunpack.c.l.b16 %v65
  %v199 = vunpack.c.l.b16 %v66
  %v200 = vunpack.c.l.b16 %v67
  %v201 = vunpack.c.l.b16 %v68
  %v202 = vunpack.c.l.b16 %v69
  %v203 = vunpack.c.l.b16 %v70
  %v204 = vunpack.c.l.b16 %v71
  %v205 = vunpack.c.l.b16 %v72
  %v206 = vunpack.c.l.b16 %v73
  %v207 = vunpack.c.l.b16 %v74
  %v208 = vunpack.c.l.b16 %v75
  %v209 = vunpack.c.l.b16 %v76
  %v210 = vunpack.c.l.b16 %v77
  %v211 = vunpack.c.l.b16 %v78
  %v212 = vpack.c.b16 %v149, %v148
  %v213 = vpack.c.b16 %v151, %v150
  %v214 = vpack.c.b16 %v153, %v152
  %v215 = vpack.c.b16 %v155, %v154
  %v216 = vpack.c.b16 %v157, %v156
  %v217 = vpack.c.b16 %v159, %v158
  %v218 = vpack.c.b16 %v161, %v160
  %v219 = vpack.c.b16 %v163, %v162
  %v220 = vpack.c.b16 %v165, %v164
  %v221 = vpack.c.b16 %v167, %v166
  %v222 = vpack.c.b16 %v169, %v168
  %v223 = vpack.c.b16 %v171, %v170
  %v224 = vpack.c.b16 %v173, %v172
  %v225 = vpack.c.b16 %v175, %v174
  %v226 = vpack.c.b16 %v177, %v176
  %v227 = vpack.c.b16 %v179, %v178
  %v228 = vpack.c.b16 %v181, %v180
  %v229 = vpack.c.b16 %v183, %v182
  %v230 = vpack.c.b16 %v185, %v184
  %v231 = vpack.c.b16 %v187, %v186
  %v232 = vpack.c.b16 %v189, %v188
  %v233 = vpack.c.b16 %v191, %v190
  %v234 = vpack.c.b16 %v193, %v192
  %v235 = vpack.c.b16 %v195, %v194
  %v236 = vpack.c.b16 %v197, %v196
  %v237 = vpack.c.b16 %v199, %v198
  %v238 = vpack.c.b16 %v201, %v200
  %v239 = vpack.c.b16 %v203, %v202
  %v240 = vpack.c.b16 %v205, %v204
  %v241 = vpack.c.b16 %v207, %v206
  %v242 = vpack.c.b16 %v209, %v208
  %v243 = vpack.c.b16 %v211, %v210
  %vm244 = vcmask 31744
  %v246 = vsel %vm244, %v212, 0
  %v249 = vsel %vm244, %v213, 0
  %v252 = vsel %vm244, %v214, 0
  %v255 = vsel %vm244, %v215, 0
  %v258 = vsel %vm244, %v216, 0
  %v261 = vsel %vm244, %v217, 0
  %v264 = vsel %vm244, %v218, 0
  %v267 = vsel %vm244, %v219, 0
  %v270 = vsel %vm244, %v220, 0
  %v273 = vsel %vm244, %v221, 0
  %v276 = vsel %vm244, %v222, 0
  %v279 = vsel %vm244, %v223, 0
  %v282 = vsel %vm244, %v224, 0
  %v285 = vsel %vm244, %v225, 0
  %v288 = vsel %vm244, %v226, 0
  %v291 = vsel %vm244, %v227, 0
  %v294 = vsel %vm244, %v228, 0
  %v297 = vsel %vm244, %v229, 0
  %v300 = vsel %vm244, %v230, 0
  %v303 = vsel %vm244, %v231, 0
  %v306 = vsel %vm244, %v232, 0
  %v309 = vsel %vm244, %v233, 0
  %v312 = vsel %vm244, %v234, 0
  %v315 = vsel %vm244, %v235, 0
  %v318 = vsel %vm244, %v236, 0
  %v321 = vsel %vm244, %v237, 0
  %v324 = vsel %vm244, %v238, 0
  %v327 = vsel %vm244, %v239, 0
  %v330 = vsel %vm244, %v240, 0
  %v333 = vsel %vm244, %v241, 0
  %v336 = vsel %vm244, %v242, 0
  %v339 = vsel %vm244, %v243, 0
  %vm341 = vcmask 1041408
  %v343 = vsel %vm341, %v79, 0
  %345 = vmatpush.bf16.msra.mxu0 0
  %346 = vmatpush.bf16.msra.mxu0 0
  %347 = vmatpush.bf16.msra.mxu0 0
  %348 = vmatpush.bf16.msra.mxu0 0
  %349 = vmatpush.bf16.msra.mxu0 0
  %350 = vmatpush.bf16.msra.mxu0 0
  %351 = vmatpush.bf16.msra.mxu0 0
  %352 = vmatpush.bf16.msra.mxu0 %v343
  %353 = vmatmul.bf16.gmra.mxu0 %v246
  %v354 = vpop.f32.mrf.mxu0
  %v355 = vadd.f32 %v82, %v354
  %v356 = vpop.f32.mrf.mxu0
  %v357 = vadd.f32 %v82, %v356
  %358 = vmatmul.bf16.gmra.mxu0 %v249
  %v359 = vpop.f32.mrf.mxu0
  %v360 = vadd.f32 %v82, %v359
  %v361 = vpop.f32.mrf.mxu0
  %v362 = vadd.f32 %v82, %v361
  %363 = vmatmul.bf16.gmra.mxu0 %v252
  %v364 = vpop.f32.mrf.mxu0
  %v365 = vadd.f32 %v82, %v364
  %v366 = vpop.f32.mrf.mxu0
  %v367 = vadd.f32 %v82, %v366
  %368 = vmatmul.bf16.gmra.mxu0 %v255
  %v369 = vpop.f32.mrf.mxu0
  %v370 = vadd.f32 %v82, %v369
  %v371 = vpop.f32.mrf.mxu0
  %v372 = vadd.f32 %v82, %v371
  %373 = vmatmul.bf16.gmra.mxu0 %v258
  %v374 = vpop.f32.mrf.mxu0
  %v375 = vadd.f32 %v82, %v374
  %v376 = vpop.f32.mrf.mxu0
  %v377 = vadd.f32 %v82, %v376
  %378 = vmatmul.bf16.gmra.mxu0 %v261
  %v379 = vpop.f32.mrf.mxu0
  %v380 = vadd.f32 %v82, %v379
  %v381 = vpop.f32.mrf.mxu0
  %v382 = vadd.f32 %v82, %v381
  %383 = vmatmul.bf16.gmra.mxu0 %v264
  %v384 = vpop.f32.mrf.mxu0
  %v385 = vadd.f32 %v82, %v384
  %v386 = vpop.f32.mrf.mxu0
  %v387 = vadd.f32 %v82, %v386
  %388 = vmatmul.bf16.gmra.mxu0 %v267
  %v389 = vpop.f32.mrf.mxu0
  %v390 = vadd.f32 %v82, %v389
  %v391 = vpop.f32.mrf.mxu0
  %v392 = vadd.f32 %v82, %v391
  %393 = vmatmul.bf16.gmra.mxu0 %v270
  %v394 = vpop.f32.mrf.mxu0
  %v395 = vadd.f32 %v82, %v394
  %v396 = vpop.f32.mrf.mxu0
  %v397 = vadd.f32 %v82, %v396
  %398 = vmatmul.bf16.gmra.mxu0 %v273
  %v399 = vpop.f32.mrf.mxu0
  %v400 = vadd.f32 %v82, %v399
  %v401 = vpop.f32.mrf.mxu0
  %v402 = vadd.f32 %v82, %v401
  %403 = vmatmul.bf16.gmra.mxu0 %v276
  %v404 = vpop.f32.mrf.mxu0
  %v405 = vadd.f32 %v82, %v404
  %v406 = vpop.f32.mrf.mxu0
  %v407 = vadd.f32 %v82, %v406
  %408 = vmatmul.bf16.gmra.mxu0 %v279
  %v409 = vpop.f32.mrf.mxu0
  %v410 = vadd.f32 %v82, %v409
  %v411 = vpop.f32.mrf.mxu0
  %v412 = vadd.f32 %v82, %v411
  %413 = vmatmul.bf16.gmra.mxu0 %v282
  %v414 = vpop.f32.mrf.mxu0
  %v415 = vadd.f32 %v82, %v414
  %v416 = vpop.f32.mrf.mxu0
  %v417 = vadd.f32 %v82, %v416
  %418 = vmatmul.bf16.gmra.mxu0 %v285
  %v419 = vpop.f32.mrf.mxu0
  %v420 = vadd.f32 %v82, %v419
  %v421 = vpop.f32.mrf.mxu0
  %v422 = vadd.f32 %v82, %v421
  %423 = vmatmul.bf16.gmra.mxu0 %v288
  %v424 = vpop.f32.mrf.mxu0
  %v425 = vadd.f32 %v82, %v424
  %v426 = vpop.f32.mrf.mxu0
  %v427 = vadd.f32 %v82, %v426
  %428 = vmatmul.bf16.gmra.mxu0 %v291
  %v429 = vpop.f32.mrf.mxu0
  %v430 = vadd.f32 %v82, %v429
  %v431 = vpop.f32.mrf.mxu0
  %v432 = vadd.f32 %v82, %v431
  %433 = vmatmul.bf16.gmra.mxu0 %v294
  %v434 = vpop.f32.mrf.mxu0
  %v435 = vadd.f32 %v82, %v434
  %v436 = vpop.f32.mrf.mxu0
  %v437 = vadd.f32 %v82, %v436
  %438 = vmatmul.bf16.gmra.mxu0 %v297
  %v439 = vpop.f32.mrf.mxu0
  %v440 = vadd.f32 %v82, %v439
  %v441 = vpop.f32.mrf.mxu0
  %v442 = vadd.f32 %v82, %v441
  %443 = vmatmul.bf16.gmra.mxu0 %v300
  %v444 = vpop.f32.mrf.mxu0
  %v445 = vadd.f32 %v82, %v444
  %v446 = vpop.f32.mrf.mxu0
  %v447 = vadd.f32 %v82, %v446
  %448 = vmatmul.bf16.gmra.mxu0 %v303
  %v449 = vpop.f32.mrf.mxu0
  %v450 = vadd.f32 %v82, %v449
  %v451 = vpop.f32.mrf.mxu0
  %v452 = vadd.f32 %v82, %v451
  %453 = vmatmul.bf16.gmra.mxu0 %v306
  %v454 = vpop.f32.mrf.mxu0
  %v455 = vadd.f32 %v82, %v454
  %v456 = vpop.f32.mrf.mxu0
  %v457 = vadd.f32 %v82, %v456
  %458 = vmatmul.bf16.gmra.mxu0 %v309
  %v459 = vpop.f32.mrf.mxu0
  %v460 = vadd.f32 %v82, %v459
  %v461 = vpop.f32.mrf.mxu0
  %v462 = vadd.f32 %v82, %v461
  %463 = vmatmul.bf16.gmra.mxu0 %v312
  %v464 = vpop.f32.mrf.mxu0
  %v465 = vadd.f32 %v82, %v464
  %v466 = vpop.f32.mrf.mxu0
  %v467 = vadd.f32 %v82, %v466
  %468 = vmatmul.bf16.gmra.mxu0 %v315
  %v469 = vpop.f32.mrf.mxu0
  %v470 = vadd.f32 %v82, %v469
  %v471 = vpop.f32.mrf.mxu0
  %v472 = vadd.f32 %v82, %v471
  %473 = vmatmul.bf16.gmra.mxu0 %v318
  %v474 = vpop.f32.mrf.mxu0
  %v475 = vadd.f32 %v82, %v474
  %v476 = vpop.f32.mrf.mxu0
  %v477 = vadd.f32 %v82, %v476
  %478 = vmatmul.bf16.gmra.mxu0 %v321
  %v479 = vpop.f32.mrf.mxu0
  %v480 = vadd.f32 %v82, %v479
  %v481 = vpop.f32.mrf.mxu0
  %v482 = vadd.f32 %v82, %v481
  %483 = vmatmul.bf16.gmra.mxu0 %v324
  %v484 = vpop.f32.mrf.mxu0
  %v485 = vadd.f32 %v82, %v484
  %v486 = vpop.f32.mrf.mxu0
  %v487 = vadd.f32 %v82, %v486
  %488 = vmatmul.bf16.gmra.mxu0 %v327
  %v489 = vpop.f32.mrf.mxu0
  %v490 = vadd.f32 %v82, %v489
  %v491 = vpop.f32.mrf.mxu0
  %v492 = vadd.f32 %v82, %v491
  %493 = vmatmul.bf16.gmra.mxu0 %v330
  %v494 = vpop.f32.mrf.mxu0
  %v495 = vadd.f32 %v82, %v494
  %v496 = vpop.f32.mrf.mxu0
  %v497 = vadd.f32 %v82, %v496
  %498 = vmatmul.bf16.gmra.mxu0 %v333
  %v499 = vpop.f32.mrf.mxu0
  %v500 = vadd.f32 %v82, %v499
  %v501 = vpop.f32.mrf.mxu0
  %v502 = vadd.f32 %v82, %v501
  %503 = vmatmul.bf16.gmra.mxu0 %v336
  %v504 = vpop.f32.mrf.mxu0
  %v505 = vadd.f32 %v82, %v504
  %v506 = vpop.f32.mrf.mxu0
  %v507 = vadd.f32 %v82, %v506
  %508 = vmatmul.bf16.gmra.mxu0 %v339
  %v509 = vpop.f32.mrf.mxu0
  %v510 = vadd.f32 %v82, %v509
  %v511 = vpop.f32.mrf.mxu0
  %v512 = vadd.f32 %v82, %v511
  %513 = vdwg.mxu0
  %v514 = vxor.u32 %v355, 2147483648
  %v515 = vxor.u32 %v357, 2147483648
  %v516 = vxor.u32 %v360, 2147483648
  %v517 = vxor.u32 %v362, 2147483648
  %v518 = vxor.u32 %v365, 2147483648
  %v519 = vxor.u32 %v367, 2147483648
  %v520 = vxor.u32 %v370, 2147483648
  %v521 = vxor.u32 %v372, 2147483648
  %v522 = vxor.u32 %v375, 2147483648
  %v523 = vxor.u32 %v377, 2147483648
  %v524 = vxor.u32 %v380, 2147483648
  %v525 = vxor.u32 %v382, 2147483648
  %v526 = vxor.u32 %v385, 2147483648
  %v527 = vxor.u32 %v387, 2147483648
  %v528 = vxor.u32 %v390, 2147483648
  %v529 = vxor.u32 %v392, 2147483648
  %v530 = vxor.u32 %v395, 2147483648
  %v531 = vxor.u32 %v397, 2147483648
  %v532 = vxor.u32 %v400, 2147483648
  %v533 = vxor.u32 %v402, 2147483648
  %v534 = vxor.u32 %v405, 2147483648
  %v535 = vxor.u32 %v407, 2147483648
  %v536 = vxor.u32 %v410, 2147483648
  %v537 = vxor.u32 %v412, 2147483648
  %v538 = vxor.u32 %v415, 2147483648
  %v539 = vxor.u32 %v417, 2147483648
  %v540 = vxor.u32 %v420, 2147483648
  %v541 = vxor.u32 %v422, 2147483648
  %v542 = vxor.u32 %v425, 2147483648
  %v543 = vxor.u32 %v427, 2147483648
  %v544 = vxor.u32 %v430, 2147483648
  %v545 = vxor.u32 %v432, 2147483648
  %v546 = vxor.u32 %v435, 2147483648
  %v547 = vxor.u32 %v437, 2147483648
  %v548 = vxor.u32 %v440, 2147483648
  %v549 = vxor.u32 %v442, 2147483648
  %v550 = vxor.u32 %v445, 2147483648
  %v551 = vxor.u32 %v447, 2147483648
  %v552 = vxor.u32 %v450, 2147483648
  %v553 = vxor.u32 %v452, 2147483648
  %v554 = vxor.u32 %v455, 2147483648
  %v555 = vxor.u32 %v457, 2147483648
  %v556 = vxor.u32 %v460, 2147483648
  %v557 = vxor.u32 %v462, 2147483648
  %v558 = vxor.u32 %v465, 2147483648
  %v559 = vxor.u32 %v467, 2147483648
  %v560 = vxor.u32 %v470, 2147483648
  %v561 = vxor.u32 %v472, 2147483648
  %v562 = vxor.u32 %v475, 2147483648
  %v563 = vxor.u32 %v477, 2147483648
  %v564 = vxor.u32 %v480, 2147483648
  %v565 = vxor.u32 %v482, 2147483648
  %v566 = vxor.u32 %v485, 2147483648
  %v567 = vxor.u32 %v487, 2147483648
  %v568 = vxor.u32 %v490, 2147483648
  %v569 = vxor.u32 %v492, 2147483648
  %v570 = vxor.u32 %v495, 2147483648
  %v571 = vxor.u32 %v497, 2147483648
  %v572 = vxor.u32 %v500, 2147483648
  %v573 = vxor.u32 %v502, 2147483648
  %v574 = vxor.u32 %v505, 2147483648
  %v575 = vxor.u32 %v507, 2147483648
  %v576 = vxor.u32 %v510, 2147483648
  %v577 = vxor.u32 %v512, 2147483648
  %v578 = vmul.f32 %v514, 1.442695
  %v579 = vpow.pop %v578
  %v580 = vmul.f32 %v515, 1.442695
  %v581 = vpow.pop %v580
  %v582 = vmul.f32 %v516, 1.442695
  %v583 = vpow.pop %v582
  %v584 = vmul.f32 %v517, 1.442695
  %v585 = vpow.pop %v584
  %v586 = vmul.f32 %v518, 1.442695
  %v587 = vpow.pop %v586
  %v588 = vmul.f32 %v519, 1.442695
  %v589 = vpow.pop %v588
  %v590 = vmul.f32 %v520, 1.442695
  %v591 = vpow.pop %v590
  %v592 = vmul.f32 %v521, 1.442695
  %v593 = vpow.pop %v592
  %v594 = vmul.f32 %v522, 1.442695
  %v595 = vpow.pop %v594
  %v596 = vmul.f32 %v523, 1.442695
  %v597 = vpow.pop %v596
  %v598 = vmul.f32 %v524, 1.442695
  %v599 = vpow.pop %v598
  %v600 = vmul.f32 %v525, 1.442695
  %v601 = vpow.pop %v600
  %v602 = vmul.f32 %v526, 1.442695
  %v603 = vpow.pop %v602
  %v604 = vmul.f32 %v527, 1.442695
  %v605 = vpow.pop %v604
  %v606 = vmul.f32 %v528, 1.442695
  %v607 = vpow.pop %v606
  %v608 = vmul.f32 %v529, 1.442695
  %v609 = vpow.pop %v608
  %v610 = vmul.f32 %v530, 1.442695
  %v611 = vpow.pop %v610
  %v612 = vmul.f32 %v531, 1.442695
  %v613 = vpow.pop %v612
  %v614 = vmul.f32 %v532, 1.442695
  %v615 = vpow.pop %v614
  %v616 = vmul.f32 %v533, 1.442695
  %v617 = vpow.pop %v616
  %v618 = vmul.f32 %v534, 1.442695
  %v619 = vpow.pop %v618
  %v620 = vmul.f32 %v535, 1.442695
  %v621 = vpow.pop %v620
  %v622 = vmul.f32 %v536, 1.442695
  %v623 = vpow.pop %v622
  %v624 = vmul.f32 %v537, 1.442695
  %v625 = vpow.pop %v624
  %v626 = vmul.f32 %v538, 1.442695
  %v627 = vpow.pop %v626
  %v628 = vmul.f32 %v539, 1.442695
  %v629 = vpow.pop %v628
  %v630 = vmul.f32 %v540, 1.442695
  %v631 = vpow.pop %v630
  %v632 = vmul.f32 %v541, 1.442695
  %v633 = vpow.pop %v632
  %v634 = vmul.f32 %v542, 1.442695
  %v635 = vpow.pop %v634
  %v636 = vmul.f32 %v543, 1.442695
  %v637 = vpow.pop %v636
  %v638 = vmul.f32 %v544, 1.442695
  %v639 = vpow.pop %v638
  %v640 = vmul.f32 %v545, 1.442695
  %v641 = vpow.pop %v640
  %v642 = vmul.f32 %v546, 1.442695
  %v643 = vpow.pop %v642
  %v644 = vmul.f32 %v547, 1.442695
  %v645 = vpow.pop %v644
  %v646 = vmul.f32 %v548, 1.442695
  %v647 = vpow.pop %v646
  %v648 = vmul.f32 %v549, 1.442695
  %v649 = vpow.pop %v648
  %v650 = vmul.f32 %v550, 1.442695
  %v651 = vpow.pop %v650
  %v652 = vmul.f32 %v551, 1.442695
  %v653 = vpow.pop %v652
  %v654 = vmul.f32 %v552, 1.442695
  %v655 = vpow.pop %v654
  %v656 = vmul.f32 %v553, 1.442695
  %v657 = vpow.pop %v656
  %v658 = vmul.f32 %v554, 1.442695
  %v659 = vpow.pop %v658
  %v660 = vmul.f32 %v555, 1.442695
  %v661 = vpow.pop %v660
  %v662 = vmul.f32 %v556, 1.442695
  %v663 = vpow.pop %v662
  %v664 = vmul.f32 %v557, 1.442695
  %v665 = vpow.pop %v664
  %v666 = vmul.f32 %v558, 1.442695
  %v667 = vpow.pop %v666
  %v668 = vmul.f32 %v559, 1.442695
  %v669 = vpow.pop %v668
  %v670 = vmul.f32 %v560, 1.442695
  %v671 = vpow.pop %v670
  %v672 = vmul.f32 %v561, 1.442695
  %v673 = vpow.pop %v672
  %v674 = vmul.f32 %v562, 1.442695
  %v675 = vpow.pop %v674
  %v676 = vmul.f32 %v563, 1.442695
  %v677 = vpow.pop %v676
  %v678 = vmul.f32 %v564, 1.442695
  %v679 = vpow.pop %v678
  %v680 = vmul.f32 %v565, 1.442695
  %v681 = vpow.pop %v680
  %v682 = vmul.f32 %v566, 1.442695
  %v683 = vpow.pop %v682
  %v684 = vmul.f32 %v567, 1.442695
  %v685 = vpow.pop %v684
  %v686 = vmul.f32 %v568, 1.442695
  %v687 = vpow.pop %v686
  %v688 = vmul.f32 %v569, 1.442695
  %v689 = vpow.pop %v688
  %v690 = vmul.f32 %v570, 1.442695
  %v691 = vpow.pop %v690
  %v692 = vmul.f32 %v571, 1.442695
  %v693 = vpow.pop %v692
  %v694 = vmul.f32 %v572, 1.442695
  %v695 = vpow.pop %v694
  %v696 = vmul.f32 %v573, 1.442695
  %v697 = vpow.pop %v696
  %v698 = vmul.f32 %v574, 1.442695
  %v699 = vpow.pop %v698
  %v700 = vmul.f32 %v575, 1.442695
  %v701 = vpow.pop %v700
  %v702 = vmul.f32 %v576, 1.442695
  %v703 = vpow.pop %v702
  %v704 = vmul.f32 %v577, 1.442695
  %v705 = vpow.pop %v704
  %v706 = vadd.f32 %v579, 1.0
  %v707 = vadd.f32 %v581, 1.0
  %v708 = vadd.f32 %v583, 1.0
  %v709 = vadd.f32 %v585, 1.0
  %v710 = vadd.f32 %v587, 1.0
  %v711 = vadd.f32 %v589, 1.0
  %v712 = vadd.f32 %v591, 1.0
  %v713 = vadd.f32 %v593, 1.0
  %v714 = vadd.f32 %v595, 1.0
  %v715 = vadd.f32 %v597, 1.0
  %v716 = vadd.f32 %v599, 1.0
  %v717 = vadd.f32 %v601, 1.0
  %v718 = vadd.f32 %v603, 1.0
  %v719 = vadd.f32 %v605, 1.0
  %v720 = vadd.f32 %v607, 1.0
  %v721 = vadd.f32 %v609, 1.0
  %v722 = vadd.f32 %v611, 1.0
  %v723 = vadd.f32 %v613, 1.0
  %v724 = vadd.f32 %v615, 1.0
  %v725 = vadd.f32 %v617, 1.0
  %v726 = vadd.f32 %v619, 1.0
  %v727 = vadd.f32 %v621, 1.0
  %v728 = vadd.f32 %v623, 1.0
  %v729 = vadd.f32 %v625, 1.0
  %v730 = vadd.f32 %v627, 1.0
  %v731 = vadd.f32 %v629, 1.0
  %v732 = vadd.f32 %v631, 1.0
  %v733 = vadd.f32 %v633, 1.0
  %v734 = vadd.f32 %v635, 1.0
  %v735 = vadd.f32 %v637, 1.0
  %v736 = vadd.f32 %v639, 1.0
  %v737 = vadd.f32 %v641, 1.0
  %v738 = vadd.f32 %v643, 1.0
  %v739 = vadd.f32 %v645, 1.0
  %v740 = vadd.f32 %v647, 1.0
  %v741 = vadd.f32 %v649, 1.0
  %v742 = vadd.f32 %v651, 1.0
  %v743 = vadd.f32 %v653, 1.0
  %v744 = vadd.f32 %v655, 1.0
  %v745 = vadd.f32 %v657, 1.0
  %v746 = vadd.f32 %v659, 1.0
  %v747 = vadd.f32 %v661, 1.0
  %v748 = vadd.f32 %v663, 1.0
  %v749 = vadd.f32 %v665, 1.0
  %v750 = vadd.f32 %v667, 1.0
  %v751 = vadd.f32 %v669, 1.0
  %v752 = vadd.f32 %v671, 1.0
  %v753 = vadd.f32 %v673, 1.0
  %v754 = vadd.f32 %v675, 1.0
  %v755 = vadd.f32 %v677, 1.0
  %v756 = vadd.f32 %v679, 1.0
  %v757 = vadd.f32 %v681, 1.0
  %v758 = vadd.f32 %v683, 1.0
  %v759 = vadd.f32 %v685, 1.0
  %v760 = vadd.f32 %v687, 1.0
  %v761 = vadd.f32 %v689, 1.0
  %v762 = vadd.f32 %v691, 1.0
  %v763 = vadd.f32 %v693, 1.0
  %v764 = vadd.f32 %v695, 1.0
  %v765 = vadd.f32 %v697, 1.0
  %v766 = vadd.f32 %v699, 1.0
  %v767 = vadd.f32 %v701, 1.0
  %v768 = vadd.f32 %v703, 1.0
  %v769 = vadd.f32 %v705, 1.0
  %v770 = vrcp.pop %v706
  %v771 = vmul.f32 %v706, %v770
  %v772 = vsub.f32 1.0, %v771
  %v773 = vmul.f32 %v770, %v772
  %v774 = vadd.f32 %v770, %v773
  %vm775 = vweird.f32 %v706
  %vm776 = vweird.f32 %v770
  %vm777 = vmor %vm775, %vm776
  %v778 = vsel %vm777, %v770, %v774
  %v779 = vand.u32 2147483647, %v706
  %vm780 = vcmp.eq.f32.partialorder %v779, 8.507059e+37
  %v781 = vand.u32 %v706, 2147483648
  %v782 = vor.u32 1.1754944e-38, %v781
  %v783 = vsel %vm780, %v782, %v778
  %v784 = vmul.f32 1.0, %v783
  %v785 = vrcp.pop %v707
  %v786 = vmul.f32 %v707, %v785
  %v787 = vsub.f32 1.0, %v786
  %v788 = vmul.f32 %v785, %v787
  %v789 = vadd.f32 %v785, %v788
  %vm790 = vweird.f32 %v707
  %vm791 = vweird.f32 %v785
  %vm792 = vmor %vm790, %vm791
  %v793 = vsel %vm792, %v785, %v789
  %v794 = vand.u32 2147483647, %v707
  %vm795 = vcmp.eq.f32.partialorder %v794, 8.507059e+37
  %v796 = vand.u32 %v707, 2147483648
  %v797 = vor.u32 1.1754944e-38, %v796
  %v798 = vsel %vm795, %v797, %v793
  %v799 = vmul.f32 1.0, %v798
  %v800 = vrcp.pop %v708
  %v801 = vmul.f32 %v708, %v800
  %v802 = vsub.f32 1.0, %v801
  %v803 = vmul.f32 %v800, %v802
  %v804 = vadd.f32 %v800, %v803
  %vm805 = vweird.f32 %v708
  %vm806 = vweird.f32 %v800
  %vm807 = vmor %vm805, %vm806
  %v808 = vsel %vm807, %v800, %v804
  %v809 = vand.u32 2147483647, %v708
  %vm810 = vcmp.eq.f32.partialorder %v809, 8.507059e+37
  %v811 = vand.u32 %v708, 2147483648
  %v812 = vor.u32 1.1754944e-38, %v811
  %v813 = vsel %vm810, %v812, %v808
  %v814 = vmul.f32 1.0, %v813
  %v815 = vrcp.pop %v709
  %v816 = vmul.f32 %v709, %v815
  %v817 = vsub.f32 1.0, %v816
  %v818 = vmul.f32 %v815, %v817
  %v819 = vadd.f32 %v815, %v818
  %vm820 = vweird.f32 %v709
  %vm821 = vweird.f32 %v815
  %vm822 = vmor %vm820, %vm821
  %v823 = vsel %vm822, %v815, %v819
  %v824 = vand.u32 2147483647, %v709
  %vm825 = vcmp.eq.f32.partialorder %v824, 8.507059e+37
  %v826 = vand.u32 %v709, 2147483648
  %v827 = vor.u32 1.1754944e-38, %v826
  %v828 = vsel %vm825, %v827, %v823
  %v829 = vmul.f32 1.0, %v828
  %v830 = vrcp.pop %v710
  %v831 = vmul.f32 %v710, %v830
  %v832 = vsub.f32 1.0, %v831
  %v833 = vmul.f32 %v830, %v832
  %v834 = vadd.f32 %v830, %v833
  %vm835 = vweird.f32 %v710
  %vm836 = vweird.f32 %v830
  %vm837 = vmor %vm835, %vm836
  %v838 = vsel %vm837, %v830, %v834
  %v839 = vand.u32 2147483647, %v710
  %vm840 = vcmp.eq.f32.partialorder %v839, 8.507059e+37
  %v841 = vand.u32 %v710, 2147483648
  %v842 = vor.u32 1.1754944e-38, %v841
  %v843 = vsel %vm840, %v842, %v838
  %v844 = vmul.f32 1.0, %v843
  %v845 = vrcp.pop %v711
  %v846 = vmul.f32 %v711, %v845
  %v847 = vsub.f32 1.0, %v846
  %v848 = vmul.f32 %v845, %v847
  %v849 = vadd.f32 %v845, %v848
  %vm850 = vweird.f32 %v711
  %vm851 = vweird.f32 %v845
  %vm852 = vmor %vm850, %vm851
  %v853 = vsel %vm852, %v845, %v849
  %v854 = vand.u32 2147483647, %v711
  %vm855 = vcmp.eq.f32.partialorder %v854, 8.507059e+37
  %v856 = vand.u32 %v711, 2147483648
  %v857 = vor.u32 1.1754944e-38, %v856
  %v858 = vsel %vm855, %v857, %v853
  %v859 = vmul.f32 1.0, %v858
  %v860 = vrcp.pop %v712
  %v861 = vmul.f32 %v712, %v860
  %v862 = vsub.f32 1.0, %v861
  %v863 = vmul.f32 %v860, %v862
  %v864 = vadd.f32 %v860, %v863
  %vm865 = vweird.f32 %v712
  %vm866 = vweird.f32 %v860
  %vm867 = vmor %vm865, %vm866
  %v868 = vsel %vm867, %v860, %v864
  %v869 = vand.u32 2147483647, %v712
  %vm870 = vcmp.eq.f32.partialorder %v869, 8.507059e+37
  %v871 = vand.u32 %v712, 2147483648
  %v872 = vor.u32 1.1754944e-38, %v871
  %v873 = vsel %vm870, %v872, %v868
  %v874 = vmul.f32 1.0, %v873
  %v875 = vrcp.pop %v713
  %v876 = vmul.f32 %v713, %v875
  %v877 = vsub.f32 1.0, %v876
  %v878 = vmul.f32 %v875, %v877
  %v879 = vadd.f32 %v875, %v878
  %vm880 = vweird.f32 %v713
  %vm881 = vweird.f32 %v875
  %vm882 = vmor %vm880, %vm881
  %v883 = vsel %vm882, %v875, %v879
  %v884 = vand.u32 2147483647, %v713
  %vm885 = vcmp.eq.f32.partialorder %v884, 8.507059e+37
  %v886 = vand.u32 %v713, 2147483648
  %v887 = vor.u32 1.1754944e-38, %v886
  %v888 = vsel %vm885, %v887, %v883
  %v889 = vmul.f32 1.0, %v888
  %v890 = vrcp.pop %v714
  %v891 = vmul.f32 %v714, %v890
  %v892 = vsub.f32 1.0, %v891
  %v893 = vmul.f32 %v890, %v892
  %v894 = vadd.f32 %v890, %v893
  %vm895 = vweird.f32 %v714
  %vm896 = vweird.f32 %v890
  %vm897 = vmor %vm895, %vm896
  %v898 = vsel %vm897, %v890, %v894
  %v899 = vand.u32 2147483647, %v714
  %vm900 = vcmp.eq.f32.partialorder %v899, 8.507059e+37
  %v901 = vand.u32 %v714, 2147483648
  %v902 = vor.u32 1.1754944e-38, %v901
  %v903 = vsel %vm900, %v902, %v898
  %v904 = vmul.f32 1.0, %v903
  %v905 = vrcp.pop %v715
  %v906 = vmul.f32 %v715, %v905
  %v907 = vsub.f32 1.0, %v906
  %v908 = vmul.f32 %v905, %v907
  %v909 = vadd.f32 %v905, %v908
  %vm910 = vweird.f32 %v715
  %vm911 = vweird.f32 %v905
  %vm912 = vmor %vm910, %vm911
  %v913 = vsel %vm912, %v905, %v909
  %v914 = vand.u32 2147483647, %v715
  %vm915 = vcmp.eq.f32.partialorder %v914, 8.507059e+37
  %v916 = vand.u32 %v715, 2147483648
  %v917 = vor.u32 1.1754944e-38, %v916
  %v918 = vsel %vm915, %v917, %v913
  %v919 = vmul.f32 1.0, %v918
  %v920 = vrcp.pop %v716
  %v921 = vmul.f32 %v716, %v920
  %v922 = vsub.f32 1.0, %v921
  %v923 = vmul.f32 %v920, %v922
  %v924 = vadd.f32 %v920, %v923
  %vm925 = vweird.f32 %v716
  %vm926 = vweird.f32 %v920
  %vm927 = vmor %vm925, %vm926
  %v928 = vsel %vm927, %v920, %v924
  %v929 = vand.u32 2147483647, %v716
  %vm930 = vcmp.eq.f32.partialorder %v929, 8.507059e+37
  %v931 = vand.u32 %v716, 2147483648
  %v932 = vor.u32 1.1754944e-38, %v931
  %v933 = vsel %vm930, %v932, %v928
  %v934 = vmul.f32 1.0, %v933
  %v935 = vrcp.pop %v717
  %v936 = vmul.f32 %v717, %v935
  %v937 = vsub.f32 1.0, %v936
  %v938 = vmul.f32 %v935, %v937
  %v939 = vadd.f32 %v935, %v938
  %vm940 = vweird.f32 %v717
  %vm941 = vweird.f32 %v935
  %vm942 = vmor %vm940, %vm941
  %v943 = vsel %vm942, %v935, %v939
  %v944 = vand.u32 2147483647, %v717
  %vm945 = vcmp.eq.f32.partialorder %v944, 8.507059e+37
  %v946 = vand.u32 %v717, 2147483648
  %v947 = vor.u32 1.1754944e-38, %v946
  %v948 = vsel %vm945, %v947, %v943
  %v949 = vmul.f32 1.0, %v948
  %v950 = vrcp.pop %v718
  %v951 = vmul.f32 %v718, %v950
  %v952 = vsub.f32 1.0, %v951
  %v953 = vmul.f32 %v950, %v952
  %v954 = vadd.f32 %v950, %v953
  %vm955 = vweird.f32 %v718
  %vm956 = vweird.f32 %v950
  %vm957 = vmor %vm955, %vm956
  %v958 = vsel %vm957, %v950, %v954
  %v959 = vand.u32 2147483647, %v718
  %vm960 = vcmp.eq.f32.partialorder %v959, 8.507059e+37
  %v961 = vand.u32 %v718, 2147483648
  %v962 = vor.u32 1.1754944e-38, %v961
  %v963 = vsel %vm960, %v962, %v958
  %v964 = vmul.f32 1.0, %v963
  %v965 = vrcp.pop %v719
  %v966 = vmul.f32 %v719, %v965
  %v967 = vsub.f32 1.0, %v966
  %v968 = vmul.f32 %v965, %v967
  %v969 = vadd.f32 %v965, %v968
  %vm970 = vweird.f32 %v719
  %vm971 = vweird.f32 %v965
  %vm972 = vmor %vm970, %vm971
  %v973 = vsel %vm972, %v965, %v969
  %v974 = vand.u32 2147483647, %v719
  %vm975 = vcmp.eq.f32.partialorder %v974, 8.507059e+37
  %v976 = vand.u32 %v719, 2147483648
  %v977 = vor.u32 1.1754944e-38, %v976
  %v978 = vsel %vm975, %v977, %v973
  %v979 = vmul.f32 1.0, %v978
  %v980 = vrcp.pop %v720
  %v981 = vmul.f32 %v720, %v980
  %v982 = vsub.f32 1.0, %v981
  %v983 = vmul.f32 %v980, %v982
  %v984 = vadd.f32 %v980, %v983
  %vm985 = vweird.f32 %v720
  %vm986 = vweird.f32 %v980
  %vm987 = vmor %vm985, %vm986
  %v988 = vsel %vm987, %v980, %v984
  %v989 = vand.u32 2147483647, %v720
  %vm990 = vcmp.eq.f32.partialorder %v989, 8.507059e+37
  %v991 = vand.u32 %v720, 2147483648
  %v992 = vor.u32 1.1754944e-38, %v991
  %v993 = vsel %vm990, %v992, %v988
  %v994 = vmul.f32 1.0, %v993
  %v995 = vrcp.pop %v721
  %v996 = vmul.f32 %v721, %v995
  %v997 = vsub.f32 1.0, %v996
  %v998 = vmul.f32 %v995, %v997
  %v999 = vadd.f32 %v995, %v998
  %vm1000 = vweird.f32 %v721
  %vm1001 = vweird.f32 %v995
  %vm1002 = vmor %vm1000, %vm1001
  %v1003 = vsel %vm1002, %v995, %v999
  %v1004 = vand.u32 2147483647, %v721
  %vm1005 = vcmp.eq.f32.partialorder %v1004, 8.507059e+37
  %v1006 = vand.u32 %v721, 2147483648
  %v1007 = vor.u32 1.1754944e-38, %v1006
  %v1008 = vsel %vm1005, %v1007, %v1003
  %v1009 = vmul.f32 1.0, %v1008
  %v1010 = vrcp.pop %v722
  %v1011 = vmul.f32 %v722, %v1010
  %v1012 = vsub.f32 1.0, %v1011
  %v1013 = vmul.f32 %v1010, %v1012
  %v1014 = vadd.f32 %v1010, %v1013
  %vm1015 = vweird.f32 %v722
  %vm1016 = vweird.f32 %v1010
  %vm1017 = vmor %vm1015, %vm1016
  %v1018 = vsel %vm1017, %v1010, %v1014
  %v1019 = vand.u32 2147483647, %v722
  %vm1020 = vcmp.eq.f32.partialorder %v1019, 8.507059e+37
  %v1021 = vand.u32 %v722, 2147483648
  %v1022 = vor.u32 1.1754944e-38, %v1021
  %v1023 = vsel %vm1020, %v1022, %v1018
  %v1024 = vmul.f32 1.0, %v1023
  %v1025 = vrcp.pop %v723
  %v1026 = vmul.f32 %v723, %v1025
  %v1027 = vsub.f32 1.0, %v1026
  %v1028 = vmul.f32 %v1025, %v1027
  %v1029 = vadd.f32 %v1025, %v1028
  %vm1030 = vweird.f32 %v723
  %vm1031 = vweird.f32 %v1025
  %vm1032 = vmor %vm1030, %vm1031
  %v1033 = vsel %vm1032, %v1025, %v1029
  %v1034 = vand.u32 2147483647, %v723
  %vm1035 = vcmp.eq.f32.partialorder %v1034, 8.507059e+37
  %v1036 = vand.u32 %v723, 2147483648
  %v1037 = vor.u32 1.1754944e-38, %v1036
  %v1038 = vsel %vm1035, %v1037, %v1033
  %v1039 = vmul.f32 1.0, %v1038
  %v1040 = vrcp.pop %v724
  %v1041 = vmul.f32 %v724, %v1040
  %v1042 = vsub.f32 1.0, %v1041
  %v1043 = vmul.f32 %v1040, %v1042
  %v1044 = vadd.f32 %v1040, %v1043
  %vm1045 = vweird.f32 %v724
  %vm1046 = vweird.f32 %v1040
  %vm1047 = vmor %vm1045, %vm1046
  %v1048 = vsel %vm1047, %v1040, %v1044
  %v1049 = vand.u32 2147483647, %v724
  %vm1050 = vcmp.eq.f32.partialorder %v1049, 8.507059e+37
  %v1051 = vand.u32 %v724, 2147483648
  %v1052 = vor.u32 1.1754944e-38, %v1051
  %v1053 = vsel %vm1050, %v1052, %v1048
  %v1054 = vmul.f32 1.0, %v1053
  %v1055 = vrcp.pop %v725
  %v1056 = vmul.f32 %v725, %v1055
  %v1057 = vsub.f32 1.0, %v1056
  %v1058 = vmul.f32 %v1055, %v1057
  %v1059 = vadd.f32 %v1055, %v1058
  %vm1060 = vweird.f32 %v725
  %vm1061 = vweird.f32 %v1055
  %vm1062 = vmor %vm1060, %vm1061
  %v1063 = vsel %vm1062, %v1055, %v1059
  %v1064 = vand.u32 2147483647, %v725
  %vm1065 = vcmp.eq.f32.partialorder %v1064, 8.507059e+37
  %v1066 = vand.u32 %v725, 2147483648
  %v1067 = vor.u32 1.1754944e-38, %v1066
  %v1068 = vsel %vm1065, %v1067, %v1063
  %v1069 = vmul.f32 1.0, %v1068
  %v1070 = vrcp.pop %v726
  %v1071 = vmul.f32 %v726, %v1070
  %v1072 = vsub.f32 1.0, %v1071
  %v1073 = vmul.f32 %v1070, %v1072
  %v1074 = vadd.f32 %v1070, %v1073
  %vm1075 = vweird.f32 %v726
  %vm1076 = vweird.f32 %v1070
  %vm1077 = vmor %vm1075, %vm1076
  %v1078 = vsel %vm1077, %v1070, %v1074
  %v1079 = vand.u32 2147483647, %v726
  %vm1080 = vcmp.eq.f32.partialorder %v1079, 8.507059e+37
  %v1081 = vand.u32 %v726, 2147483648
  %v1082 = vor.u32 1.1754944e-38, %v1081
  %v1083 = vsel %vm1080, %v1082, %v1078
  %v1084 = vmul.f32 1.0, %v1083
  %v1085 = vrcp.pop %v727
  %v1086 = vmul.f32 %v727, %v1085
  %v1087 = vsub.f32 1.0, %v1086
  %v1088 = vmul.f32 %v1085, %v1087
  %v1089 = vadd.f32 %v1085, %v1088
  %vm1090 = vweird.f32 %v727
  %vm1091 = vweird.f32 %v1085
  %vm1092 = vmor %vm1090, %vm1091
  %v1093 = vsel %vm1092, %v1085, %v1089
  %v1094 = vand.u32 2147483647, %v727
  %vm1095 = vcmp.eq.f32.partialorder %v1094, 8.507059e+37
  %v1096 = vand.u32 %v727, 2147483648
  %v1097 = vor.u32 1.1754944e-38, %v1096
  %v1098 = vsel %vm1095, %v1097, %v1093
  %v1099 = vmul.f32 1.0, %v1098
  %v1100 = vrcp.pop %v728
  %v1101 = vmul.f32 %v728, %v1100
  %v1102 = vsub.f32 1.0, %v1101
  %v1103 = vmul.f32 %v1100, %v1102
  %v1104 = vadd.f32 %v1100, %v1103
  %vm1105 = vweird.f32 %v728
  %vm1106 = vweird.f32 %v1100
  %vm1107 = vmor %vm1105, %vm1106
  %v1108 = vsel %vm1107, %v1100, %v1104
  %v1109 = vand.u32 2147483647, %v728
  %vm1110 = vcmp.eq.f32.partialorder %v1109, 8.507059e+37
  %v1111 = vand.u32 %v728, 2147483648
  %v1112 = vor.u32 1.1754944e-38, %v1111
  %v1113 = vsel %vm1110, %v1112, %v1108
  %v1114 = vmul.f32 1.0, %v1113
  %v1115 = vrcp.pop %v729
  %v1116 = vmul.f32 %v729, %v1115
  %v1117 = vsub.f32 1.0, %v1116
  %v1118 = vmul.f32 %v1115, %v1117
  %v1119 = vadd.f32 %v1115, %v1118
  %vm1120 = vweird.f32 %v729
  %vm1121 = vweird.f32 %v1115
  %vm1122 = vmor %vm1120, %vm1121
  %v1123 = vsel %vm1122, %v1115, %v1119
  %v1124 = vand.u32 2147483647, %v729
  %vm1125 = vcmp.eq.f32.partialorder %v1124, 8.507059e+37
  %v1126 = vand.u32 %v729, 2147483648
  %v1127 = vor.u32 1.1754944e-38, %v1126
  %v1128 = vsel %vm1125, %v1127, %v1123
  %v1129 = vmul.f32 1.0, %v1128
  %v1130 = vrcp.pop %v730
  %v1131 = vmul.f32 %v730, %v1130
  %v1132 = vsub.f32 1.0, %v1131
  %v1133 = vmul.f32 %v1130, %v1132
  %v1134 = vadd.f32 %v1130, %v1133
  %vm1135 = vweird.f32 %v730
  %vm1136 = vweird.f32 %v1130
  %vm1137 = vmor %vm1135, %vm1136
  %v1138 = vsel %vm1137, %v1130, %v1134
  %v1139 = vand.u32 2147483647, %v730
  %vm1140 = vcmp.eq.f32.partialorder %v1139, 8.507059e+37
  %v1141 = vand.u32 %v730, 2147483648
  %v1142 = vor.u32 1.1754944e-38, %v1141
  %v1143 = vsel %vm1140, %v1142, %v1138
  %v1144 = vmul.f32 1.0, %v1143
  %v1145 = vrcp.pop %v731
  %v1146 = vmul.f32 %v731, %v1145
  %v1147 = vsub.f32 1.0, %v1146
  %v1148 = vmul.f32 %v1145, %v1147
  %v1149 = vadd.f32 %v1145, %v1148
  %vm1150 = vweird.f32 %v731
  %vm1151 = vweird.f32 %v1145
  %vm1152 = vmor %vm1150, %vm1151
  %v1153 = vsel %vm1152, %v1145, %v1149
  %v1154 = vand.u32 2147483647, %v731
  %vm1155 = vcmp.eq.f32.partialorder %v1154, 8.507059e+37
  %v1156 = vand.u32 %v731, 2147483648
  %v1157 = vor.u32 1.1754944e-38, %v1156
  %v1158 = vsel %vm1155, %v1157, %v1153
  %v1159 = vmul.f32 1.0, %v1158
  %v1160 = vrcp.pop %v732
  %v1161 = vmul.f32 %v732, %v1160
  %v1162 = vsub.f32 1.0, %v1161
  %v1163 = vmul.f32 %v1160, %v1162
  %v1164 = vadd.f32 %v1160, %v1163
  %vm1165 = vweird.f32 %v732
  %vm1166 = vweird.f32 %v1160
  %vm1167 = vmor %vm1165, %vm1166
  %v1168 = vsel %vm1167, %v1160, %v1164
  %v1169 = vand.u32 2147483647, %v732
  %vm1170 = vcmp.eq.f32.partialorder %v1169, 8.507059e+37
  %v1171 = vand.u32 %v732, 2147483648
  %v1172 = vor.u32 1.1754944e-38, %v1171
  %v1173 = vsel %vm1170, %v1172, %v1168
  %v1174 = vmul.f32 1.0, %v1173
  %v1175 = vrcp.pop %v733
  %v1176 = vmul.f32 %v733, %v1175
  %v1177 = vsub.f32 1.0, %v1176
  %v1178 = vmul.f32 %v1175, %v1177
  %v1179 = vadd.f32 %v1175, %v1178
  %vm1180 = vweird.f32 %v733
  %vm1181 = vweird.f32 %v1175
  %vm1182 = vmor %vm1180, %vm1181
  %v1183 = vsel %vm1182, %v1175, %v1179
  %v1184 = vand.u32 2147483647, %v733
  %vm1185 = vcmp.eq.f32.partialorder %v1184, 8.507059e+37
  %v1186 = vand.u32 %v733, 2147483648
  %v1187 = vor.u32 1.1754944e-38, %v1186
  %v1188 = vsel %vm1185, %v1187, %v1183
  %v1189 = vmul.f32 1.0, %v1188
  %v1190 = vrcp.pop %v734
  %v1191 = vmul.f32 %v734, %v1190
  %v1192 = vsub.f32 1.0, %v1191
  %v1193 = vmul.f32 %v1190, %v1192
  %v1194 = vadd.f32 %v1190, %v1193
  %vm1195 = vweird.f32 %v734
  %vm1196 = vweird.f32 %v1190
  %vm1197 = vmor %vm1195, %vm1196
  %v1198 = vsel %vm1197, %v1190, %v1194
  %v1199 = vand.u32 2147483647, %v734
  %vm1200 = vcmp.eq.f32.partialorder %v1199, 8.507059e+37
  %v1201 = vand.u32 %v734, 2147483648
  %v1202 = vor.u32 1.1754944e-38, %v1201
  %v1203 = vsel %vm1200, %v1202, %v1198
  %v1204 = vmul.f32 1.0, %v1203
  %v1205 = vrcp.pop %v735
  %v1206 = vmul.f32 %v735, %v1205
  %v1207 = vsub.f32 1.0, %v1206
  %v1208 = vmul.f32 %v1205, %v1207
  %v1209 = vadd.f32 %v1205, %v1208
  %vm1210 = vweird.f32 %v735
  %vm1211 = vweird.f32 %v1205
  %vm1212 = vmor %vm1210, %vm1211
  %v1213 = vsel %vm1212, %v1205, %v1209
  %v1214 = vand.u32 2147483647, %v735
  %vm1215 = vcmp.eq.f32.partialorder %v1214, 8.507059e+37
  %v1216 = vand.u32 %v735, 2147483648
  %v1217 = vor.u32 1.1754944e-38, %v1216
  %v1218 = vsel %vm1215, %v1217, %v1213
  %v1219 = vmul.f32 1.0, %v1218
  %v1220 = vrcp.pop %v736
  %v1221 = vmul.f32 %v736, %v1220
  %v1222 = vsub.f32 1.0, %v1221
  %v1223 = vmul.f32 %v1220, %v1222
  %v1224 = vadd.f32 %v1220, %v1223
  %vm1225 = vweird.f32 %v736
  %vm1226 = vweird.f32 %v1220
  %vm1227 = vmor %vm1225, %vm1226
  %v1228 = vsel %vm1227, %v1220, %v1224
  %v1229 = vand.u32 2147483647, %v736
  %vm1230 = vcmp.eq.f32.partialorder %v1229, 8.507059e+37
  %v1231 = vand.u32 %v736, 2147483648
  %v1232 = vor.u32 1.1754944e-38, %v1231
  %v1233 = vsel %vm1230, %v1232, %v1228
  %v1234 = vmul.f32 1.0, %v1233
  %v1235 = vrcp.pop %v737
  %v1236 = vmul.f32 %v737, %v1235
  %v1237 = vsub.f32 1.0, %v1236
  %v1238 = vmul.f32 %v1235, %v1237
  %v1239 = vadd.f32 %v1235, %v1238
  %vm1240 = vweird.f32 %v737
  %vm1241 = vweird.f32 %v1235
  %vm1242 = vmor %vm1240, %vm1241
  %v1243 = vsel %vm1242, %v1235, %v1239
  %v1244 = vand.u32 2147483647, %v737
  %vm1245 = vcmp.eq.f32.partialorder %v1244, 8.507059e+37
  %v1246 = vand.u32 %v737, 2147483648
  %v1247 = vor.u32 1.1754944e-38, %v1246
  %v1248 = vsel %vm1245, %v1247, %v1243
  %v1249 = vmul.f32 1.0, %v1248
  %v1250 = vrcp.pop %v738
  %v1251 = vmul.f32 %v738, %v1250
  %v1252 = vsub.f32 1.0, %v1251
  %v1253 = vmul.f32 %v1250, %v1252
  %v1254 = vadd.f32 %v1250, %v1253
  %vm1255 = vweird.f32 %v738
  %vm1256 = vweird.f32 %v1250
  %vm1257 = vmor %vm1255, %vm1256
  %v1258 = vsel %vm1257, %v1250, %v1254
  %v1259 = vand.u32 2147483647, %v738
  %vm1260 = vcmp.eq.f32.partialorder %v1259, 8.507059e+37
  %v1261 = vand.u32 %v738, 2147483648
  %v1262 = vor.u32 1.1754944e-38, %v1261
  %v1263 = vsel %vm1260, %v1262, %v1258
  %v1264 = vmul.f32 1.0, %v1263
  %v1265 = vrcp.pop %v739
  %v1266 = vmul.f32 %v739, %v1265
  %v1267 = vsub.f32 1.0, %v1266
  %v1268 = vmul.f32 %v1265, %v1267
  %v1269 = vadd.f32 %v1265, %v1268
  %vm1270 = vweird.f32 %v739
  %vm1271 = vweird.f32 %v1265
  %vm1272 = vmor %vm1270, %vm1271
  %v1273 = vsel %vm1272, %v1265, %v1269
  %v1274 = vand.u32 2147483647, %v739
  %vm1275 = vcmp.eq.f32.partialorder %v1274, 8.507059e+37
  %v1276 = vand.u32 %v739, 2147483648
  %v1277 = vor.u32 1.1754944e-38, %v1276
  %v1278 = vsel %vm1275, %v1277, %v1273
  %v1279 = vmul.f32 1.0, %v1278
  %v1280 = vrcp.pop %v740
  %v1281 = vmul.f32 %v740, %v1280
  %v1282 = vsub.f32 1.0, %v1281
  %v1283 = vmul.f32 %v1280, %v1282
  %v1284 = vadd.f32 %v1280, %v1283
  %vm1285 = vweird.f32 %v740
  %vm1286 = vweird.f32 %v1280
  %vm1287 = vmor %vm1285, %vm1286
  %v1288 = vsel %vm1287, %v1280, %v1284
  %v1289 = vand.u32 2147483647, %v740
  %vm1290 = vcmp.eq.f32.partialorder %v1289, 8.507059e+37
  %v1291 = vand.u32 %v740, 2147483648
  %v1292 = vor.u32 1.1754944e-38, %v1291
  %v1293 = vsel %vm1290, %v1292, %v1288
  %v1294 = vmul.f32 1.0, %v1293
  %v1295 = vrcp.pop %v741
  %v1296 = vmul.f32 %v741, %v1295
  %v1297 = vsub.f32 1.0, %v1296
  %v1298 = vmul.f32 %v1295, %v1297
  %v1299 = vadd.f32 %v1295, %v1298
  %vm1300 = vweird.f32 %v741
  %vm1301 = vweird.f32 %v1295
  %vm1302 = vmor %vm1300, %vm1301
  %v1303 = vsel %vm1302, %v1295, %v1299
  %v1304 = vand.u32 2147483647, %v741
  %vm1305 = vcmp.eq.f32.partialorder %v1304, 8.507059e+37
  %v1306 = vand.u32 %v741, 2147483648
  %v1307 = vor.u32 1.1754944e-38, %v1306
  %v1308 = vsel %vm1305, %v1307, %v1303
  %v1309 = vmul.f32 1.0, %v1308
  %v1310 = vrcp.pop %v742
  %v1311 = vmul.f32 %v742, %v1310
  %v1312 = vsub.f32 1.0, %v1311
  %v1313 = vmul.f32 %v1310, %v1312
  %v1314 = vadd.f32 %v1310, %v1313
  %vm1315 = vweird.f32 %v742
  %vm1316 = vweird.f32 %v1310
  %vm1317 = vmor %vm1315, %vm1316
  %v1318 = vsel %vm1317, %v1310, %v1314
  %v1319 = vand.u32 2147483647, %v742
  %vm1320 = vcmp.eq.f32.partialorder %v1319, 8.507059e+37
  %v1321 = vand.u32 %v742, 2147483648
  %v1322 = vor.u32 1.1754944e-38, %v1321
  %v1323 = vsel %vm1320, %v1322, %v1318
  %v1324 = vmul.f32 1.0, %v1323
  %v1325 = vrcp.pop %v743
  %v1326 = vmul.f32 %v743, %v1325
  %v1327 = vsub.f32 1.0, %v1326
  %v1328 = vmul.f32 %v1325, %v1327
  %v1329 = vadd.f32 %v1325, %v1328
  %vm1330 = vweird.f32 %v743
  %vm1331 = vweird.f32 %v1325
  %vm1332 = vmor %vm1330, %vm1331
  %v1333 = vsel %vm1332, %v1325, %v1329
  %v1334 = vand.u32 2147483647, %v743
  %vm1335 = vcmp.eq.f32.partialorder %v1334, 8.507059e+37
  %v1336 = vand.u32 %v743, 2147483648
  %v1337 = vor.u32 1.1754944e-38, %v1336
  %v1338 = vsel %vm1335, %v1337, %v1333
  %v1339 = vmul.f32 1.0, %v1338
  %v1340 = vrcp.pop %v744
  %v1341 = vmul.f32 %v744, %v1340
  %v1342 = vsub.f32 1.0, %v1341
  %v1343 = vmul.f32 %v1340, %v1342
  %v1344 = vadd.f32 %v1340, %v1343
  %vm1345 = vweird.f32 %v744
  %vm1346 = vweird.f32 %v1340
  %vm1347 = vmor %vm1345, %vm1346
  %v1348 = vsel %vm1347, %v1340, %v1344
  %v1349 = vand.u32 2147483647, %v744
  %vm1350 = vcmp.eq.f32.partialorder %v1349, 8.507059e+37
  %v1351 = vand.u32 %v744, 2147483648
  %v1352 = vor.u32 1.1754944e-38, %v1351
  %v1353 = vsel %vm1350, %v1352, %v1348
  %v1354 = vmul.f32 1.0, %v1353
  %v1355 = vrcp.pop %v745
  %v1356 = vmul.f32 %v745, %v1355
  %v1357 = vsub.f32 1.0, %v1356
  %v1358 = vmul.f32 %v1355, %v1357
  %v1359 = vadd.f32 %v1355, %v1358
  %vm1360 = vweird.f32 %v745
  %vm1361 = vweird.f32 %v1355
  %vm1362 = vmor %vm1360, %vm1361
  %v1363 = vsel %vm1362, %v1355, %v1359
  %v1364 = vand.u32 2147483647, %v745
  %vm1365 = vcmp.eq.f32.partialorder %v1364, 8.507059e+37
  %v1366 = vand.u32 %v745, 2147483648
  %v1367 = vor.u32 1.1754944e-38, %v1366
  %v1368 = vsel %vm1365, %v1367, %v1363
  %v1369 = vmul.f32 1.0, %v1368
  %v1370 = vrcp.pop %v746
  %v1371 = vmul.f32 %v746, %v1370
  %v1372 = vsub.f32 1.0, %v1371
  %v1373 = vmul.f32 %v1370, %v1372
  %v1374 = vadd.f32 %v1370, %v1373
  %vm1375 = vweird.f32 %v746
  %vm1376 = vweird.f32 %v1370
  %vm1377 = vmor %vm1375, %vm1376
  %v1378 = vsel %vm1377, %v1370, %v1374
  %v1379 = vand.u32 2147483647, %v746
  %vm1380 = vcmp.eq.f32.partialorder %v1379, 8.507059e+37
  %v1381 = vand.u32 %v746, 2147483648
  %v1382 = vor.u32 1.1754944e-38, %v1381
  %v1383 = vsel %vm1380, %v1382, %v1378
  %v1384 = vmul.f32 1.0, %v1383
  %v1385 = vrcp.pop %v747
  %v1386 = vmul.f32 %v747, %v1385
  %v1387 = vsub.f32 1.0, %v1386
  %v1388 = vmul.f32 %v1385, %v1387
  %v1389 = vadd.f32 %v1385, %v1388
  %vm1390 = vweird.f32 %v747
  %vm1391 = vweird.f32 %v1385
  %vm1392 = vmor %vm1390, %vm1391
  %v1393 = vsel %vm1392, %v1385, %v1389
  %v1394 = vand.u32 2147483647, %v747
  %vm1395 = vcmp.eq.f32.partialorder %v1394, 8.507059e+37
  %v1396 = vand.u32 %v747, 2147483648
  %v1397 = vor.u32 1.1754944e-38, %v1396
  %v1398 = vsel %vm1395, %v1397, %v1393
  %v1399 = vmul.f32 1.0, %v1398
  %v1400 = vrcp.pop %v748
  %v1401 = vmul.f32 %v748, %v1400
  %v1402 = vsub.f32 1.0, %v1401
  %v1403 = vmul.f32 %v1400, %v1402
  %v1404 = vadd.f32 %v1400, %v1403
  %vm1405 = vweird.f32 %v748
  %vm1406 = vweird.f32 %v1400
  %vm1407 = vmor %vm1405, %vm1406
  %v1408 = vsel %vm1407, %v1400, %v1404
  %v1409 = vand.u32 2147483647, %v748
  %vm1410 = vcmp.eq.f32.partialorder %v1409, 8.507059e+37
  %v1411 = vand.u32 %v748, 2147483648
  %v1412 = vor.u32 1.1754944e-38, %v1411
  %v1413 = vsel %vm1410, %v1412, %v1408
  %v1414 = vmul.f32 1.0, %v1413
  %v1415 = vrcp.pop %v749
  %v1416 = vmul.f32 %v749, %v1415
  %v1417 = vsub.f32 1.0, %v1416
  %v1418 = vmul.f32 %v1415, %v1417
  %v1419 = vadd.f32 %v1415, %v1418
  %vm1420 = vweird.f32 %v749
  %vm1421 = vweird.f32 %v1415
  %vm1422 = vmor %vm1420, %vm1421
  %v1423 = vsel %vm1422, %v1415, %v1419
  %v1424 = vand.u32 2147483647, %v749
  %vm1425 = vcmp.eq.f32.partialorder %v1424, 8.507059e+37
  %v1426 = vand.u32 %v749, 2147483648
  %v1427 = vor.u32 1.1754944e-38, %v1426
  %v1428 = vsel %vm1425, %v1427, %v1423
  %v1429 = vmul.f32 1.0, %v1428
  %v1430 = vrcp.pop %v750
  %v1431 = vmul.f32 %v750, %v1430
  %v1432 = vsub.f32 1.0, %v1431
  %v1433 = vmul.f32 %v1430, %v1432
  %v1434 = vadd.f32 %v1430, %v1433
  %vm1435 = vweird.f32 %v750
  %vm1436 = vweird.f32 %v1430
  %vm1437 = vmor %vm1435, %vm1436
  %v1438 = vsel %vm1437, %v1430, %v1434
  %v1439 = vand.u32 2147483647, %v750
  %vm1440 = vcmp.eq.f32.partialorder %v1439, 8.507059e+37
  %v1441 = vand.u32 %v750, 2147483648
  %v1442 = vor.u32 1.1754944e-38, %v1441
  %v1443 = vsel %vm1440, %v1442, %v1438
  %v1444 = vmul.f32 1.0, %v1443
  %v1445 = vrcp.pop %v751
  %v1446 = vmul.f32 %v751, %v1445
  %v1447 = vsub.f32 1.0, %v1446
  %v1448 = vmul.f32 %v1445, %v1447
  %v1449 = vadd.f32 %v1445, %v1448
  %vm1450 = vweird.f32 %v751
  %vm1451 = vweird.f32 %v1445
  %vm1452 = vmor %vm1450, %vm1451
  %v1453 = vsel %vm1452, %v1445, %v1449
  %v1454 = vand.u32 2147483647, %v751
  %vm1455 = vcmp.eq.f32.partialorder %v1454, 8.507059e+37
  %v1456 = vand.u32 %v751, 2147483648
  %v1457 = vor.u32 1.1754944e-38, %v1456
  %v1458 = vsel %vm1455, %v1457, %v1453
  %v1459 = vmul.f32 1.0, %v1458
  %v1460 = vrcp.pop %v752
  %v1461 = vmul.f32 %v752, %v1460
  %v1462 = vsub.f32 1.0, %v1461
  %v1463 = vmul.f32 %v1460, %v1462
  %v1464 = vadd.f32 %v1460, %v1463
  %vm1465 = vweird.f32 %v752
  %vm1466 = vweird.f32 %v1460
  %vm1467 = vmor %vm1465, %vm1466
  %v1468 = vsel %vm1467, %v1460, %v1464
  %v1469 = vand.u32 2147483647, %v752
  %vm1470 = vcmp.eq.f32.partialorder %v1469, 8.507059e+37
  %v1471 = vand.u32 %v752, 2147483648
  %v1472 = vor.u32 1.1754944e-38, %v1471
  %v1473 = vsel %vm1470, %v1472, %v1468
  %v1474 = vmul.f32 1.0, %v1473
  %v1475 = vrcp.pop %v753
  %v1476 = vmul.f32 %v753, %v1475
  %v1477 = vsub.f32 1.0, %v1476
  %v1478 = vmul.f32 %v1475, %v1477
  %v1479 = vadd.f32 %v1475, %v1478
  %vm1480 = vweird.f32 %v753
  %vm1481 = vweird.f32 %v1475
  %vm1482 = vmor %vm1480, %vm1481
  %v1483 = vsel %vm1482, %v1475, %v1479
  %v1484 = vand.u32 2147483647, %v753
  %vm1485 = vcmp.eq.f32.partialorder %v1484, 8.507059e+37
  %v1486 = vand.u32 %v753, 2147483648
  %v1487 = vor.u32 1.1754944e-38, %v1486
  %v1488 = vsel %vm1485, %v1487, %v1483
  %v1489 = vmul.f32 1.0, %v1488
  %v1490 = vrcp.pop %v754
  %v1491 = vmul.f32 %v754, %v1490
  %v1492 = vsub.f32 1.0, %v1491
  %v1493 = vmul.f32 %v1490, %v1492
  %v1494 = vadd.f32 %v1490, %v1493
  %vm1495 = vweird.f32 %v754
  %vm1496 = vweird.f32 %v1490
  %vm1497 = vmor %vm1495, %vm1496
  %v1498 = vsel %vm1497, %v1490, %v1494
  %v1499 = vand.u32 2147483647, %v754
  %vm1500 = vcmp.eq.f32.partialorder %v1499, 8.507059e+37
  %v1501 = vand.u32 %v754, 2147483648
  %v1502 = vor.u32 1.1754944e-38, %v1501
  %v1503 = vsel %vm1500, %v1502, %v1498
  %v1504 = vmul.f32 1.0, %v1503
  %v1505 = vrcp.pop %v755
  %v1506 = vmul.f32 %v755, %v1505
  %v1507 = vsub.f32 1.0, %v1506
  %v1508 = vmul.f32 %v1505, %v1507
  %v1509 = vadd.f32 %v1505, %v1508
  %vm1510 = vweird.f32 %v755
  %vm1511 = vweird.f32 %v1505
  %vm1512 = vmor %vm1510, %vm1511
  %v1513 = vsel %vm1512, %v1505, %v1509
  %v1514 = vand.u32 2147483647, %v755
  %vm1515 = vcmp.eq.f32.partialorder %v1514, 8.507059e+37
  %v1516 = vand.u32 %v755, 2147483648
  %v1517 = vor.u32 1.1754944e-38, %v1516
  %v1518 = vsel %vm1515, %v1517, %v1513
  %v1519 = vmul.f32 1.0, %v1518
  %v1520 = vrcp.pop %v756
  %v1521 = vmul.f32 %v756, %v1520
  %v1522 = vsub.f32 1.0, %v1521
  %v1523 = vmul.f32 %v1520, %v1522
  %v1524 = vadd.f32 %v1520, %v1523
  %vm1525 = vweird.f32 %v756
  %vm1526 = vweird.f32 %v1520
  %vm1527 = vmor %vm1525, %vm1526
  %v1528 = vsel %vm1527, %v1520, %v1524
  %v1529 = vand.u32 2147483647, %v756
  %vm1530 = vcmp.eq.f32.partialorder %v1529, 8.507059e+37
  %v1531 = vand.u32 %v756, 2147483648
  %v1532 = vor.u32 1.1754944e-38, %v1531
  %v1533 = vsel %vm1530, %v1532, %v1528
  %v1534 = vmul.f32 1.0, %v1533
  %v1535 = vrcp.pop %v757
  %v1536 = vmul.f32 %v757, %v1535
  %v1537 = vsub.f32 1.0, %v1536
  %v1538 = vmul.f32 %v1535, %v1537
  %v1539 = vadd.f32 %v1535, %v1538
  %vm1540 = vweird.f32 %v757
  %vm1541 = vweird.f32 %v1535
  %vm1542 = vmor %vm1540, %vm1541
  %v1543 = vsel %vm1542, %v1535, %v1539
  %v1544 = vand.u32 2147483647, %v757
  %vm1545 = vcmp.eq.f32.partialorder %v1544, 8.507059e+37
  %v1546 = vand.u32 %v757, 2147483648
  %v1547 = vor.u32 1.1754944e-38, %v1546
  %v1548 = vsel %vm1545, %v1547, %v1543
  %v1549 = vmul.f32 1.0, %v1548
  %v1550 = vrcp.pop %v758
  %v1551 = vmul.f32 %v758, %v1550
  %v1552 = vsub.f32 1.0, %v1551
  %v1553 = vmul.f32 %v1550, %v1552
  %v1554 = vadd.f32 %v1550, %v1553
  %vm1555 = vweird.f32 %v758
  %vm1556 = vweird.f32 %v1550
  %vm1557 = vmor %vm1555, %vm1556
  %v1558 = vsel %vm1557, %v1550, %v1554
  %v1559 = vand.u32 2147483647, %v758
  %vm1560 = vcmp.eq.f32.partialorder %v1559, 8.507059e+37
  %v1561 = vand.u32 %v758, 2147483648
  %v1562 = vor.u32 1.1754944e-38, %v1561
  %v1563 = vsel %vm1560, %v1562, %v1558
  %v1564 = vmul.f32 1.0, %v1563
  %v1565 = vrcp.pop %v759
  %v1566 = vmul.f32 %v759, %v1565
  %v1567 = vsub.f32 1.0, %v1566
  %v1568 = vmul.f32 %v1565, %v1567
  %v1569 = vadd.f32 %v1565, %v1568
  %vm1570 = vweird.f32 %v759
  %vm1571 = vweird.f32 %v1565
  %vm1572 = vmor %vm1570, %vm1571
  %v1573 = vsel %vm1572, %v1565, %v1569
  %v1574 = vand.u32 2147483647, %v759
  %vm1575 = vcmp.eq.f32.partialorder %v1574, 8.507059e+37
  %v1576 = vand.u32 %v759, 2147483648
  %v1577 = vor.u32 1.1754944e-38, %v1576
  %v1578 = vsel %vm1575, %v1577, %v1573
  %v1579 = vmul.f32 1.0, %v1578
  %v1580 = vrcp.pop %v760
  %v1581 = vmul.f32 %v760, %v1580
  %v1582 = vsub.f32 1.0, %v1581
  %v1583 = vmul.f32 %v1580, %v1582
  %v1584 = vadd.f32 %v1580, %v1583
  %vm1585 = vweird.f32 %v760
  %vm1586 = vweird.f32 %v1580
  %vm1587 = vmor %vm1585, %vm1586
  %v1588 = vsel %vm1587, %v1580, %v1584
  %v1589 = vand.u32 2147483647, %v760
  %vm1590 = vcmp.eq.f32.partialorder %v1589, 8.507059e+37
  %v1591 = vand.u32 %v760, 2147483648
  %v1592 = vor.u32 1.1754944e-38, %v1591
  %v1593 = vsel %vm1590, %v1592, %v1588
  %v1594 = vmul.f32 1.0, %v1593
  %v1595 = vrcp.pop %v761
  %v1596 = vmul.f32 %v761, %v1595
  %v1597 = vsub.f32 1.0, %v1596
  %v1598 = vmul.f32 %v1595, %v1597
  %v1599 = vadd.f32 %v1595, %v1598
  %vm1600 = vweird.f32 %v761
  %vm1601 = vweird.f32 %v1595
  %vm1602 = vmor %vm1600, %vm1601
  %v1603 = vsel %vm1602, %v1595, %v1599
  %v1604 = vand.u32 2147483647, %v761
  %vm1605 = vcmp.eq.f32.partialorder %v1604, 8.507059e+37
  %v1606 = vand.u32 %v761, 2147483648
  %v1607 = vor.u32 1.1754944e-38, %v1606
  %v1608 = vsel %vm1605, %v1607, %v1603
  %v1609 = vmul.f32 1.0, %v1608
  %v1610 = vrcp.pop %v762
  %v1611 = vmul.f32 %v762, %v1610
  %v1612 = vsub.f32 1.0, %v1611
  %v1613 = vmul.f32 %v1610, %v1612
  %v1614 = vadd.f32 %v1610, %v1613
  %vm1615 = vweird.f32 %v762
  %vm1616 = vweird.f32 %v1610
  %vm1617 = vmor %vm1615, %vm1616
  %v1618 = vsel %vm1617, %v1610, %v1614
  %v1619 = vand.u32 2147483647, %v762
  %vm1620 = vcmp.eq.f32.partialorder %v1619, 8.507059e+37
  %v1621 = vand.u32 %v762, 2147483648
  %v1622 = vor.u32 1.1754944e-38, %v1621
  %v1623 = vsel %vm1620, %v1622, %v1618
  %v1624 = vmul.f32 1.0, %v1623
  %v1625 = vrcp.pop %v763
  %v1626 = vmul.f32 %v763, %v1625
  %v1627 = vsub.f32 1.0, %v1626
  %v1628 = vmul.f32 %v1625, %v1627
  %v1629 = vadd.f32 %v1625, %v1628
  %vm1630 = vweird.f32 %v763
  %vm1631 = vweird.f32 %v1625
  %vm1632 = vmor %vm1630, %vm1631
  %v1633 = vsel %vm1632, %v1625, %v1629
  %v1634 = vand.u32 2147483647, %v763
  %vm1635 = vcmp.eq.f32.partialorder %v1634, 8.507059e+37
  %v1636 = vand.u32 %v763, 2147483648
  %v1637 = vor.u32 1.1754944e-38, %v1636
  %v1638 = vsel %vm1635, %v1637, %v1633
  %v1639 = vmul.f32 1.0, %v1638
  %v1640 = vrcp.pop %v764
  %v1641 = vmul.f32 %v764, %v1640
  %v1642 = vsub.f32 1.0, %v1641
  %v1643 = vmul.f32 %v1640, %v1642
  %v1644 = vadd.f32 %v1640, %v1643
  %vm1645 = vweird.f32 %v764
  %vm1646 = vweird.f32 %v1640
  %vm1647 = vmor %vm1645, %vm1646
  %v1648 = vsel %vm1647, %v1640, %v1644
  %v1649 = vand.u32 2147483647, %v764
  %vm1650 = vcmp.eq.f32.partialorder %v1649, 8.507059e+37
  %v1651 = vand.u32 %v764, 2147483648
  %v1652 = vor.u32 1.1754944e-38, %v1651
  %v1653 = vsel %vm1650, %v1652, %v1648
  %v1654 = vmul.f32 1.0, %v1653
  %v1655 = vrcp.pop %v765
  %v1656 = vmul.f32 %v765, %v1655
  %v1657 = vsub.f32 1.0, %v1656
  %v1658 = vmul.f32 %v1655, %v1657
  %v1659 = vadd.f32 %v1655, %v1658
  %vm1660 = vweird.f32 %v765
  %vm1661 = vweird.f32 %v1655
  %vm1662 = vmor %vm1660, %vm1661
  %v1663 = vsel %vm1662, %v1655, %v1659
  %v1664 = vand.u32 2147483647, %v765
  %vm1665 = vcmp.eq.f32.partialorder %v1664, 8.507059e+37
  %v1666 = vand.u32 %v765, 2147483648
  %v1667 = vor.u32 1.1754944e-38, %v1666
  %v1668 = vsel %vm1665, %v1667, %v1663
  %v1669 = vmul.f32 1.0, %v1668
  %v1670 = vrcp.pop %v766
  %v1671 = vmul.f32 %v766, %v1670
  %v1672 = vsub.f32 1.0, %v1671
  %v1673 = vmul.f32 %v1670, %v1672
  %v1674 = vadd.f32 %v1670, %v1673
  %vm1675 = vweird.f32 %v766
  %vm1676 = vweird.f32 %v1670
  %vm1677 = vmor %vm1675, %vm1676
  %v1678 = vsel %vm1677, %v1670, %v1674
  %v1679 = vand.u32 2147483647, %v766
  %vm1680 = vcmp.eq.f32.partialorder %v1679, 8.507059e+37
  %v1681 = vand.u32 %v766, 2147483648
  %v1682 = vor.u32 1.1754944e-38, %v1681
  %v1683 = vsel %vm1680, %v1682, %v1678
  %v1684 = vmul.f32 1.0, %v1683
  %v1685 = vrcp.pop %v767
  %v1686 = vmul.f32 %v767, %v1685
  %v1687 = vsub.f32 1.0, %v1686
  %v1688 = vmul.f32 %v1685, %v1687
  %v1689 = vadd.f32 %v1685, %v1688
  %vm1690 = vweird.f32 %v767
  %vm1691 = vweird.f32 %v1685
  %vm1692 = vmor %vm1690, %vm1691
  %v1693 = vsel %vm1692, %v1685, %v1689
  %v1694 = vand.u32 2147483647, %v767
  %vm1695 = vcmp.eq.f32.partialorder %v1694, 8.507059e+37
  %v1696 = vand.u32 %v767, 2147483648
  %v1697 = vor.u32 1.1754944e-38, %v1696
  %v1698 = vsel %vm1695, %v1697, %v1693
  %v1699 = vmul.f32 1.0, %v1698
  %v1700 = vrcp.pop %v768
  %v1701 = vmul.f32 %v768, %v1700
  %v1702 = vsub.f32 1.0, %v1701
  %v1703 = vmul.f32 %v1700, %v1702
  %v1704 = vadd.f32 %v1700, %v1703
  %vm1705 = vweird.f32 %v768
  %vm1706 = vweird.f32 %v1700
  %vm1707 = vmor %vm1705, %vm1706
  %v1708 = vsel %vm1707, %v1700, %v1704
  %v1709 = vand.u32 2147483647, %v768
  %vm1710 = vcmp.eq.f32.partialorder %v1709, 8.507059e+37
  %v1711 = vand.u32 %v768, 2147483648
  %v1712 = vor.u32 1.1754944e-38, %v1711
  %v1713 = vsel %vm1710, %v1712, %v1708
  %v1714 = vmul.f32 1.0, %v1713
  %v1715 = vrcp.pop %v769
  %v1716 = vmul.f32 %v769, %v1715
  %v1717 = vsub.f32 1.0, %v1716
  %v1718 = vmul.f32 %v1715, %v1717
  %v1719 = vadd.f32 %v1715, %v1718
  %vm1720 = vweird.f32 %v769
  %vm1721 = vweird.f32 %v1715
  %vm1722 = vmor %vm1720, %vm1721
  %v1723 = vsel %vm1722, %v1715, %v1719
  %v1724 = vand.u32 2147483647, %v769
  %vm1725 = vcmp.eq.f32.partialorder %v1724, 8.507059e+37
  %v1726 = vand.u32 %v769, 2147483648
  %v1727 = vor.u32 1.1754944e-38, %v1726
  %v1728 = vsel %vm1725, %v1727, %v1723
  %v1729 = vmul.f32 1.0, %v1728
  %v1730 = vmul.f32 %v355, %v784
  %v1731 = vmul.f32 %v357, %v799
  %v1732 = vmul.f32 %v360, %v814
  %v1733 = vmul.f32 %v362, %v829
  %v1734 = vmul.f32 %v365, %v844
  %v1735 = vmul.f32 %v367, %v859
  %v1736 = vmul.f32 %v370, %v874
  %v1737 = vmul.f32 %v372, %v889
  %v1738 = vmul.f32 %v375, %v904
  %v1739 = vmul.f32 %v377, %v919
  %v1740 = vmul.f32 %v380, %v934
  %v1741 = vmul.f32 %v382, %v949
  %v1742 = vmul.f32 %v385, %v964
  %v1743 = vmul.f32 %v387, %v979
  %v1744 = vmul.f32 %v390, %v994
  %v1745 = vmul.f32 %v392, %v1009
  %v1746 = vmul.f32 %v395, %v1024
  %v1747 = vmul.f32 %v397, %v1039
  %v1748 = vmul.f32 %v400, %v1054
  %v1749 = vmul.f32 %v402, %v1069
  %v1750 = vmul.f32 %v405, %v1084
  %v1751 = vmul.f32 %v407, %v1099
  %v1752 = vmul.f32 %v410, %v1114
  %v1753 = vmul.f32 %v412, %v1129
  %v1754 = vmul.f32 %v415, %v1144
  %v1755 = vmul.f32 %v417, %v1159
  %v1756 = vmul.f32 %v420, %v1174
  %v1757 = vmul.f32 %v422, %v1189
  %v1758 = vmul.f32 %v425, %v1204
  %v1759 = vmul.f32 %v427, %v1219
  %v1760 = vmul.f32 %v430, %v1234
  %v1761 = vmul.f32 %v432, %v1249
  %v1762 = vmul.f32 %v435, %v1264
  %v1763 = vmul.f32 %v437, %v1279
  %v1764 = vmul.f32 %v440, %v1294
  %v1765 = vmul.f32 %v442, %v1309
  %v1766 = vmul.f32 %v445, %v1324
  %v1767 = vmul.f32 %v447, %v1339
  %v1768 = vmul.f32 %v450, %v1354
  %v1769 = vmul.f32 %v452, %v1369
  %v1770 = vmul.f32 %v455, %v1384
  %v1771 = vmul.f32 %v457, %v1399
  %v1772 = vmul.f32 %v460, %v1414
  %v1773 = vmul.f32 %v462, %v1429
  %v1774 = vmul.f32 %v465, %v1444
  %v1775 = vmul.f32 %v467, %v1459
  %v1776 = vmul.f32 %v470, %v1474
  %v1777 = vmul.f32 %v472, %v1489
  %v1778 = vmul.f32 %v475, %v1504
  %v1779 = vmul.f32 %v477, %v1519
  %v1780 = vmul.f32 %v480, %v1534
  %v1781 = vmul.f32 %v482, %v1549
  %v1782 = vmul.f32 %v485, %v1564
  %v1783 = vmul.f32 %v487, %v1579
  %v1784 = vmul.f32 %v490, %v1594
  %v1785 = vmul.f32 %v492, %v1609
  %v1786 = vmul.f32 %v495, %v1624
  %v1787 = vmul.f32 %v497, %v1639
  %v1788 = vmul.f32 %v500, %v1654
  %v1789 = vmul.f32 %v502, %v1669
  %v1790 = vmul.f32 %v505, %v1684
  %v1791 = vmul.f32 %v507, %v1699
  %v1792 = vmul.f32 %v510, %v1714
  %v1793 = vmul.f32 %v512, %v1729
  %v1794 = vpack.c.bf16 %v1730, %v1730
  %v1795 = vpack.c.bf16 %v1731, %v1731
  %v1796 = vpack.c.bf16 %v1732, %v1732
  %v1797 = vpack.c.bf16 %v1733, %v1733
  %v1798 = vpack.c.bf16 %v1734, %v1734
  %v1799 = vpack.c.bf16 %v1735, %v1735
  %v1800 = vpack.c.bf16 %v1736, %v1736
  %v1801 = vpack.c.bf16 %v1737, %v1737
  %v1802 = vpack.c.bf16 %v1738, %v1738
  %v1803 = vpack.c.bf16 %v1739, %v1739
  %v1804 = vpack.c.bf16 %v1740, %v1740
  %v1805 = vpack.c.bf16 %v1741, %v1741
  %v1806 = vpack.c.bf16 %v1742, %v1742
  %v1807 = vpack.c.bf16 %v1743, %v1743
  %v1808 = vpack.c.bf16 %v1744, %v1744
  %v1809 = vpack.c.bf16 %v1745, %v1745
  %v1810 = vpack.c.bf16 %v1746, %v1746
  %v1811 = vpack.c.bf16 %v1747, %v1747
  %v1812 = vpack.c.bf16 %v1748, %v1748
  %v1813 = vpack.c.bf16 %v1749, %v1749
  %v1814 = vpack.c.bf16 %v1750, %v1750
  %v1815 = vpack.c.bf16 %v1751, %v1751
  %v1816 = vpack.c.bf16 %v1752, %v1752
  %v1817 = vpack.c.bf16 %v1753, %v1753
  %v1818 = vpack.c.bf16 %v1754, %v1754
  %v1819 = vpack.c.bf16 %v1755, %v1755
  %v1820 = vpack.c.bf16 %v1756, %v1756
  %v1821 = vpack.c.bf16 %v1757, %v1757
  %v1822 = vpack.c.bf16 %v1758, %v1758
  %v1823 = vpack.c.bf16 %v1759, %v1759
  %v1824 = vpack.c.bf16 %v1760, %v1760
  %v1825 = vpack.c.bf16 %v1761, %v1761
  %v1826 = vpack.c.bf16 %v1762, %v1762
  %v1827 = vpack.c.bf16 %v1763, %v1763
  %v1828 = vpack.c.bf16 %v1764, %v1764
  %v1829 = vpack.c.bf16 %v1765, %v1765
  %v1830 = vpack.c.bf16 %v1766, %v1766
  %v1831 = vpack.c.bf16 %v1767, %v1767
  %v1832 = vpack.c.bf16 %v1768, %v1768
  %v1833 = vpack.c.bf16 %v1769, %v1769
  %v1834 = vpack.c.bf16 %v1770, %v1770
  %v1835 = vpack.c.bf16 %v1771, %v1771
  %v1836 = vpack.c.bf16 %v1772, %v1772
  %v1837 = vpack.c.bf16 %v1773, %v1773
  %v1838 = vpack.c.bf16 %v1774, %v1774
  %v1839 = vpack.c.bf16 %v1775, %v1775
  %v1840 = vpack.c.bf16 %v1776, %v1776
  %v1841 = vpack.c.bf16 %v1777, %v1777
  %v1842 = vpack.c.bf16 %v1778, %v1778
  %v1843 = vpack.c.bf16 %v1779, %v1779
  %v1844 = vpack.c.bf16 %v1780, %v1780
  %v1845 = vpack.c.bf16 %v1781, %v1781
  %v1846 = vpack.c.bf16 %v1782, %v1782
  %v1847 = vpack.c.bf16 %v1783, %v1783
  %v1848 = vpack.c.bf16 %v1784, %v1784
  %v1849 = vpack.c.bf16 %v1785, %v1785
  %v1850 = vpack.c.bf16 %v1786, %v1786
  %v1851 = vpack.c.bf16 %v1787, %v1787
  %v1852 = vpack.c.bf16 %v1788, %v1788
  %v1853 = vpack.c.bf16 %v1789, %v1789
  %v1854 = vpack.c.bf16 %v1790, %v1790
  %v1855 = vpack.c.bf16 %v1791, %v1791
  %v1856 = vpack.c.bf16 %v1792, %v1792
  %v1857 = vpack.c.bf16 %v1793, %v1793
  %vm1858 = vcmask 27648
  %1859 = vst.msk [vmem:[%s3] sm:$0xf] %vm1858, %v1794
  %1860 = vst.msk [vmem:[%s3 + $0x4] sm:$0xf] %vm1858, %v1795
  %1861 = vst.msk [vmem:[%s3 + $0x8] sm:$0xf] %vm1858, %v1796
  %1862 = vst.msk [vmem:[%s3 + $0xc] sm:$0xf] %vm1858, %v1797
  %1863 = vst.msk [vmem:[%s3 + $0x10] sm:$0xf] %vm1858, %v1798
  %1864 = vst.msk [vmem:[%s3 + $0x14] sm:$0xf] %vm1858, %v1799
  %1865 = vst.msk [vmem:[%s3 + $0x18] sm:$0xf] %vm1858, %v1800
  %1866 = vst.msk [vmem:[%s3 + $0x1c] sm:$0xf] %vm1858, %v1801
  %1867 = vst.msk [vmem:[%s3 + $0x20] sm:$0xf] %vm1858, %v1802
  %1868 = vst.msk [vmem:[%s3 + $0x24] sm:$0xf] %vm1858, %v1803
  %1869 = vst.msk [vmem:[%s3 + $0x28] sm:$0xf] %vm1858, %v1804
  %1870 = vst.msk [vmem:[%s3 + $0x2c] sm:$0xf] %vm1858, %v1805
  %1871 = vst.msk [vmem:[%s3 + $0x30] sm:$0xf] %vm1858, %v1806
  %1872 = vst.msk [vmem:[%s3 + $0x34] sm:$0xf] %vm1858, %v1807
  %1873 = vst.msk [vmem:[%s3 + $0x38] sm:$0xf] %vm1858, %v1808
  %1874 = vst.msk [vmem:[%s3 + $0x3c] sm:$0xf] %vm1858, %v1809
  %1875 = vst.msk [vmem:[%s3 + $0x40] sm:$0xf] %vm1858, %v1810
  %1876 = vst.msk [vmem:[%s3 + $0x44] sm:$0xf] %vm1858, %v1811
  %1877 = vst.msk [vmem:[%s3 + $0x48] sm:$0xf] %vm1858, %v1812
  %1878 = vst.msk [vmem:[%s3 + $0x4c] sm:$0xf] %vm1858, %v1813
  %1879 = vst.msk [vmem:[%s3 + $0x50] sm:$0xf] %vm1858, %v1814
  %1880 = vst.msk [vmem:[%s3 + $0x54] sm:$0xf] %vm1858, %v1815
  %1881 = vst.msk [vmem:[%s3 + $0x58] sm:$0xf] %vm1858, %v1816
  %1882 = vst.msk [vmem:[%s3 + $0x5c] sm:$0xf] %vm1858, %v1817
  %1883 = vst.msk [vmem:[%s3 + $0x60] sm:$0xf] %vm1858, %v1818
  %1884 = vst.msk [vmem:[%s3 + $0x64] sm:$0xf] %vm1858, %v1819
  %1885 = vst.msk [vmem:[%s3 + $0x68] sm:$0xf] %vm1858, %v1820
  %1886 = vst.msk [vmem:[%s3 + $0x6c] sm:$0xf] %vm1858, %v1821
  %1887 = vst.msk [vmem:[%s3 + $0x70] sm:$0xf] %vm1858, %v1822
  %1888 = vst.msk [vmem:[%s3 + $0x74] sm:$0xf] %vm1858, %v1823
  %1889 = vst.msk [vmem:[%s3 + $0x78] sm:$0xf] %vm1858, %v1824
  %1890 = vst.msk [vmem:[%s3 + $0x7c] sm:$0xf] %vm1858, %v1825
  %1891 = vst.msk [vmem:[%s3 + $0x80] sm:$0xf] %vm1858, %v1826
  %1892 = vst.msk [vmem:[%s3 + $0x84] sm:$0xf] %vm1858, %v1827
  %1893 = vst.msk [vmem:[%s3 + $0x88] sm:$0xf] %vm1858, %v1828
  %1894 = vst.msk [vmem:[%s3 + $0x8c] sm:$0xf] %vm1858, %v1829
  %1895 = vst.msk [vmem:[%s3 + $0x90] sm:$0xf] %vm1858, %v1830
  %1896 = vst.msk [vmem:[%s3 + $0x94] sm:$0xf] %vm1858, %v1831
  %1897 = vst.msk [vmem:[%s3 + $0x98] sm:$0xf] %vm1858, %v1832
  %1898 = vst.msk [vmem:[%s3 + $0x9c] sm:$0xf] %vm1858, %v1833
  %1899 = vst.msk [vmem:[%s3 + $0xa0] sm:$0xf] %vm1858, %v1834
  %1900 = vst.msk [vmem:[%s3 + $0xa4] sm:$0xf] %vm1858, %v1835
  %1901 = vst.msk [vmem:[%s3 + $0xa8] sm:$0xf] %vm1858, %v1836
  %1902 = vst.msk [vmem:[%s3 + $0xac] sm:$0xf] %vm1858, %v1837
  %1903 = vst.msk [vmem:[%s3 + $0xb0] sm:$0xf] %vm1858, %v1838
  %1904 = vst.msk [vmem:[%s3 + $0xb4] sm:$0xf] %vm1858, %v1839
  %1905 = vst.msk [vmem:[%s3 + $0xb8] sm:$0xf] %vm1858, %v1840
  %1906 = vst.msk [vmem:[%s3 + $0xbc] sm:$0xf] %vm1858, %v1841
  %1907 = vst.msk [vmem:[%s3 + $0xc0] sm:$0xf] %vm1858, %v1842
  %1908 = vst.msk [vmem:[%s3 + $0xc4] sm:$0xf] %vm1858, %v1843
  %1909 = vst.msk [vmem:[%s3 + $0xc8] sm:$0xf] %vm1858, %v1844
  %1910 = vst.msk [vmem:[%s3 + $0xcc] sm:$0xf] %vm1858, %v1845
  %1911 = vst.msk [vmem:[%s3 + $0xd0] sm:$0xf] %vm1858, %v1846
  %1912 = vst.msk [vmem:[%s3 + $0xd4] sm:$0xf] %vm1858, %v1847
  %1913 = vst.msk [vmem:[%s3 + $0xd8] sm:$0xf] %vm1858, %v1848
  %1914 = vst.msk [vmem:[%s3 + $0xdc] sm:$0xf] %vm1858, %v1849
  %1915 = vst.msk [vmem:[%s3 + $0xe0] sm:$0xf] %vm1858, %v1850
  %1916 = vst.msk [vmem:[%s3 + $0xe4] sm:$0xf] %vm1858, %v1851
  %1917 = vst.msk [vmem:[%s3 + $0xe8] sm:$0xf] %vm1858, %v1852
  %1918 = vst.msk [vmem:[%s3 + $0xec] sm:$0xf] %vm1858, %v1853
  %1919 = vst.msk [vmem:[%s3 + $0xf0] sm:$0xf] %vm1858, %v1854
  %1920 = vst.msk [vmem:[%s3 + $0xf4] sm:$0xf] %vm1858, %v1855
  %1921 = vst.msk [vmem:[%s3 + $0xf8] sm:$0xf] %vm1858, %v1856
  %1922 = vst.msk [vmem:[%s3 + $0xfc] sm:$0xf] %vm1858, %v1857
  // Predicated region
  $region14: #{downsample_pallas.2} parent=0 // pred_check
    _
  $region15: #{downsample_pallas.2} parent=0 // pred_check_branch
    %1924 = sbr.rel (0) target = $region17
  $region16: #{downsample_pallas.2} parent=0 // pred_region
    _
  $region17: #{downsample_pallas.2} parent=0 // pred_fallthru
    _
  // Predicated region
  $region18: #{downsample_pallas.2} parent=0 // pred_check
    _
  $region19: #{downsample_pallas.2} parent=0 // pred_check_branch
    %1926 = sbr.rel (0) target = $region21
  $region20: #{downsample_pallas.2} parent=0 // pred_region
    _
  $region21: #{downsample_pallas.2} parent=0 // pred_fallthru
    _

// kernel: downsample_pallas.3
$region0: #{downsample_pallas.3}
  #allocation0 [shape = 'u32[]', space=smem, size = 0x4, offset = 0x4, fixed_abs, tag = 'smem constant byte address 0x4 - core index']
  #allocation1 [shape = 'u32[72,128]{1,0:T(1,128)}', space=vmem, size = 0x9000, scoped, tag = 'internal scratch']
  %s0 = inlined_call_operand.vmem [shape: bf16[2,8,8,4], index: 0, kind: input, shape index: {}]
  %s1 = inlined_call_operand.vmem [shape: bf16[2,8,8,4], index: 1, kind: input, shape index: {}]
  %s2 = inlined_call_operand.vmem [shape: bf16[2,8,8,4], index: 2, kind: input, shape index: {}]
  %s3 = inlined_call_operand.vmem [shape: bf16[2,8,8,4], index: 3, kind: input, shape index: {}]
  %s4 = inlined_call_operand.vmem [shape: bf16[2,8,9,4], index: 4, kind: input, shape index: {}]
  %s5 = inlined_call_operand.vmem [shape: bf16[2,8,9,4], index: 5, kind: input, shape index: {}]
  %s6 = inlined_call_operand.vmem [shape: bf16[2,8,9,4], index: 6, kind: input, shape index: {}]
  %s7 = inlined_call_operand.vmem [shape: bf16[2,8,9,4], index: 7, kind: input, shape index: {}]
  %s8 = inlined_call_operand.vmem [shape: bf16[2,8,9,4], index: 8, kind: input, shape index: {}]
  %s9 = inlined_call_operand.vmem [shape: bf16[2,8,9,4], index: 9, kind: input, shape index: {}]
  %s10 = inlined_call_operand.vmem [shape: bf16[4,4], index: 10, kind: input, shape index: {}]
  %s11 = inlined_call_operand.vmem [shape: bf16[9,4,4], index: 11, kind: input, shape index: {}]
  %s12 = inlined_call_operand.vmem [shape: f32[1,4], index: 12, kind: input, shape index: {}]
  %s13 = inlined_call_operand.vmem [shape: f32[1,4], index: 13, kind: input, shape index: {}]
  %s14 = inlined_call_operand.vmem [shape: f32[2,8,8,8], index: 14, kind: output, shape index: {}]
  %s15 = sld [smem:[#allocation0]]
  $region89: #{downsample_pallas.3} parent=0
    _
  %s17 = ssub.s32 1, %s15
  %s18 = scalar_select 0, %s17, %s15
  loop: start=0, step=1, limit=4
  $region2: #{downsample_pallas.3} parent=0 // loop_pre_header
    _
  $region3: #{downsample_pallas.3} parent=0 // loop_header
    %s20 = sphi 0, %s24
    %p21 = scmp.ge.s32.totalorder %s20, 4
    %s27 = sphi 0, %s39
    %s28 = sphi 0, %s35
    %s29 = sphi 0, %s27
    %s30 = sphi 0, %s28
    %s31 = sphi 0, %s29
    %s32 = sphi 0, %s30
    %s44 = sphi 0, %s46
    %s47 = sphi 0, %s44
    %s48 = sphi 0, %s47
    %s64 = sphi 0, %s48
    %s72 = sphi 0, %s74
    %s75 = sphi 0, %s72
    %s76 = sphi 0, %s75
    %s92 = sphi 0, %s76
    %s100 = sphi 0, %s102
    %s103 = sphi 0, %s100
    %s104 = sphi 0, %s103
    %s120 = sphi 0, %s104
    %s128 = sphi 0, %s130
    %s131 = sphi 0, %s128
    %s132 = sphi 0, %s131
    %s148 = sphi 0, %s132
    %s156 = sphi 0, %s158
    %s159 = sphi 0, %s156
    %s160 = sphi 0, %s159
    %s176 = sphi 0, %s160
    %s184 = sphi 0, %s186
    %s187 = sphi 0, %s184
    %s188 = sphi 0, %s187
    %s204 = sphi 0, %s188
    %s212 = sphi 0, %s214
    %s215 = sphi 0, %s212
    %s216 = sphi 0, %s215
    %s232 = sphi 0, %s216
    %s240 = sphi 0, %s242
    %s243 = sphi 0, %s240
    %s244 = sphi 0, %s243
    %s260 = sphi 0, %s244
    %s268 = sphi 0, %s270
    %s271 = sphi 0, %s268
    %s272 = sphi 0, %s271
    %s288 = sphi 0, %s272
    %s296 = sphi 0, %s298
    %s299 = sphi 0, %s296
    %s300 = sphi 0, %s299
    %s316 = sphi 0, %s300
    %s320 = sphi 0, %s320
    %s322 = sphi 0, %s320
    %s323 = sphi 0, %s322
    %s337 = sphi 0, %s323
    %s341 = sphi 0, %s341
    %s343 = sphi 0, %s341
    %s344 = sphi 0, %s343
    %s358 = sphi 0, %s344
    %s362 = sphi 0, %s362
    %s364 = sphi 0, %s362
    %s365 = sphi 0, %s364
    %s379 = sphi 0, %s365
    %s383 = sphi 0, %s383
    %s385 = sphi 0, %s383
    %s386 = sphi 0, %s385
    %s400 = sphi 0, %s386
    %s408 = sphi 0, %s410
    %s411 = sphi 0, %s408
    %s412 = sphi 0, %s411
    %s428 = sphi 0, %s412
  $region4: #{downsample_pallas.3} parent=0 // loop_header_branch
    %23 = sbr.rel (%p21) target = $region8
  $region5: #{downsample_pallas.3} parent=0 // loop_body
    %s25 = ssub.s32 %s20, 1
    %s26 = ssub.s32 %s20, 2
    %s33 = sadd.s32 1, %s28
    %p34 = scmp.ge.s32.totalorder %s33, 1
    %s35 = scalar_select %p34, 0, %s33
    %s36 = sadd.s32 1, %s27
    %s37 = scalar_select %p34, %s36, %s27
    %p38 = scmp.ge.s32.totalorder %s37, 2
    %s39 = scalar_select %p38, 0, %s37
    %s40 = ssub.s32 %s27, %s39
    %s41 = ssub.s32 %s28, %s35
    %s42 = sor.u32 %s40, %s41
    %p43 = scmp.eq.s32.totalorder %s42, 0
    %s45 = sadd.s32 %s44, 1
    %s46 = scalar_select %p43, %s44, %s45
    %p49 = pneg %p43
    %p50 = scmp.eq.s32.totalorder %s20, 1
    %p51 = por %p49, %p50
    %p52 = scmp.ne.s32.totalorder %s44, %s47
    %p53 = scmp.eq.s32.totalorder %s20, 0
    %p54 = por %p52, %p53
    %p55 = scmp.ne.s32.totalorder %s44, %s47
    %p56 = scmp.eq.s32.totalorder %s25, 1
    %p57 = por %p55, %p56
    %p58 = scmp.ne.s32.totalorder %s47, %s48
    %p59 = scmp.eq.s32.totalorder %s25, 0
    %p60 = por %p58, %p59
    %p61 = scmp.ne.s32.totalorder %s47, %s48
    %p62 = scmp.eq.s32.totalorder %s26, 1
    %p63 = por %p61, %p62
    %p65 = scmp.ne.s32.totalorder %s48, %s64
    %p66 = scmp.eq.s32.totalorder %s26, 0
    %p67 = por %p65, %p66
    %s68 = ssub.s32 %s27, %s39
    %s69 = ssub.s32 %s28, %s35
    %s70 = sor.u32 %s68, %s69
    %p71 = scmp.eq.s32.totalorder %s70, 0
    %s73 = sadd.s32 %s72, 1
    %s74 = scalar_select %p71, %s72, %s73
    %p77 = pneg %p71
    %p78 = scmp.eq.s32.totalorder %s20, 1
    %p79 = por %p77, %p78
    %p80 = scmp.ne.s32.totalorder %s72, %s75
    %p81 = scmp.eq.s32.totalorder %s20, 0
    %p82 = por %p80, %p81
    %p83 = scmp.ne.s32.totalorder %s72, %s75
    %p84 = scmp.eq.s32.totalorder %s25, 1
    %p85 = por %p83, %p84
    %p86 = scmp.ne.s32.totalorder %s75, %s76
    %p87 = scmp.eq.s32.totalorder %s25, 0
    %p88 = por %p86, %p87
    %p89 = scmp.ne.s32.totalorder %s75, %s76
    %p90 = scmp.eq.s32.totalorder %s26, 1
    %p91 = por %p89, %p90
    %p93 = scmp.ne.s32.totalorder %s76, %s92
    %p94 = scmp.eq.s32.totalorder %s26, 0
    %p95 = por %p93, %p94
    %s96 = ssub.s32 %s27, %s39
    %s97 = ssub.s32 %s28, %s35
    %s98 = sor.u32 %s96, %s97
    %p99 = scmp.eq.s32.totalorder %s98, 0
    %s101 = sadd.s32 %s100, 1
    %s102 = scalar_select %p99, %s100, %s101
    %p105 = pneg %p99
    %p106 = scmp.eq.s32.totalorder %s20, 1
    %p107 = por %p105, %p106
    %p108 = scmp.ne.s32.totalorder %s100, %s103
    %p109 = scmp.eq.s32.totalorder %s20, 0
    %p110 = por %p108, %p109
    %p111 = scmp.ne.s32.totalorder %s100, %s103
    %p112 = scmp.eq.s32.totalorder %s25, 1
    %p113 = por %p111, %p112
    %p114 = scmp.ne.s32.totalorder %s103, %s104
    %p115 = scmp.eq.s32.totalorder %s25, 0
    %p116 = por %p114, %p115
    %p117 = scmp.ne.s32.totalorder %s103, %s104
    %p118 = scmp.eq.s32.totalorder %s26, 1
    %p119 = por %p117, %p118
    %p121 = scmp.ne.s32.totalorder %s104, %s120
    %p122 = scmp.eq.s32.totalorder %s26, 0
    %p123 = por %p121, %p122
    %s124 = ssub.s32 %s27, %s39
    %s125 = ssub.s32 %s28, %s35
    %s126 = sor.u32 %s124, %s125
    %p127 = scmp.eq.s32.totalorder %s126, 0
    %s129 = sadd.s32 %s128, 1
    %s130 = scalar_select %p127, %s128, %s129
    %p133 = pneg %p127
    %p134 = scmp.eq.s32.totalorder %s20, 1
    %p135 = por %p133, %p134
    %p136 = scmp.ne.s32.totalorder %s128, %s131
    %p137 = scmp.eq.s32.totalorder %s20, 0
    %p138 = por %p136, %p137
    %p139 = scmp.ne.s32.totalorder %s128, %s131
    %p140 = scmp.eq.s32.totalorder %s25, 1
    %p141 = por %p139, %p140
    %p142 = scmp.ne.s32.totalorder %s131, %s132
    %p143 = scmp.eq.s32.totalorder %s25, 0
    %p144 = por %p142, %p143
    %p145 = scmp.ne.s32.totalorder %s131, %s132
    %p146 = scmp.eq.s32.totalorder %s26, 1
    %p147 = por %p145, %p146
    %p149 = scmp.ne.s32.totalorder %s132, %s148
    %p150 = scmp.eq.s32.totalorder %s26, 0
    %p151 = por %p149, %p150
    %s152 = ssub.s32 %s27, %s39
    %s153 = ssub.s32 %s28, %s35
    %s154 = sor.u32 %s152, %s153
    %p155 = scmp.eq.s32.totalorder %s154, 0
    %s157 = sadd.s32 %s156, 1
    %s158 = scalar_select %p155, %s156, %s157
    %p161 = pneg %p155
    %p162 = scmp.eq.s32.totalorder %s20, 1
    %p163 = por %p161, %p162
    %p164 = scmp.ne.s32.totalorder %s156, %s159
    %p165 = scmp.eq.s32.totalorder %s20, 0
    %p166 = por %p164, %p165
    %p167 = scmp.ne.s32.totalorder %s156, %s159
    %p168 = scmp.eq.s32.totalorder %s25, 1
    %p169 = por %p167, %p168
    %p170 = scmp.ne.s32.totalorder %s159, %s160
    %p171 = scmp.eq.s32.totalorder %s25, 0
    %p172 = por %p170, %p171
    %p173 = scmp.ne.s32.totalorder %s159, %s160
    %p174 = scmp.eq.s32.totalorder %s26, 1
    %p175 = por %p173, %p174
    %p177 = scmp.ne.s32.totalorder %s160, %s176
    %p178 = scmp.eq.s32.totalorder %s26, 0
    %p179 = por %p177, %p178
    %s180 = ssub.s32 %s27, %s39
    %s181 = ssub.s32 %s28, %s35
    %s182 = sor.u32 %s180, %s181
    %p183 = scmp.eq.s32.totalorder %s182, 0
    %s185 = sadd.s32 %s184, 1
    %s186 = scalar_select %p183, %s184, %s185
    %p189 = pneg %p183
    %p190 = scmp.eq.s32.totalorder %s20, 1
    %p191 = por %p189, %p190
    %p192 = scmp.ne.s32.totalorder %s184, %s187
    %p193 = scmp.eq.s32.totalorder %s20, 0
    %p194 = por %p192, %p193
    %p195 = scmp.ne.s32.totalorder %s184, %s187
    %p196 = scmp.eq.s32.totalorder %s25, 1
    %p197 = por %p195, %p196
    %p198 = scmp.ne.s32.totalorder %s187, %s188
    %p199 = scmp.eq.s32.totalorder %s25, 0
    %p200 = por %p198, %p199
    %p201 = scmp.ne.s32.totalorder %s187, %s188
    %p202 = scmp.eq.s32.totalorder %s26, 1
    %p203 = por %p201, %p202
    %p205 = scmp.ne.s32.totalorder %s188, %s204
    %p206 = scmp.eq.s32.totalorder %s26, 0
    %p207 = por %p205, %p206
    %s208 = ssub.s32 %s27, %s39
    %s209 = ssub.s32 %s28, %s35
    %s210 = sor.u32 %s208, %s209
    %p211 = scmp.eq.s32.totalorder %s210, 0
    %s213 = sadd.s32 %s212, 1
    %s214 = scalar_select %p211, %s212, %s213
    %p217 = pneg %p211
    %p218 = scmp.eq.s32.totalorder %s20, 1
    %p219 = por %p217, %p218
    %p220 = scmp.ne.s32.totalorder %s212, %s215
    %p221 = scmp.eq.s32.totalorder %s20, 0
    %p222 = por %p220, %p221
    %p223 = scmp.ne.s32.totalorder %s212, %s215
    %p224 = scmp.eq.s32.totalorder %s25, 1
    %p225 = por %p223, %p224
    %p226 = scmp.ne.s32.totalorder %s215, %s216
    %p227 = scmp.eq.s32.totalorder %s25, 0
    %p228 = por %p226, %p227
    %p229 = scmp.ne.s32.totalorder %s215, %s216
    %p230 = scmp.eq.s32.totalorder %s26, 1
    %p231 = por %p229, %p230
    %p233 = scmp.ne.s32.totalorder %s216, %s232
    %p234 = scmp.eq.s32.totalorder %s26, 0
    %p235 = por %p233, %p234
    %s236 = ssub.s32 %s27, %s39
    %s237 = ssub.s32 %s28, %s35
    %s238 = sor.u32 %s236, %s237
    %p239 = scmp.eq.s32.totalorder %s238, 0
    %s241 = sadd.s32 %s240, 1
    %s242 = scalar_select %p239, %s240, %s241
    %p245 = pneg %p239
    %p246 = scmp.eq.s32.totalorder %s20, 1
    %p247 = por %p245, %p246
    %p248 = scmp.ne.s32.totalorder %s240, %s243
    %p249 = scmp.eq.s32.totalorder %s20, 0
    %p250 = por %p248, %p249
    %p251 = scmp.ne.s32.totalorder %s240, %s243
    %p252 = scmp.eq.s32.totalorder %s25, 1
    %p253 = por %p251, %p252
    %p254 = scmp.ne.s32.totalorder %s243, %s244
    %p255 = scmp.eq.s32.totalorder %s25, 0
    %p256 = por %p254, %p255
    %p257 = scmp.ne.s32.totalorder %s243, %s244
    %p258 = scmp.eq.s32.totalorder %s26, 1
    %p259 = por %p257, %p258
    %p261 = scmp.ne.s32.totalorder %s244, %s260
    %p262 = scmp.eq.s32.totalorder %s26, 0
    %p263 = por %p261, %p262
    %s264 = ssub.s32 %s27, %s39
    %s265 = ssub.s32 %s28, %s35
    %s266 = sor.u32 %s264, %s265
    %p267 = scmp.eq.s32.totalorder %s266, 0
    %s269 = sadd.s32 %s268, 1
    %s270 = scalar_select %p267, %s268, %s269
    %p273 = pneg %p267
    %p274 = scmp.eq.s32.totalorder %s20, 1
    %p275 = por %p273, %p274
    %p276 = scmp.ne.s32.totalorder %s268, %s271
    %p277 = scmp.eq.s32.totalorder %s20, 0
    %p278 = por %p276, %p277
    %p279 = scmp.ne.s32.totalorder %s268, %s271
    %p280 = scmp.eq.s32.totalorder %s25, 1
    %p281 = por %p279, %p280
    %p282 = scmp.ne.s32.totalorder %s271, %s272
    %p283 = scmp.eq.s32.totalorder %s25, 0
    %p284 = por %p282, %p283
    %p285 = scmp.ne.s32.totalorder %s271, %s272
    %p286 = scmp.eq.s32.totalorder %s26, 1
    %p287 = por %p285, %p286
    %p289 = scmp.ne.s32.totalorder %s272, %s288
    %p290 = scmp.eq.s32.totalorder %s26, 0
    %p291 = por %p289, %p290
    %s292 = ssub.s32 %s27, %s39
    %s293 = ssub.s32 %s28, %s35
    %s294 = sor.u32 %s292, %s293
    %p295 = scmp.eq.s32.totalorder %s294, 0
    %s297 = sadd.s32 %s296, 1
    %s298 = scalar_select %p295, %s296, %s297
    %p301 = pneg %p295
    %p302 = scmp.eq.s32.totalorder %s20, 1
    %p303 = por %p301, %p302
    %p304 = scmp.ne.s32.totalorder %s296, %s299
    %p305 = scmp.eq.s32.totalorder %s20, 0
    %p306 = por %p304, %p305
    %p307 = scmp.ne.s32.totalorder %s296, %s299
    %p308 = scmp.eq.s32.totalorder %s25, 1
    %p309 = por %p307, %p308
    %p310 = scmp.ne.s32.totalorder %s299, %s300
    %p311 = scmp.eq.s32.totalorder %s25, 0
    %p312 = por %p310, %p311
    %p313 = scmp.ne.s32.totalorder %s299, %s300
    %p314 = scmp.eq.s32.totalorder %s26, 1
    %p315 = por %p313, %p314
    %p317 = scmp.ne.s32.totalorder %s300, %s316
    %p318 = scmp.eq.s32.totalorder %s26, 0
    %p319 = por %p317, %p318
    %s321 = sadd.s32 %s320, 1
    %p324 = scmp.eq.s32.totalorder %s20, 1
    %p325 = scmp.ne.s32.totalorder %s320, %s322
    %p326 = scmp.eq.s32.totalorder %s20, 0
    %p327 = por %p325, %p326
    %p328 = scmp.ne.s32.totalorder %s320, %s322
    %p329 = scmp.eq.s32.totalorder %s25, 1
    %p330 = por %p328, %p329
    %p331 = scmp.ne.s32.totalorder %s322, %s323
    %p332 = scmp.eq.s32.totalorder %s25, 0
    %p333 = por %p331, %p332
    %p334 = scmp.ne.s32.totalorder %s322, %s323
    %p335 = scmp.eq.s32.totalorder %s26, 1
    %p336 = por %p334, %p335
    %p338 = scmp.ne.s32.totalorder %s323, %s337
    %p339 = scmp.eq.s32.totalorder %s26, 0
    %p340 = por %p338, %p339
    %s342 = sadd.s32 %s341, 1
    %p345 = scmp.eq.s32.totalorder %s20, 1
    %p346 = scmp.ne.s32.totalorder %s341, %s343
    %p347 = scmp.eq.s32.totalorder %s20, 0
    %p348 = por %p346, %p347
    %p349 = scmp.ne.s32.totalorder %s341, %s343
    %p350 = scmp.eq.s32.totalorder %s25, 1
    %p351 = por %p349, %p350
    %p352 = scmp.ne.s32.totalorder %s343, %s344
    %p353 = scmp.eq.s32.totalorder %s25, 0
    %p354 = por %p352, %p353
    %p355 = scmp.ne.s32.totalorder %s343, %s344
    %p356 = scmp.eq.s32.totalorder %s26, 1
    %p357 = por %p355, %p356
    %p359 = scmp.ne.s32.totalorder %s344, %s358
    %p360 = scmp.eq.s32.totalorder %s26, 0
    %p361 = por %p359, %p360
    %s363 = sadd.s32 %s362, 1
    %p366 = scmp.eq.s32.totalorder %s20, 1
    %p367 = scmp.ne.s32.totalorder %s362, %s364
    %p368 = scmp.eq.s32.totalorder %s20, 0
    %p369 = por %p367, %p368
    %p370 = scmp.ne.s32.totalorder %s362, %s364
    %p371 = scmp.eq.s32.totalorder %s25, 1
    %p372 = por %p370, %p371
    %p373 = scmp.ne.s32.totalorder %s364, %s365
    %p374 = scmp.eq.s32.totalorder %s25, 0
    %p375 = por %p373, %p374
    %p376 = scmp.ne.s32.totalorder %s364, %s365
    %p377 = scmp.eq.s32.totalorder %s26, 1
    %p378 = por %p376, %p377
    %p380 = scmp.ne.s32.totalorder %s365, %s379
    %p381 = scmp.eq.s32.totalorder %s26, 0
    %p382 = por %p380, %p381
    %s384 = sadd.s32 %s383, 1
    %p387 = scmp.eq.s32.totalorder %s20, 1
    %p388 = scmp.ne.s32.totalorder %s383, %s385
    %p389 = scmp.eq.s32.totalorder %s20, 0
    %p390 = por %p388, %p389
    %p391 = scmp.ne.s32.totalorder %s383, %s385
    %p392 = scmp.eq.s32.totalorder %s25, 1
    %p393 = por %p391, %p392
    %p394 = scmp.ne.s32.totalorder %s385, %s386
    %p395 = scmp.eq.s32.totalorder %s25, 0
    %p396 = por %p394, %p395
    %p397 = scmp.ne.s32.totalorder %s385, %s386
    %p398 = scmp.eq.s32.totalorder %s26, 1
    %p399 = por %p397, %p398
    %p401 = scmp.ne.s32.totalorder %s386, %s400
    %p402 = scmp.eq.s32.totalorder %s26, 0
    %p403 = por %p401, %p402
    %s404 = ssub.s32 %s27, %s39
    %s405 = ssub.s32 %s28, %s35
    %s406 = sor.u32 %s404, %s405
    %p407 = scmp.eq.s32.totalorder %s406, 0
    %s409 = sadd.s32 %s408, 1
    %s410 = scalar_select %p407, %s408, %s409
    %p413 = pneg %p407
    %p414 = scmp.eq.s32.totalorder %s20, 1
    %p415 = por %p413, %p414
    %p416 = scmp.ne.s32.totalorder %s408, %s411
    %p417 = scmp.eq.s32.totalorder %s20, 0
    %p418 = por %p416, %p417
    %p419 = scmp.ne.s32.totalorder %s408, %s411
    %p420 = scmp.eq.s32.totalorder %s25, 1
    %p421 = por %p419, %p420
    %p422 = scmp.ne.s32.totalorder %s411, %s412
    %p423 = scmp.eq.s32.totalorder %s25, 0
    %p424 = por %p422, %p423
    %p425 = scmp.ne.s32.totalorder %s411, %s412
    %p426 = scmp.eq.s32.totalorder %s26, 1
    %p427 = por %p425, %p426
    %p429 = scmp.ne.s32.totalorder %s412, %s428
    %p430 = scmp.eq.s32.totalorder %s26, 0
    %p431 = por %p429, %p430
    %p432 = scmp.le.s32.totalorder 1, %s20
    %p433 = scmp.lt.s32.totalorder %s20, 3
    %p434 = pnand %p432, %p433
    %p435 = pneg %p434
    // Predicated region
    $region9: #{downsample_pallas.3} parent=5 // pred_check
      _
    $region10: #{downsample_pallas.3} parent=5 // pred_check_branch
      %437 = sbr.rel (%p434) target = $region12
    $region11: #{downsample_pallas.3} parent=5 // pred_region
      %s438 = ssub.s32 %s20, 1
      // Predicated region
      $region13: #{downsample_pallas.3} parent=11 // pred_check
        %p439 = pneg %p333
      $region14: #{downsample_pallas.3} parent=11 // pred_check_branch
        %441 = sbr.rel (%p439) target = $region16
      $region15: #{downsample_pallas.3} parent=11 // pred_region
        _
      $region16: #{downsample_pallas.3} parent=11 // pred_fallthru
        _
      // Predicated region
      $region17: #{downsample_pallas.3} parent=11 // pred_check
        %p442 = pneg %p354
      $region18: #{downsample_pallas.3} parent=11 // pred_check_branch
        %444 = sbr.rel (%p442) target = $region20
      $region19: #{downsample_pallas.3} parent=11 // pred_region
        _
      $region20: #{downsample_pallas.3} parent=11 // pred_fallthru
        _
      // Predicated region
      $region21: #{downsample_pallas.3} parent=11 // pred_check
        %p445 = pneg %p375
      $region22: #{downsample_pallas.3} parent=11 // pred_check_branch
        %447 = sbr.rel (%p445) target = $region24
      $region23: #{downsample_pallas.3} parent=11 // pred_region
        _
      $region24: #{downsample_pallas.3} parent=11 // pred_fallthru
        _
      // Predicated region
      $region25: #{downsample_pallas.3} parent=11 // pred_check
        %p448 = pneg %p396
      $region26: #{downsample_pallas.3} parent=11 // pred_check_branch
        %450 = sbr.rel (%p448) target = $region28
      $region27: #{downsample_pallas.3} parent=11 // pred_region
        _
      $region28: #{downsample_pallas.3} parent=11 // pred_fallthru
        _
    $region12: #{downsample_pallas.3} parent=5 // pred_fallthru
      _
    %p451 = scmp.lt.s32.totalorder %s20, 2
    // Predicated region
    $region29: #{downsample_pallas.3} parent=5 // pred_check
      %p452 = pneg %p451
    $region30: #{downsample_pallas.3} parent=5 // pred_check_branch
      %454 = sbr.rel (%p452) target = $region32
    $region31: #{downsample_pallas.3} parent=5 // pred_region
      // Predicated region
      $region33: #{downsample_pallas.3} parent=31 // pred_check
        %p455 = pneg %p54
      $region34: #{downsample_pallas.3} parent=31 // pred_check_branch
        %457 = sbr.rel (%p455) target = $region36
      $region35: #{downsample_pallas.3} parent=31 // pred_region
        %s458 = smul.u32 8, %s28
        %p459 = scmp.lt.s32.totalorder %s27, 1
        %s460 = scalar_select %p459, %s27, 1
        %p461 = scmp.lt.s32.totalorder %s458, 7
        %s462 = scalar_select %p461, %s458, 7
        %s463 = smul.addr %s460, 8
        %s464 = sadd.s32 %s462, %s463
        %s465 = smul.addr %s464, 4
        %s466 = scalar_lea.vmem %s0, %s465
        %s467 = smul.u32 8, %s28
      $region36: #{downsample_pallas.3} parent=31 // pred_fallthru
        _
      // Predicated region
      $region37: #{downsample_pallas.3} parent=31 // pred_check
        %p468 = pneg %p82
      $region38: #{downsample_pallas.3} parent=31 // pred_check_branch
        %470 = sbr.rel (%p468) target = $region40
      $region39: #{downsample_pallas.3} parent=31 // pred_region
        %s471 = smul.u32 8, %s28
        %p472 = scmp.lt.s32.totalorder %s27, 1
        %s473 = scalar_select %p472, %s27, 1
        %p474 = scmp.lt.s32.totalorder %s471, 7
        %s475 = scalar_select %p474, %s471, 7
        %s476 = smul.addr %s473, 8
        %s477 = sadd.s32 %s475, %s476
        %s478 = smul.addr %s477, 4
        %s479 = scalar_lea.vmem %s1, %s478
        %s480 = smul.u32 8, %s28
      $region40: #{downsample_pallas.3} parent=31 // pred_fallthru
        _
      // Predicated region
      $region41: #{downsample_pallas.3} parent=31 // pred_check
        %p481 = pneg %p110
      $region42: #{downsample_pallas.3} parent=31 // pred_check_branch
        %483 = sbr.rel (%p481) target = $region44
      $region43: #{downsample_pallas.3} parent=31 // pred_region
        %s484 = smul.u32 8, %s28
        %p485 = scmp.lt.s32.totalorder %s27, 1
        %s486 = scalar_select %p485, %s27, 1
        %p487 = scmp.lt.s32.totalorder %s484, 7
        %s488 = scalar_select %p487, %s484, 7
        %s489 = smul.addr %s486, 8
        %s490 = sadd.s32 %s488, %s489
        %s491 = smul.addr %s490, 4
        %s492 = scalar_lea.vmem %s2, %s491
        %s493 = smul.u32 8, %s28
      $region44: #{downsample_pallas.3} parent=31 // pred_fallthru
        _
      // Predicated region
      $region45: #{downsample_pallas.3} parent=31 // pred_check
        %p494 = pneg %p138
      $region46: #{downsample_pallas.3} parent=31 // pred_check_branch
        %496 = sbr.rel (%p494) target = $region48
      $region47: #{downsample_pallas.3} parent=31 // pred_region
        %s497 = smul.u32 8, %s28
        %p498 = scmp.lt.s32.totalorder %s27, 1
        %s499 = scalar_select %p498, %s27, 1
        %p500 = scmp.lt.s32.totalorder %s497, 7
        %s501 = scalar_select %p500, %s497, 7
        %s502 = smul.addr %s499, 8
        %s503 = sadd.s32 %s501, %s502
        %s504 = smul.addr %s503, 4
        %s505 = scalar_lea.vmem %s3, %s504
        %s506 = smul.u32 8, %s28
      $region48: #{downsample_pallas.3} parent=31 // pred_fallthru
        _
      // Predicated region
      $region49: #{downsample_pallas.3} parent=31 // pred_check
        %p507 = pneg %p166
      $region50: #{downsample_pallas.3} parent=31 // pred_check_branch
        %509 = sbr.rel (%p507) target = $region52
      $region51: #{downsample_pallas.3} parent=31 // pred_region
        %s510 = smul.u32 8, %s28
        %p511 = scmp.lt.s32.totalorder %s27, 1
        %s512 = scalar_select %p511, %s27, 1
        %p513 = scmp.lt.s32.totalorder %s510, 7
        %s514 = scalar_select %p513, %s510, 7
        %s515 = smul.addr %s514, 2
        %s516 = smul.addr %s512, 16
        %s517 = sadd.s32 %s515, %s516
        %s518 = smul.addr %s517, 4
        %s519 = scalar_lea.vmem %s4, %s518
        %s520 = smul.u32 8, %s28
      $region52: #{downsample_pallas.3} parent=31 // pred_fallthru
        _
      // Predicated region
      $region53: #{downsample_pallas.3} parent=31 // pred_check
        %p521 = pneg %p194
      $region54: #{downsample_pallas.3} parent=31 // pred_check_branch
        %523 = sbr.rel (%p521) target = $region56
      $region55: #{downsample_pallas.3} parent=31 // pred_region
        %s524 = smul.u32 8, %s28
        %p525 = scmp.lt.s32.totalorder %s27, 1
        %s526 = scalar_select %p525, %s27, 1
        %p527 = scmp.lt.s32.totalorder %s524, 7
        %s528 = scalar_select %p527, %s524, 7
        %s529 = smul.addr %s528, 2
        %s530 = smul.addr %s526, 16
        %s531 = sadd.s32 %s529, %s530
        %s532 = smul.addr %s531, 4
        %s533 = scalar_lea.vmem %s5, %s532
        %s534 = smul.u32 8, %s28
      $region56: #{downsample_pallas.3} parent=31 // pred_fallthru
        _
      // Predicated region
      $region57: #{downsample_pallas.3} parent=31 // pred_check
        %p535 = pneg %p222
      $region58: #{downsample_pallas.3} parent=31 // pred_check_branch
        %537 = sbr.rel (%p535) target = $region60
      $region59: #{downsample_pallas.3} parent=31 // pred_region
        %s538 = smul.u32 8, %s28
        %p539 = scmp.lt.s32.totalorder %s27, 1
        %s540 = scalar_select %p539, %s27, 1
        %p541 = scmp.lt.s32.totalorder %s538, 7
        %s542 = scalar_select %p541, %s538, 7
        %s543 = smul.addr %s542, 2
        %s544 = smul.addr %s540, 16
        %s545 = sadd.s32 %s543, %s544
        %s546 = smul.addr %s545, 4
        %s547 = scalar_lea.vmem %s6, %s546
        %s548 = smul.u32 8, %s28
      $region60: #{downsample_pallas.3} parent=31 // pred_fallthru
        _
      // Predicated region
      $region61: #{downsample_pallas.3} parent=31 // pred_check
        %p549 = pneg %p250
      $region62: #{downsample_pallas.3} parent=31 // pred_check_branch
        %551 = sbr.rel (%p549) target = $region64
      $region63: #{downsample_pallas.3} parent=31 // pred_region
        %s552 = smul.u32 8, %s28
        %p553 = scmp.lt.s32.totalorder %s27, 1
        %s554 = scalar_select %p553, %s27, 1
        %p555 = scmp.lt.s32.totalorder %s552, 7
        %s556 = scalar_select %p555, %s552, 7
        %s557 = smul.addr %s556, 2
        %s558 = smul.addr %s554, 16
        %s559 = sadd.s32 %s557, %s558
        %s560 = smul.addr %s559, 4
        %s561 = scalar_lea.vmem %s7, %s560
        %s562 = smul.u32 8, %s28
      $region64: #{downsample_pallas.3} parent=31 // pred_fallthru
        _
      // Predicated region
      $region65: #{downsample_pallas.3} parent=31 // pred_check
        %p563 = pneg %p278
      $region66: #{downsample_pallas.3} parent=31 // pred_check_branch
        %565 = sbr.rel (%p563) target = $region68
      $region67: #{downsample_pallas.3} parent=31 // pred_region
        %s566 = smul.u32 8, %s28
        %p567 = scmp.lt.s32.totalorder %s27, 1
        %s568 = scalar_select %p567, %s27, 1
        %p569 = scmp.lt.s32.totalorder %s566, 7
        %s570 = scalar_select %p569, %s566, 7
        %s571 = smul.addr %s570, 2
        %s572 = smul.addr %s568, 16
        %s573 = sadd.s32 %s571, %s572
        %s574 = smul.addr %s573, 4
        %s575 = scalar_lea.vmem %s8, %s574
        %s576 = smul.u32 8, %s28
      $region68: #{downsample_pallas.3} parent=31 // pred_fallthru
        _
      // Predicated region
      $region69: #{downsample_pallas.3} parent=31 // pred_check
        %p577 = pneg %p306
      $region70: #{downsample_pallas.3} parent=31 // pred_check_branch
        %579 = sbr.rel (%p577) target = $region72
      $region71: #{downsample_pallas.3} parent=31 // pred_region
        %s580 = smul.u32 8, %s28
        %p581 = scmp.lt.s32.totalorder %s27, 1
        %s582 = scalar_select %p581, %s27, 1
        %p583 = scmp.lt.s32.totalorder %s580, 7
        %s584 = scalar_select %p583, %s580, 7
        %s585 = smul.addr %s584, 2
        %s586 = smul.addr %s582, 16
        %s587 = sadd.s32 %s585, %s586
        %s588 = smul.addr %s587, 4
        %s589 = scalar_lea.vmem %s9, %s588
        %s590 = smul.u32 8, %s28
      $region72: #{downsample_pallas.3} parent=31 // pred_fallthru
        _
    $region32: #{downsample_pallas.3} parent=5 // pred_fallthru
      _
    %p591 = scmp.le.s32.totalorder 1, %s20
    %p592 = scmp.lt.s32.totalorder %s20, 3
    %p593 = pnand %p591, %p592
    %p594 = pneg %p593
    // Predicated region
    $region73: #{downsample_pallas.3} parent=5 // pred_check
      _
    $region74: #{downsample_pallas.3} parent=5 // pred_check_branch
      %596 = sbr.rel (%p593) target = $region76
    $region75: #{downsample_pallas.3} parent=5 // pred_region
      %s597 = ssub.s32 %s20, 1
      %s598 = smul.u32 8, %s30
      %p599 = scmp.lt.s32.totalorder %s29, 1
      %s600 = scalar_select %p599, %s29, 1
      %p601 = scmp.lt.s32.totalorder %s598, 7
      %s602 = scalar_select %p601, %s598, 7
      %s603 = smul.addr %s600, 8
      %s604 = sadd.s32 %s602, %s603
      %s605 = smul.addr %s604, 4
      %s606 = scalar_lea.vmem %s0, %s605
      %p607 = pneg %p60
      %p608 = pneg %p57
      %s609 = smul.u32 8, %s30
      %p610 = scmp.lt.s32.totalorder %s29, 1
      %s611 = scalar_select %p610, %s29, 1
      %p612 = scmp.lt.s32.totalorder %s609, 7
      %s613 = scalar_select %p612, %s609, 7
      %s614 = smul.addr %s611, 8
      %s615 = sadd.s32 %s613, %s614
      %s616 = smul.addr %s615, 4
      %s617 = scalar_lea.vmem %s1, %s616
      %p618 = pneg %p88
      %p619 = pneg %p85
      %s620 = smul.u32 8, %s30
      %p621 = scmp.lt.s32.totalorder %s29, 1
      %s622 = scalar_select %p621, %s29, 1
      %p623 = scmp.lt.s32.totalorder %s620, 7
      %s624 = scalar_select %p623, %s620, 7
      %s625 = smul.addr %s622, 8
      %s626 = sadd.s32 %s624, %s625
      %s627 = smul.addr %s626, 4
      %s628 = scalar_lea.vmem %s2, %s627
      %p629 = pneg %p116
      %p630 = pneg %p113
      %s631 = smul.u32 8, %s30
      %p632 = scmp.lt.s32.totalorder %s29, 1
      %s633 = scalar_select %p632, %s29, 1
      %p634 = scmp.lt.s32.totalorder %s631, 7
      %s635 = scalar_select %p634, %s631, 7
      %s636 = smul.addr %s633, 8
      %s637 = sadd.s32 %s635, %s636
      %s638 = smul.addr %s637, 4
      %s639 = scalar_lea.vmem %s3, %s638
      %p640 = pneg %p144
      %p641 = pneg %p141
      %s642 = smul.u32 8, %s30
      %p643 = scmp.lt.s32.totalorder %s29, 1
      %s644 = scalar_select %p643, %s29, 1
      %p645 = scmp.lt.s32.totalorder %s642, 7
      %s646 = scalar_select %p645, %s642, 7
      %s647 = smul.addr %s646, 2
      %s648 = smul.addr %s644, 16
      %s649 = sadd.s32 %s647, %s648
      %s650 = smul.addr %s649, 4
      %s651 = scalar_lea.vmem %s4, %s650
      %p652 = pneg %p172
      %p653 = pneg %p169
      %s654 = smul.u32 8, %s30
      %p655 = scmp.lt.s32.totalorder %s29, 1
      %s656 = scalar_select %p655, %s29, 1
      %p657 = scmp.lt.s32.totalorder %s654, 7
      %s658 = scalar_select %p657, %s654, 7
      %s659 = smul.addr %s658, 2
      %s660 = smul.addr %s656, 16
      %s661 = sadd.s32 %s659, %s660
      %s662 = smul.addr %s661, 4
      %s663 = scalar_lea.vmem %s5, %s662
      %p664 = pneg %p200
      %p665 = pneg %p197
      %s666 = smul.u32 8, %s30
      %p667 = scmp.lt.s32.totalorder %s29, 1
      %s668 = scalar_select %p667, %s29, 1
      %p669 = scmp.lt.s32.totalorder %s666, 7
      %s670 = scalar_select %p669, %s666, 7
      %s671 = smul.addr %s670, 2
      %s672 = smul.addr %s668, 16
      %s673 = sadd.s32 %s671, %s672
      %s674 = smul.addr %s673, 4
      %s675 = scalar_lea.vmem %s6, %s674
      %p676 = pneg %p228
      %p677 = pneg %p225
      %s678 = smul.u32 8, %s30
      %p679 = scmp.lt.s32.totalorder %s29, 1
      %s680 = scalar_select %p679, %s29, 1
      %p681 = scmp.lt.s32.totalorder %s678, 7
      %s682 = scalar_select %p681, %s678, 7
      %s683 = smul.addr %s682, 2
      %s684 = smul.addr %s680, 16
      %s685 = sadd.s32 %s683, %s684
      %s686 = smul.addr %s685, 4
      %s687 = scalar_lea.vmem %s7, %s686
      %p688 = pneg %p256
      %p689 = pneg %p253
      %s690 = smul.u32 8, %s30
      %p691 = scmp.lt.s32.totalorder %s29, 1
      %s692 = scalar_select %p691, %s29, 1
      %p693 = scmp.lt.s32.totalorder %s690, 7
      %s694 = scalar_select %p693, %s690, 7
      %s695 = smul.addr %s694, 2
      %s696 = smul.addr %s692, 16
      %s697 = sadd.s32 %s695, %s696
      %s698 = smul.addr %s697, 4
      %s699 = scalar_lea.vmem %s8, %s698
      %p700 = pneg %p284
      %p701 = pneg %p281
      %s702 = smul.u32 8, %s30
      %p703 = scmp.lt.s32.totalorder %s29, 1
      %s704 = scalar_select %p703, %s29, 1
      %p705 = scmp.lt.s32.totalorder %s702, 7
      %s706 = scalar_select %p705, %s702, 7
      %s707 = smul.addr %s706, 2
      %s708 = smul.addr %s704, 16
      %s709 = sadd.s32 %s707, %s708
      %s710 = smul.addr %s709, 4
      %s711 = scalar_lea.vmem %s9, %s710
      %p712 = pneg %p312
      %p713 = pneg %p309
      %p714 = pneg %p333
      %p715 = pneg %p330
      %p716 = pneg %p354
      %p717 = pneg %p351
      %p718 = pneg %p375
      %p719 = pneg %p372
      %p720 = pneg %p396
      %p721 = pneg %p393
      %p722 = pneg %p424
      %p723 = pneg %p421
      %s724 = smul.u32 8, %s30
      %p725 = scmp.lt.s32.totalorder %s29, 1
      %s726 = scalar_select %p725, %s29, 1
      %p727 = scmp.lt.s32.totalorder %s724, 7
      %s728 = scalar_select %p727, %s724, 7
      %s729 = smul.addr %s726, 8
      %s730 = sadd.s32 %s728, %s729
      %s731 = smul.addr %s730, 8
      %s732 = scalar_lea.vmem %s14, %s731
      %s733 = smul.u32 8, %s30
      %p734 = scmp.lt.s32.totalorder %s29, 1
      %s735 = scalar_select %p734, %s29, 1
      %p736 = scmp.lt.s32.totalorder %s733, 7
      %s737 = scalar_select %p736, %s733, 7
      %s738 = smul.addr %s735, 8
      %s739 = sadd.s32 %s737, %s738
      %s740 = smul.addr %s739, 4
      %s741 = scalar_lea.vmem %s0, %s740
      %s742 = smul.u32 8, %s30
      %s743 = smul.u32 8, %s30
      %p744 = scmp.lt.s32.totalorder %s29, 1
      %s745 = scalar_select %p744, %s29, 1
      %p746 = scmp.lt.s32.totalorder %s743, 7
      %s747 = scalar_select %p746, %s743, 7
      %s748 = smul.addr %s745, 8
      %s749 = sadd.s32 %s747, %s748
      %s750 = smul.addr %s749, 4
      %s751 = scalar_lea.vmem %s1, %s750
      %s752 = smul.u32 8, %s30
      %s753 = smul.u32 8, %s30
      %p754 = scmp.lt.s32.totalorder %s29, 1
      %s755 = scalar_select %p754, %s29, 1
      %p756 = scmp.lt.s32.totalorder %s753, 7
      %s757 = scalar_select %p756, %s753, 7
      %s758 = smul.addr %s755, 8
      %s759 = sadd.s32 %s757, %s758
      %s760 = smul.addr %s759, 4
      %s761 = scalar_lea.vmem %s2, %s760
      %s762 = smul.u32 8, %s30
      %s763 = smul.u32 8, %s30
      %p764 = scmp.lt.s32.totalorder %s29, 1
      %s765 = scalar_select %p764, %s29, 1
      %p766 = scmp.lt.s32.totalorder %s763, 7
      %s767 = scalar_select %p766, %s763, 7
      %s768 = smul.addr %s765, 8
      %s769 = sadd.s32 %s767, %s768
      %s770 = smul.addr %s769, 4
      %s771 = scalar_lea.vmem %s3, %s770
      %s772 = smul.u32 8, %s30
      %s773 = smul.u32 8, %s30
      %p774 = scmp.lt.s32.totalorder %s29, 1
      %s775 = scalar_select %p774, %s29, 1
      %p776 = scmp.lt.s32.totalorder %s773, 7
      %s777 = scalar_select %p776, %s773, 7
      %s778 = smul.addr %s777, 2
      %s779 = smul.addr %s775, 16
      %s780 = sadd.s32 %s778, %s779
      %s781 = smul.addr %s780, 4
      %s782 = scalar_lea.vmem %s4, %s781
      %s783 = smul.u32 8, %s30
      %s784 = smul.u32 8, %s30
      %p785 = scmp.lt.s32.totalorder %s29, 1
      %s786 = scalar_select %p785, %s29, 1
      %p787 = scmp.lt.s32.totalorder %s784, 7
      %s788 = scalar_select %p787, %s784, 7
      %s789 = smul.addr %s788, 2
      %s790 = smul.addr %s786, 16
      %s791 = sadd.s32 %s789, %s790
      %s792 = smul.addr %s791, 4
      %s793 = scalar_lea.vmem %s5, %s792
      %s794 = smul.u32 8, %s30
      %s795 = smul.u32 8, %s30
      %p796 = scmp.lt.s32.totalorder %s29, 1
      %s797 = scalar_select %p796, %s29, 1
      %p798 = scmp.lt.s32.totalorder %s795, 7
      %s799 = scalar_select %p798, %s795, 7
      %s800 = smul.addr %s799, 2
      %s801 = smul.addr %s797, 16
      %s802 = sadd.s32 %s800, %s801
      %s803 = smul.addr %s802, 4
      %s804 = scalar_lea.vmem %s6, %s803
      %s805 = smul.u32 8, %s30
      %s806 = smul.u32 8, %s30
      %p807 = scmp.lt.s32.totalorder %s29, 1
      %s808 = scalar_select %p807, %s29, 1
      %p809 = scmp.lt.s32.totalorder %s806, 7
      %s810 = scalar_select %p809, %s806, 7
      %s811 = smul.addr %s810, 2
      %s812 = smul.addr %s808, 16
      %s813 = sadd.s32 %s811, %s812
      %s814 = smul.addr %s813, 4
      %s815 = scalar_lea.vmem %s7, %s814
      %s816 = smul.u32 8, %s30
      %s817 = smul.u32 8, %s30
      %p818 = scmp.lt.s32.totalorder %s29, 1
      %s819 = scalar_select %p818, %s29, 1
      %p820 = scmp.lt.s32.totalorder %s817, 7
      %s821 = scalar_select %p820, %s817, 7
      %s822 = smul.addr %s821, 2
      %s823 = smul.addr %s819, 16
      %s824 = sadd.s32 %s822, %s823
      %s825 = smul.addr %s824, 4
      %s826 = scalar_lea.vmem %s8, %s825
      %s827 = smul.u32 8, %s30
      %s828 = smul.u32 8, %s30
      %p829 = scmp.lt.s32.totalorder %s29, 1
      %s830 = scalar_select %p829, %s29, 1
      %p831 = scmp.lt.s32.totalorder %s828, 7
      %s832 = scalar_select %p831, %s828, 7
      %s833 = smul.addr %s832, 2
      %s834 = smul.addr %s830, 16
      %s835 = sadd.s32 %s833, %s834
      %s836 = smul.addr %s835, 4
      %s837 = scalar_lea.vmem %s9, %s836
      %s838 = smul.u32 8, %s30
      %s839 = smul.u32 8, %s30
      %p840 = scmp.lt.s32.totalorder %s29, 1
      %s841 = scalar_select %p840, %s29, 1
      %p842 = scmp.lt.s32.totalorder %s839, 7
      %s843 = scalar_select %p842, %s839, 7
      %s844 = smul.addr %s841, 8
      %s845 = sadd.s32 %s843, %s844
      %s846 = smul.addr %s845, 8
      %s847 = scalar_lea.vmem %s14, %s846
      %s848 = smul.u32 8, %s30
      %v850 = vld [vmem:[%s741] sm:$0xf]
      %v851 = vld [vmem:[%s741 + $0x4] sm:$0xf]
      %v852 = vld [vmem:[%s741 + $0x8] sm:$0xf]
      %v853 = vld [vmem:[%s741 + $0xc] sm:$0xf]
      %v854 = vld [vmem:[%s741 + $0x10] sm:$0xf]
      %v855 = vld [vmem:[%s741 + $0x14] sm:$0xf]
      %v856 = vld [vmem:[%s741 + $0x18] sm:$0xf]
      %v857 = vld [vmem:[%s741 + $0x1c] sm:$0xf]
      %v858 = vld [vmem:[%s751] sm:$0xf]
      %v859 = vld [vmem:[%s751 + $0x4] sm:$0xf]
      %v860 = vld [vmem:[%s751 + $0x8] sm:$0xf]
      %v861 = vld [vmem:[%s751 + $0xc] sm:$0xf]
      %v862 = vld [vmem:[%s751 + $0x10] sm:$0xf]
      %v863 = vld [vmem:[%s751 + $0x14] sm:$0xf]
      %v864 = vld [vmem:[%s751 + $0x18] sm:$0xf]
      %v865 = vld [vmem:[%s751 + $0x1c] sm:$0xf]
      %v866 = vunpack.c.l.bf16 %v850
      %v867 = vunpack.c.l.bf16 %v851
      %v868 = vunpack.c.l.bf16 %v852
      %v869 = vunpack.c.l.bf16 %v853
      %v870 = vunpack.c.l.bf16 %v854
      %v871 = vunpack.c.l.bf16 %v855
      %v872 = vunpack.c.l.bf16 %v856
      %v873 = vunpack.c.l.bf16 %v857
      %v874 = vunpack.c.l.bf16 %v858
      %v875 = vunpack.c.l.bf16 %v859
      %v876 = vunpack.c.l.bf16 %v860
      %v877 = vunpack.c.l.bf16 %v861
      %v878 = vunpack.c.l.bf16 %v862
      %v879 = vunpack.c.l.bf16 %v863
      %v880 = vunpack.c.l.bf16 %v864
      %v881 = vunpack.c.l.bf16 %v865
      %v882 = vmax.f32 %v866, %v874
      %v883 = vmax.f32 %v867, %v875
      %v884 = vmax.f32 %v868, %v876
      %v885 = vmax.f32 %v869, %v877
      %v886 = vmax.f32 %v870, %v878
      %v887 = vmax.f32 %v871, %v879
      %v888 = vmax.f32 %v872, %v880
      %v889 = vmax.f32 %v873, %v881
      %v890 = vpack.c.bf16 %v882, %v882
      %v891 = vpack.c.bf16 %v883, %v883
      %v892 = vpack.c.bf16 %v884, %v884
      %v893 = vpack.c.bf16 %v885, %v885
      %v894 = vpack.c.bf16 %v886, %v886
      %v895 = vpack.c.bf16 %v887, %v887
      %v896 = vpack.c.bf16 %v888, %v888
      %v897 = vpack.c.bf16 %v889, %v889
      %v898 = vld [vmem:[%s761] sm:$0xf]
      %v899 = vld [vmem:[%s761 + $0x4] sm:$0xf]
      %v900 = vld [vmem:[%s761 + $0x8] sm:$0xf]
      %v901 = vld [vmem:[%s761 + $0xc] sm:$0xf]
      %v902 = vld [vmem:[%s761 + $0x10] sm:$0xf]
      %v903 = vld [vmem:[%s761 + $0x14] sm:$0xf]
      %v904 = vld [vmem:[%s761 + $0x18] sm:$0xf]
      %v905 = vld [vmem:[%s761 + $0x1c] sm:$0xf]
      %v906 = vld [vmem:[%s771] sm:$0xf]
      %v907 = vld [vmem:[%s771 + $0x4] sm:$0xf]
      %v908 = vld [vmem:[%s771 + $0x8] sm:$0xf]
      %v909 = vld [vmem:[%s771 + $0xc] sm:$0xf]
      %v910 = vld [vmem:[%s771 + $0x10] sm:$0xf]
      %v911 = vld [vmem:[%s771 + $0x14] sm:$0xf]
      %v912 = vld [vmem:[%s771 + $0x18] sm:$0xf]
      %v913 = vld [vmem:[%s771 + $0x1c] sm:$0xf]
      %v914 = vunpack.c.l.bf16 %v898
      %v915 = vunpack.c.l.bf16 %v899
      %v916 = vunpack.c.l.bf16 %v900
      %v917 = vunpack.c.l.bf16 %v901
      %v918 = vunpack.c.l.bf16 %v902
      %v919 = vunpack.c.l.bf16 %v903
      %v920 = vunpack.c.l.bf16 %v904
      %v921 = vunpack.c.l.bf16 %v905
      %v922 = vunpack.c.l.bf16 %v906
      %v923 = vunpack.c.l.bf16 %v907
      %v924 = vunpack.c.l.bf16 %v908
      %v925 = vunpack.c.l.bf16 %v909
      %v926 = vunpack.c.l.bf16 %v910
      %v927 = vunpack.c.l.bf16 %v911
      %v928 = vunpack.c.l.bf16 %v912
      %v929 = vunpack.c.l.bf16 %v913
      %v930 = vmax.f32 %v914, %v922
      %v931 = vmax.f32 %v915, %v923
      %v932 = vmax.f32 %v916, %v924
      %v933 = vmax.f32 %v917, %v925
      %v934 = vmax.f32 %v918, %v926
      %v935 = vmax.f32 %v919, %v927
      %v936 = vmax.f32 %v920, %v928
      %v937 = vmax.f32 %v921, %v929
      %v938 = vpack.c.bf16 %v930, %v930
      %v939 = vpack.c.bf16 %v931, %v931
      %v940 = vpack.c.bf16 %v932, %v932
      %v941 = vpack.c.bf16 %v933, %v933
      %v942 = vpack.c.bf16 %v934, %v934
      %v943 = vpack.c.bf16 %v935, %v935
      %v944 = vpack.c.bf16 %v936, %v936
      %v945 = vpack.c.bf16 %v937, %v937
      %v946 = vunpack.c.l.bf16 %v890
      %v947 = vunpack.c.l.bf16 %v891
      %v948 = vunpack.c.l.bf16 %v892
      %v949 = vunpack.c.l.bf16 %v893
      %v950 = vunpack.c.l.bf16 %v894
      %v951 = vunpack.c.l.bf16 %v895
      %v952 = vunpack.c.l.bf16 %v896
      %v953 = vunpack.c.l.bf16 %v897
      %v954 = vunpack.c.l.bf16 %v938
      %v955 = vunpack.c.l.bf16 %v939
      %v956 = vunpack.c.l.bf16 %v940
      %v957 = vunpack.c.l.bf16 %v941
      %v958 = vunpack.c.l.bf16 %v942
      %v959 = vunpack.c.l.bf16 %v943
      %v960 = vunpack.c.l.bf16 %v944
      %v961 = vunpack.c.l.bf16 %v945
      %v962 = vmax.f32 %v946, %v954
      %v963 = vmax.f32 %v947, %v955
      %v964 = vmax.f32 %v948, %v956
      %v965 = vmax.f32 %v949, %v957
      %v966 = vmax.f32 %v950, %v958
      %v967 = vmax.f32 %v951, %v959
      %v968 = vmax.f32 %v952, %v960
      %v969 = vmax.f32 %v953, %v961
      %v970 = vpack.c.bf16 %v963, %v962
      %v971 = vpack.c.bf16 %v965, %v964
      %v972 = vpack.c.bf16 %v967, %v966
      %v973 = vpack.c.bf16 %v969, %v968
      %v974 = vld [vmem:[%s10] sm:$0x3]
      %v975 = vld [vmem:[%s12] sm:$0x1]
      %v977 = vperm.slane %v975, 0
      %vm979 = vcmask 31744
      %v981 = vsel %vm979, %v970, 0
      %v984 = vsel %vm979, %v971, 0
      %v987 = vsel %vm979, %v972, 0
      %v990 = vsel %vm979, %v973, 0
      %vm992 = vcmask 1041408
      %v994 = vsel %vm992, %v974, 0
      %996 = vmatpush.bf16.msra.mxu0 0
      %997 = vmatpush.bf16.msra.mxu0 0
      %998 = vmatpush.bf16.msra.mxu0 0
      %999 = vmatpush.bf16.msra.mxu0 0
      %1000 = vmatpush.bf16.msra.mxu0 0
      %1001 = vmatpush.bf16.msra.mxu0 0
      %1002 = vmatpush.bf16.msra.mxu0 0
      %1003 = vmatpush.bf16.msra.mxu0 %v994
      %1004 = vmatmul.bf16.gmra.mxu0 %v981
      %v1005 = vpop.f32.mrf.mxu0
      %v1006 = vadd.f32 %v977, %v1005
      %v1007 = vpop.f32.mrf.mxu0
      %v1008 = vadd.f32 %v977, %v1007
      %1009 = vmatmul.bf16.gmra.mxu0 %v984
      %v1010 = vpop.f32.mrf.mxu0
      %v1011 = vadd.f32 %v977, %v1010
      %v1012 = vpop.f32.mrf.mxu0
      %v1013 = vadd.f32 %v977, %v1012
      %1014 = vmatmul.bf16.gmra.mxu0 %v987
      %v1015 = vpop.f32.mrf.mxu0
      %v1016 = vadd.f32 %v977, %v1015
      %v1017 = vpop.f32.mrf.mxu0
      %v1018 = vadd.f32 %v977, %v1017
      %1019 = vmatmul.bf16.gmra.mxu0 %v990
      %v1020 = vpop.f32.mrf.mxu0
      %v1021 = vadd.f32 %v977, %v1020
      %v1022 = vpop.f32.mrf.mxu0
      %v1023 = vadd.f32 %v977, %v1022
      %1024 = vdwg.mxu0
      %v1025 = vxor.u32 %v1006, 2147483648
      %v1026 = vxor.u32 %v1008, 2147483648
      %v1027 = vxor.u32 %v1011, 2147483648
      %v1028 = vxor.u32 %v1013, 2147483648
      %v1029 = vxor.u32 %v1016, 2147483648
      %v1030 = vxor.u32 %v1018, 2147483648
      %v1031 = vxor.u32 %v1021, 2147483648
      %v1032 = vxor.u32 %v1023, 2147483648
      %v1033 = vmul.f32 %v1025, 1.442695
      %v1034 = vpow.pop %v1033
      %v1035 = vmul.f32 %v1026, 1.442695
      %v1036 = vpow.pop %v1035
      %v1037 = vmul.f32 %v1027, 1.442695
      %v1038 = vpow.pop %v1037
      %v1039 = vmul.f32 %v1028, 1.442695
      %v1040 = vpow.pop %v1039
      %v1041 = vmul.f32 %v1029, 1.442695
      %v1042 = vpow.pop %v1041
      %v1043 = vmul.f32 %v1030, 1.442695
      %v1044 = vpow.pop %v1043
      %v1045 = vmul.f32 %v1031, 1.442695
      %v1046 = vpow.pop %v1045
      %v1047 = vmul.f32 %v1032, 1.442695
      %v1048 = vpow.pop %v1047
      %v1049 = vadd.f32 %v1034, 1.0
      %v1050 = vadd.f32 %v1036, 1.0
      %v1051 = vadd.f32 %v1038, 1.0
      %v1052 = vadd.f32 %v1040, 1.0
      %v1053 = vadd.f32 %v1042, 1.0
      %v1054 = vadd.f32 %v1044, 1.0
      %v1055 = vadd.f32 %v1046, 1.0
      %v1056 = vadd.f32 %v1048, 1.0
      %v1057 = vrcp.pop %v1049
      %v1058 = vmul.f32 %v1049, %v1057
      %v1059 = vsub.f32 1.0, %v1058
      %v1060 = vmul.f32 %v1057, %v1059
      %v1061 = vadd.f32 %v1057, %v1060
      %vm1062 = vweird.f32 %v1049
      %vm1063 = vweird.f32 %v1057
      %vm1064 = vmor %vm1062, %vm1063
      %v1065 = vsel %vm1064, %v1057, %v1061
      %v1066 = vand.u32 2147483647, %v1049
      %vm1067 = vcmp.eq.f32.partialorder %v1066, 8.507059e+37
      %v1068 = vand.u32 %v1049, 2147483648
      %v1069 = vor.u32 1.1754944e-38, %v1068
      %v1070 = vsel %vm1067, %v1069, %v1065
      %v1071 = vmul.f32 1.0, %v1070
      %v1072 = vrcp.pop %v1050
      %v1073 = vmul.f32 %v1050, %v1072
      %v1074 = vsub.f32 1.0, %v1073
      %v1075 = vmul.f32 %v1072, %v1074
      %v1076 = vadd.f32 %v1072, %v1075
      %vm1077 = vweird.f32 %v1050
      %vm1078 = vweird.f32 %v1072
      %vm1079 = vmor %vm1077, %vm1078
      %v1080 = vsel %vm1079, %v1072, %v1076
      %v1081 = vand.u32 2147483647, %v1050
      %vm1082 = vcmp.eq.f32.partialorder %v1081, 8.507059e+37
      %v1083 = vand.u32 %v1050, 2147483648
      %v1084 = vor.u32 1.1754944e-38, %v1083
      %v1085 = vsel %vm1082, %v1084, %v1080
      %v1086 = vmul.f32 1.0, %v1085
      %v1087 = vrcp.pop %v1051
      %v1088 = vmul.f32 %v1051, %v1087
      %v1089 = vsub.f32 1.0, %v1088
      %v1090 = vmul.f32 %v1087, %v1089
      %v1091 = vadd.f32 %v1087, %v1090
      %vm1092 = vweird.f32 %v1051
      %vm1093 = vweird.f32 %v1087
      %vm1094 = vmor %vm1092, %vm1093
      %v1095 = vsel %vm1094, %v1087, %v1091
      %v1096 = vand.u32 2147483647, %v1051
      %vm1097 = vcmp.eq.f32.partialorder %v1096, 8.507059e+37
      %v1098 = vand.u32 %v1051, 2147483648
      %v1099 = vor.u32 1.1754944e-38, %v1098
      %v1100 = vsel %vm1097, %v1099, %v1095
      %v1101 = vmul.f32 1.0, %v1100
      %v1102 = vrcp.pop %v1052
      %v1103 = vmul.f32 %v1052, %v1102
      %v1104 = vsub.f32 1.0, %v1103
      %v1105 = vmul.f32 %v1102, %v1104
      %v1106 = vadd.f32 %v1102, %v1105
      %vm1107 = vweird.f32 %v1052
      %vm1108 = vweird.f32 %v1102
      %vm1109 = vmor %vm1107, %vm1108
      %v1110 = vsel %vm1109, %v1102, %v1106
      %v1111 = vand.u32 2147483647, %v1052
      %vm1112 = vcmp.eq.f32.partialorder %v1111, 8.507059e+37
      %v1113 = vand.u32 %v1052, 2147483648
      %v1114 = vor.u32 1.1754944e-38, %v1113
      %v1115 = vsel %vm1112, %v1114, %v1110
      %v1116 = vmul.f32 1.0, %v1115
      %v1117 = vrcp.pop %v1053
      %v1118 = vmul.f32 %v1053, %v1117
      %v1119 = vsub.f32 1.0, %v1118
      %v1120 = vmul.f32 %v1117, %v1119
      %v1121 = vadd.f32 %v1117, %v1120
      %vm1122 = vweird.f32 %v1053
      %vm1123 = vweird.f32 %v1117
      %vm1124 = vmor %vm1122, %vm1123
      %v1125 = vsel %vm1124, %v1117, %v1121
      %v1126 = vand.u32 2147483647, %v1053
      %vm1127 = vcmp.eq.f32.partialorder %v1126, 8.507059e+37
      %v1128 = vand.u32 %v1053, 2147483648
      %v1129 = vor.u32 1.1754944e-38, %v1128
      %v1130 = vsel %vm1127, %v1129, %v1125
      %v1131 = vmul.f32 1.0, %v1130
      %v1132 = vrcp.pop %v1054
      %v1133 = vmul.f32 %v1054, %v1132
      %v1134 = vsub.f32 1.0, %v1133
      %v1135 = vmul.f32 %v1132, %v1134
      %v1136 = vadd.f32 %v1132, %v1135
      %vm1137 = vweird.f32 %v1054
      %vm1138 = vweird.f32 %v1132
      %vm1139 = vmor %vm1137, %vm1138
      %v1140 = vsel %vm1139, %v1132, %v1136
      %v1141 = vand.u32 2147483647, %v1054
      %vm1142 = vcmp.eq.f32.partialorder %v1141, 8.507059e+37
      %v1143 = vand.u32 %v1054, 2147483648
      %v1144 = vor.u32 1.1754944e-38, %v1143
      %v1145 = vsel %vm1142, %v1144, %v1140
      %v1146 = vmul.f32 1.0, %v1145
      %v1147 = vrcp.pop %v1055
      %v1148 = vmul.f32 %v1055, %v1147
      %v1149 = vsub.f32 1.0, %v1148
      %v1150 = vmul.f32 %v1147, %v1149
      %v1151 = vadd.f32 %v1147, %v1150
      %vm1152 = vweird.f32 %v1055
      %vm1153 = vweird.f32 %v1147
      %vm1154 = vmor %vm1152, %vm1153
      %v1155 = vsel %vm1154, %v1147, %v1151
      %v1156 = vand.u32 2147483647, %v1055
      %vm1157 = vcmp.eq.f32.partialorder %v1156, 8.507059e+37
      %v1158 = vand.u32 %v1055, 2147483648
      %v1159 = vor.u32 1.1754944e-38, %v1158
      %v1160 = vsel %vm1157, %v1159, %v1155
      %v1161 = vmul.f32 1.0, %v1160
      %v1162 = vrcp.pop %v1056
      %v1163 = vmul.f32 %v1056, %v1162
      %v1164 = vsub.f32 1.0, %v1163
      %v1165 = vmul.f32 %v1162, %v1164
      %v1166 = vadd.f32 %v1162, %v1165
      %vm1167 = vweird.f32 %v1056
      %vm1168 = vweird.f32 %v1162
      %vm1169 = vmor %vm1167, %vm1168
      %v1170 = vsel %vm1169, %v1162, %v1166
      %v1171 = vand.u32 2147483647, %v1056
      %vm1172 = vcmp.eq.f32.partialorder %v1171, 8.507059e+37
      %v1173 = vand.u32 %v1056, 2147483648
      %v1174 = vor.u32 1.1754944e-38, %v1173
      %v1175 = vsel %vm1172, %v1174, %v1170
      %v1176 = vmul.f32 1.0, %v1175
      %v1177 = vmul.f32 %v1006, %v1071
      %v1178 = vmul.f32 %v1008, %v1086
      %v1179 = vmul.f32 %v1011, %v1101
      %v1180 = vmul.f32 %v1013, %v1116
      %v1181 = vmul.f32 %v1016, %v1131
      %v1182 = vmul.f32 %v1018, %v1146
      %v1183 = vmul.f32 %v1021, %v1161
      %v1184 = vmul.f32 %v1023, %v1176
      %v1185 = vld [vmem:[%s782] sm:$0xf]
      %v1186 = vld [vmem:[%s782 + $0x4] sm:$0x1]
      %v1187 = vld [vmem:[%s782 + $0x8] sm:$0xf]
      %v1188 = vld [vmem:[%s782 + $0xc] sm:$0x1]
      %v1189 = vld [vmem:[%s782 + $0x10] sm:$0xf]
      %v1190 = vld [vmem:[%s782 + $0x14] sm:$0x1]
      %v1191 = vld [vmem:[%s782 + $0x18] sm:$0xf]
      %v1192 = vld [vmem:[%s782 + $0x1c] sm:$0x1]
      %v1193 = vld [vmem:[%s782 + $0x20] sm:$0xf]
      %v1194 = vld [vmem:[%s782 + $0x24] sm:$0x1]
      %v1195 = vld [vmem:[%s782 + $0x28] sm:$0xf]
      %v1196 = vld [vmem:[%s782 + $0x2c] sm:$0x1]
      %v1197 = vld [vmem:[%s782 + $0x30] sm:$0xf]
      %v1198 = vld [vmem:[%s782 + $0x34] sm:$0x1]
      %v1199 = vld [vmem:[%s782 + $0x38] sm:$0xf]
      %v1200 = vld [vmem:[%s782 + $0x3c] sm:$0x1]
      %v1201 = vld [vmem:[%s793] sm:$0xf]
      %v1202 = vld [vmem:[%s793 + $0x8] sm:$0xf]
      %v1203 = vld [vmem:[%s793 + $0x10] sm:$0xf]
      %v1204 = vld [vmem:[%s793 + $0x18] sm:$0xf]
      %v1205 = vld [vmem:[%s793 + $0x20] sm:$0xf]
      %v1206 = vld [vmem:[%s793 + $0x28] sm:$0xf]
      %v1207 = vld [vmem:[%s793 + $0x30] sm:$0xf]
      %v1208 = vld [vmem:[%s793 + $0x38] sm:$0xf]
      %v1209 = vld [vmem:[%s11] sm:$0x3]
      %s1210 = scalar_lea.vmem %s11, 2
      %v1211 = vld [vmem:[%s1210] sm:$0x3]
      %v1220 = vunpack.c.l.b16 %v1201
      %v1221 = vunpack.c.l.b16 %v1202
      %v1222 = vunpack.c.l.b16 %v1203
      %v1223 = vunpack.c.l.b16 %v1204
      %v1224 = vunpack.c.l.b16 %v1205
      %v1225 = vunpack.c.l.b16 %v1206
      %v1226 = vunpack.c.l.b16 %v1207
      %v1227 = vunpack.c.l.b16 %v1208
      %v1228 = vpack.c.b16 %v1221, %v1220
      %v1229 = vpack.c.b16 %v1223, %v1222
      %v1230 = vpack.c.b16 %v1225, %v1224
      %v1231 = vpack.c.b16 %v1227, %v1226
      %v1233 = vsel %vm979, %v1228, 0
      %v1236 = vsel %vm979, %v1229, 0
      %v1239 = vsel %vm979, %v1230, 0
      %v1242 = vsel %vm979, %v1231, 0
      %v1245 = vsel %vm992, %v1211, 0
      %1247 = vmatpush.bf16.msra.mxu0 0
      %1248 = vmatpush.bf16.msra.mxu0 0
      %1249 = vmatpush.bf16.msra.mxu0 0
      %1250 = vmatpush.bf16.msra.mxu0 0
      %1251 = vmatpush.bf16.msra.mxu0 0
      %1252 = vmatpush.bf16.msra.mxu0 0
      %1253 = vmatpush.bf16.msra.mxu0 0
      %1254 = vmatpush.bf16.msra.mxu0 %v1245
      %1255 = vmatmul.bf16.gmra.mxu0 %v1233
      %v1256 = vpop.f32.mrf.mxu0
      %v1257 = vadd.f32 0.0, %v1256
      %v1258 = vpop.f32.mrf.mxu0
      %v1259 = vadd.f32 0.0, %v1258
      %1260 = vmatmul.bf16.gmra.mxu0 %v1236
      %v1261 = vpop.f32.mrf.mxu0
      %v1262 = vadd.f32 0.0, %v1261
      %v1263 = vpop.f32.mrf.mxu0
      %v1264 = vadd.f32 0.0, %v1263
      %1265 = vmatmul.bf16.gmra.mxu0 %v1239
      %v1266 = vpop.f32.mrf.mxu0
      %v1267 = vadd.f32 0.0, %v1266
      %v1268 = vpop.f32.mrf.mxu0
      %v1269 = vadd.f32 0.0, %v1268
      %1270 = vmatmul.bf16.gmra.mxu0 %v1242
      %v1271 = vpop.f32.mrf.mxu0
      %v1272 = vadd.f32 0.0, %v1271
      %v1273 = vpop.f32.mrf.mxu0
      %v1274 = vadd.f32 0.0, %v1273
      %1275 = vdwg.mxu0
      %v1284 = vunpack.c.l.b16 %v1185
      %v1285 = vunpack.c.l.b16 %v1187
      %v1286 = vunpack.c.l.b16 %v1189
      %v1287 = vunpack.c.l.b16 %v1191
      %v1288 = vunpack.c.l.b16 %v1193
      %v1289 = vunpack.c.l.b16 %v1195
      %v1290 = vunpack.c.l.b16 %v1197
      %v1291 = vunpack.c.l.b16 %v1199
      %v1292 = vpack.c.b16 %v1285, %v1284
      %v1293 = vpack.c.b16 %v1287, %v1286
      %v1294 = vpack.c.b16 %v1289, %v1288
      %v1295 = vpack.c.b16 %v1291, %v1290
      %v1297 = vsel %vm979, %v1292, 0
      %v1300 = vsel %vm979, %v1293, 0
      %v1303 = vsel %vm979, %v1294, 0
      %v1306 = vsel %vm979, %v1295, 0
      %v1309 = vsel %vm992, %v1209, 0
      %1311 = vmatpush.bf16.msra.mxu0 0
      %1312 = vmatpush.bf16.msra.mxu0 0
      %1313 = vmatpush.bf16.msra.mxu0 0
      %1314 = vmatpush.bf16.msra.mxu0 0
      %1315 = vmatpush.bf16.msra.mxu0 0
      %1316 = vmatpush.bf16.msra.mxu0 0
      %1317 = vmatpush.bf16.msra.mxu0 0
      %1318 = vmatpush.bf16.msra.mxu0 %v1309
      %1319 = vmatmul.bf16.gmra.mxu0 %v1297
      %v1320 = vpop.f32.mrf.mxu0
      %v1321 = vadd.f32 %v1257, %v1320
      %v1322 = vpop.f32.mrf.mxu0
      %v1323 = vadd.f32 %v1259, %v1322
      %1324 = vmatmul.bf16.gmra.mxu0 %v1300
      %v1325 = vpop.f32.mrf.mxu0
      %v1326 = vadd.f32 %v1262, %v1325
      %v1327 = vpop.f32.mrf.mxu0
      %v1328 = vadd.f32 %v1264, %v1327
      %1329 = vmatmul.bf16.gmra.mxu0 %v1303
      %v1330 = vpop.f32.mrf.mxu0
      %v1331 = vadd.f32 %v1267, %v1330
      %v1332 = vpop.f32.mrf.mxu0
      %v1333 = vadd.f32 %v1269, %v1332
      %1334 = vmatmul.bf16.gmra.mxu0 %v1306
      %v1335 = vpop.f32.mrf.mxu0
      %v1336 = vadd.f32 %v1272, %v1335
      %v1337 = vpop.f32.mrf.mxu0
      %v1338 = vadd.f32 %v1274, %v1337
      %1339 = vdwg.mxu0
      %vm1340 = vsmask.f32 3328
      %vm1341 = vsmask.f32 7440
      %vm1342 = vmor %vm1340, %vm1341
      %v1344 = vshrl.u32 %v1185, 16
      %v1346 = vrot.slane %v1344, 4
      %v1347 = vshll.u32 %v1185, 16
      %v1349 = vrot.slane %v1347, 5
      %v1350 = vor.u32 %v1346, %v1349
      %v1351 = vrot.slane %v1350, 4
      %v1353 = vshll.u32 %v1186, 16
      %v1355 = vrot.slane %v1353, 5
      %v1356 = vsel %vm1342, %v1351, %v1355
      %v1358 = vshrl.u32 %v1187, 16
      %v1360 = vrot.slane %v1358, 4
      %v1361 = vshll.u32 %v1187, 16
      %v1363 = vrot.slane %v1361, 5
      %v1364 = vor.u32 %v1360, %v1363
      %v1365 = vrot.slane %v1364, 4
      %v1367 = vshll.u32 %v1188, 16
      %v1369 = vrot.slane %v1367, 5
      %v1370 = vsel %vm1342, %v1365, %v1369
      %v1372 = vshrl.u32 %v1189, 16
      %v1374 = vrot.slane %v1372, 4
      %v1375 = vshll.u32 %v1189, 16
      %v1377 = vrot.slane %v1375, 5
      %v1378 = vor.u32 %v1374, %v1377
      %v1379 = vrot.slane %v1378, 4
      %v1381 = vshll.u32 %v1190, 16
      %v1383 = vrot.slane %v1381, 5
      %v1384 = vsel %vm1342, %v1379, %v1383
      %v1386 = vshrl.u32 %v1191, 16
      %v1388 = vrot.slane %v1386, 4
      %v1389 = vshll.u32 %v1191, 16
      %v1391 = vrot.slane %v1389, 5
      %v1392 = vor.u32 %v1388, %v1391
      %v1393 = vrot.slane %v1392, 4
      %v1395 = vshll.u32 %v1192, 16
      %v1397 = vrot.slane %v1395, 5
      %v1398 = vsel %vm1342, %v1393, %v1397
      %v1400 = vshrl.u32 %v1193, 16
      %v1402 = vrot.slane %v1400, 4
      %v1403 = vshll.u32 %v1193, 16
      %v1405 = vrot.slane %v1403, 5
      %v1406 = vor.u32 %v1402, %v1405
      %v1407 = vrot.slane %v1406, 4
      %v1409 = vshll.u32 %v1194, 16
      %v1411 = vrot.slane %v1409, 5
      %v1412 = vsel %vm1342, %v1407, %v1411
      %v1414 = vshrl.u32 %v1195, 16
      %v1416 = vrot.slane %v1414, 4
      %v1417 = vshll.u32 %v1195, 16
      %v1419 = vrot.slane %v1417, 5
      %v1420 = vor.u32 %v1416, %v1419
      %v1421 = vrot.slane %v1420, 4
      %v1423 = vshll.u32 %v1196, 16
      %v1425 = vrot.slane %v1423, 5
      %v1426 = vsel %vm1342, %v1421, %v1425
      %v1428 = vshrl.u32 %v1197, 16
      %v1430 = vrot.slane %v1428, 4
      %v1431 = vshll.u32 %v1197, 16
      %v1433 = vrot.slane %v1431, 5
      %v1434 = vor.u32 %v1430, %v1433
      %v1435 = vrot.slane %v1434, 4
      %v1437 = vshll.u32 %v1198, 16
      %v1439 = vrot.slane %v1437, 5
      %v1440 = vsel %vm1342, %v1435, %v1439
      %v1442 = vshrl.u32 %v1199, 16
      %v1444 = vrot.slane %v1442, 4
      %v1445 = vshll.u32 %v1199, 16
      %v1447 = vrot.slane %v1445, 5
      %v1448 = vor.u32 %v1444, %v1447
      %v1449 = vrot.slane %v1448, 4
      %v1451 = vshll.u32 %v1200, 16
      %v1453 = vrot.slane %v1451, 5
      %v1454 = vsel %vm1342, %v1449, %v1453
      %s1455 = scalar_lea.vmem %s11, 4
      %v1456 = vld [vmem:[%s1455] sm:$0x3]
      %v1457 = vunpack.c.l.b16 %v1356
      %v1458 = vunpack.c.l.b16 %v1370
      %v1459 = vunpack.c.l.b16 %v1384
      %v1460 = vunpack.c.l.b16 %v1398
      %v1461 = vunpack.c.l.b16 %v1412
      %v1462 = vunpack.c.l.b16 %v1426
      %v1463 = vunpack.c.l.b16 %v1440
      %v1464 = vunpack.c.l.b16 %v1454
      %v1465 = vpack.c.b16 %v1458, %v1457
      %v1466 = vpack.c.b16 %v1460, %v1459
      %v1467 = vpack.c.b16 %v1462, %v1461
      %v1468 = vpack.c.b16 %v1464, %v1463
      %v1470 = vsel %vm979, %v1465, 0
      %v1473 = vsel %vm979, %v1466, 0
      %v1476 = vsel %vm979, %v1467, 0
      %v1479 = vsel %vm979, %v1468, 0
      %v1482 = vsel %vm992, %v1456, 0
      %1484 = vmatpush.bf16.msra.mxu0 0
      %1485 = vmatpush.bf16.msra.mxu0 0
      %1486 = vmatpush.bf16.msra.mxu0 0
      %1487 = vmatpush.bf16.msra.mxu0 0
      %1488 = vmatpush.bf16.msra.mxu0 0
      %1489 = vmatpush.bf16.msra.mxu0 0
      %1490 = vmatpush.bf16.msra.mxu0 0
      %1491 = vmatpush.bf16.msra.mxu0 %v1482
      %1492 = vmatmul.bf16.gmra.mxu0 %v1470
      %v1493 = vpop.f32.mrf.mxu0
      %v1494 = vadd.f32 0.0, %v1493
      %v1495 = vpop.f32.mrf.mxu0
      %v1496 = vadd.f32 0.0, %v1495
      %1497 = vmatmul.bf16.gmra.mxu0 %v1473
      %v1498 = vpop.f32.mrf.mxu0
      %v1499 = vadd.f32 0.0, %v1498
      %v1500 = vpop.f32.mrf.mxu0
      %v1501 = vadd.f32 0.0, %v1500
      %1502 = vmatmul.bf16.gmra.mxu0 %v1476
      %v1503 = vpop.f32.mrf.mxu0
      %v1504 = vadd.f32 0.0, %v1503
      %v1505 = vpop.f32.mrf.mxu0
      %v1506 = vadd.f32 0.0, %v1505
      %1507 = vmatmul.bf16.gmra.mxu0 %v1479
      %v1508 = vpop.f32.mrf.mxu0
      %v1509 = vadd.f32 0.0, %v1508
      %v1510 = vpop.f32.mrf.mxu0
      %v1511 = vadd.f32 0.0, %v1510
      %1512 = vdwg.mxu0
      %v1513 = vadd.f32 %v1321, %v1494
      %v1514 = vadd.f32 %v1323, %v1496
      %v1515 = vadd.f32 %v1326, %v1499
      %v1516 = vadd.f32 %v1328, %v1501
      %v1517 = vadd.f32 %v1331, %v1504
      %v1518 = vadd.f32 %v1333, %v1506
      %v1519 = vadd.f32 %v1336, %v1509
      %v1520 = vadd.f32 %v1338, %v1511
      %v1521 = vld [vmem:[%s804] sm:$0xf]
      %v1522 = vld [vmem:[%s804 + $0x4] sm:$0x1]
      %v1523 = vld [vmem:[%s804 + $0x8] sm:$0xf]
      %v1524 = vld [vmem:[%s804 + $0xc] sm:$0x1]
      %v1525 = vld [vmem:[%s804 + $0x10] sm:$0xf]
      %v1526 = vld [vmem:[%s804 + $0x14] sm:$0x1]
      %v1527 = vld [vmem:[%s804 + $0x18] sm:$0xf]
      %v1528 = vld [vmem:[%s804 + $0x1c] sm:$0x1]
      %v1529 = vld [vmem:[%s804 + $0x20] sm:$0xf]
      %v1530 = vld [vmem:[%s804 + $0x24] sm:$0x1]
      %v1531 = vld [vmem:[%s804 + $0x28] sm:$0xf]
      %v1532 = vld [vmem:[%s804 + $0x2c] sm:$0x1]
      %v1533 = vld [vmem:[%s804 + $0x30] sm:$0xf]
      %v1534 = vld [vmem:[%s804 + $0x34] sm:$0x1]
      %v1535 = vld [vmem:[%s804 + $0x38] sm:$0xf]
      %v1536 = vld [vmem:[%s804 + $0x3c] sm:$0x1]
      %v1537 = vld [vmem:[%s815] sm:$0xf]
      %v1538 = vld [vmem:[%s815 + $0x8] sm:$0xf]
      %v1539 = vld [vmem:[%s815 + $0x10] sm:$0xf]
      %v1540 = vld [vmem:[%s815 + $0x18] sm:$0xf]
      %v1541 = vld [vmem:[%s815 + $0x20] sm:$0xf]
      %v1542 = vld [vmem:[%s815 + $0x28] sm:$0xf]
      %v1543 = vld [vmem:[%s815 + $0x30] sm:$0xf]
      %v1544 = vld [vmem:[%s815 + $0x38] sm:$0xf]
      %s1545 = scalar_lea.vmem %s11, 6
      %v1546 = vld [vmem:[%s1545] sm:$0x3]
      %v1555 = vunpack.c.l.b16 %v1521
      %v1556 = vunpack.c.l.b16 %v1523
      %v1557 = vunpack.c.l.b16 %v1525
      %v1558 = vunpack.c.l.b16 %v1527
      %v1559 = vunpack.c.l.b16 %v1529
      %v1560 = vunpack.c.l.b16 %v1531
      %v1561 = vunpack.c.l.b16 %v1533
      %v1562 = vunpack.c.l.b16 %v1535
      %v1563 = vpack.c.b16 %v1556, %v1555
      %v1564 = vpack.c.b16 %v1558, %v1557
      %v1565 = vpack.c.b16 %v1560, %v1559
      %v1566 = vpack.c.b16 %v1562, %v1561
      %v1568 = vsel %vm979, %v1563, 0
      %v1571 = vsel %vm979, %v1564, 0
      %v1574 = vsel %vm979, %v1565, 0
      %v1577 = vsel %vm979, %v1566, 0
      %v1580 = vsel %vm992, %v1546, 0
      %1582 = vmatpush.bf16.msra.mxu0 0
      %1583 = vmatpush.bf16.msra.mxu0 0
      %1584 = vmatpush.bf16.msra.mxu0 0
      %1585 = vmatpush.bf16.msra.mxu0 0
      %1586 = vmatpush.bf16.msra.mxu0 0
      %1587 = vmatpush.bf16.msra.mxu0 0
      %1588 = vmatpush.bf16.msra.mxu0 0
      %1589 = vmatpush.bf16.msra.mxu0 %v1580
      %1590 = vmatmul.bf16.gmra.mxu0 %v1568
      %v1591 = vpop.f32.mrf.mxu0
      %v1592 = vadd.f32 0.0, %v1591
      %v1593 = vpop.f32.mrf.mxu0
      %v1594 = vadd.f32 0.0, %v1593
      %1595 = vmatmul.bf16.gmra.mxu0 %v1571
      %v1596 = vpop.f32.mrf.mxu0
      %v1597 = vadd.f32 0.0, %v1596
      %v1598 = vpop.f32.mrf.mxu0
      %v1599 = vadd.f32 0.0, %v1598
      %1600 = vmatmul.bf16.gmra.mxu0 %v1574
      %v1601 = vpop.f32.mrf.mxu0
      %v1602 = vadd.f32 0.0, %v1601
      %v1603 = vpop.f32.mrf.mxu0
      %v1604 = vadd.f32 0.0, %v1603
      %1605 = vmatmul.bf16.gmra.mxu0 %v1577
      %v1606 = vpop.f32.mrf.mxu0
      %v1607 = vadd.f32 0.0, %v1606
      %v1608 = vpop.f32.mrf.mxu0
      %v1609 = vadd.f32 0.0, %v1608
      %1610 = vdwg.mxu0
      %v1611 = vadd.f32 %v1513, %v1592
      %v1612 = vadd.f32 %v1514, %v1594
      %v1613 = vadd.f32 %v1515, %v1597
      %v1614 = vadd.f32 %v1516, %v1599
      %v1615 = vadd.f32 %v1517, %v1602
      %v1616 = vadd.f32 %v1518, %v1604
      %v1617 = vadd.f32 %v1519, %v1607
      %v1618 = vadd.f32 %v1520, %v1609
      %s1619 = scalar_lea.vmem %s11, 8
      %v1620 = vld [vmem:[%s1619] sm:$0x3]
      %v1629 = vunpack.c.l.b16 %v1537
      %v1630 = vunpack.c.l.b16 %v1538
      %v1631 = vunpack.c.l.b16 %v1539
      %v1632 = vunpack.c.l.b16 %v1540
      %v1633 = vunpack.c.l.b16 %v1541
      %v1634 = vunpack.c.l.b16 %v1542
      %v1635 = vunpack.c.l.b16 %v1543
      %v1636 = vunpack.c.l.b16 %v1544
      %v1637 = vpack.c.b16 %v1630, %v1629
      %v1638 = vpack.c.b16 %v1632, %v1631
      %v1639 = vpack.c.b16 %v1634, %v1633
      %v1640 = vpack.c.b16 %v1636, %v1635
      %v1642 = vsel %vm979, %v1637, 0
      %v1645 = vsel %vm979, %v1638, 0
      %v1648 = vsel %vm979, %v1639, 0
      %v1651 = vsel %vm979, %v1640, 0
      %v1654 = vsel %vm992, %v1620, 0
      %1656 = vmatpush.bf16.msra.mxu0 0
      %1657 = vmatpush.bf16.msra.mxu0 0
      %1658 = vmatpush.bf16.msra.mxu0 0
      %1659 = vmatpush.bf16.msra.mxu0 0
      %1660 = vmatpush.bf16.msra.mxu0 0
      %1661 = vmatpush.bf16.msra.mxu0 0
      %1662 = vmatpush.bf16.msra.mxu0 0
      %1663 = vmatpush.bf16.msra.mxu0 %v1654
      %1664 = vmatmul.bf16.gmra.mxu0 %v1642
      %v1665 = vpop.f32.mrf.mxu0
      %v1666 = vadd.f32 0.0, %v1665
      %v1667 = vpop.f32.mrf.mxu0
      %v1668 = vadd.f32 0.0, %v1667
      %1669 = vmatmul.bf16.gmra.mxu0 %v1645
      %v1670 = vpop.f32.mrf.mxu0
      %v1671 = vadd.f32 0.0, %v1670
      %v1672 = vpop.f32.mrf.mxu0
      %v1673 = vadd.f32 0.0, %v1672
      %1674 = vmatmul.bf16.gmra.mxu0 %v1648
      %v1675 = vpop.f32.mrf.mxu0
      %v1676 = vadd.f32 0.0, %v1675
      %v1677 = vpop.f32.mrf.mxu0
      %v1678 = vadd.f32 0.0, %v1677
      %1679 = vmatmul.bf16.gmra.mxu0 %v1651
      %v1680 = vpop.f32.mrf.mxu0
      %v1681 = vadd.f32 0.0, %v1680
      %v1682 = vpop.f32.mrf.mxu0
      %v1683 = vadd.f32 0.0, %v1682
      %1684 = vdwg.mxu0
      %v1685 = vadd.f32 %v1611, %v1666
      %v1686 = vadd.f32 %v1612, %v1668
      %v1687 = vadd.f32 %v1613, %v1671
      %v1688 = vadd.f32 %v1614, %v1673
      %v1689 = vadd.f32 %v1615, %v1676
      %v1690 = vadd.f32 %v1616, %v1678
      %v1691 = vadd.f32 %v1617, %v1681
      %v1692 = vadd.f32 %v1618, %v1683
      %v1694 = vshrl.u32 %v1521, 16
      %v1696 = vrot.slane %v1694, 4
      %v1697 = vshll.u32 %v1521, 16
      %v1699 = vrot.slane %v1697, 5
      %v1700 = vor.u32 %v1696, %v1699
      %v1701 = vrot.slane %v1700, 4
      %v1703 = vshll.u32 %v1522, 16
      %v1705 = vrot.slane %v1703, 5
      %v1706 = vsel %vm1342, %v1701, %v1705
      %v1708 = vshrl.u32 %v1523, 16
      %v1710 = vrot.slane %v1708, 4
      %v1711 = vshll.u32 %v1523, 16
      %v1713 = vrot.slane %v1711, 5
      %v1714 = vor.u32 %v1710, %v1713
      %v1715 = vrot.slane %v1714, 4
      %v1717 = vshll.u32 %v1524, 16
      %v1719 = vrot.slane %v1717, 5
      %v1720 = vsel %vm1342, %v1715, %v1719
      %v1722 = vshrl.u32 %v1525, 16
      %v1724 = vrot.slane %v1722, 4
      %v1725 = vshll.u32 %v1525, 16
      %v1727 = vrot.slane %v1725, 5
      %v1728 = vor.u32 %v1724, %v1727
      %v1729 = vrot.slane %v1728, 4
      %v1731 = vshll.u32 %v1526, 16
      %v1733 = vrot.slane %v1731, 5
      %v1734 = vsel %vm1342, %v1729, %v1733
      %v1736 = vshrl.u32 %v1527, 16
      %v1738 = vrot.slane %v1736, 4
      %v1739 = vshll.u32 %v1527, 16
      %v1741 = vrot.slane %v1739, 5
      %v1742 = vor.u32 %v1738, %v1741
      %v1743 = vrot.slane %v1742, 4
      %v1745 = vshll.u32 %v1528, 16
      %v1747 = vrot.slane %v1745, 5
      %v1748 = vsel %vm1342, %v1743, %v1747
      %v1750 = vshrl.u32 %v1529, 16
      %v1752 = vrot.slane %v1750, 4
      %v1753 = vshll.u32 %v1529, 16
      %v1755 = vrot.slane %v1753, 5
      %v1756 = vor.u32 %v1752, %v1755
      %v1757 = vrot.slane %v1756, 4
      %v1759 = vshll.u32 %v1530, 16
      %v1761 = vrot.slane %v1759, 5
      %v1762 = vsel %vm1342, %v1757, %v1761
      %v1764 = vshrl.u32 %v1531, 16
      %v1766 = vrot.slane %v1764, 4
      %v1767 = vshll.u32 %v1531, 16
      %v1769 = vrot.slane %v1767, 5
      %v1770 = vor.u32 %v1766, %v1769
      %v1771 = vrot.slane %v1770, 4
      %v1773 = vshll.u32 %v1532, 16
      %v1775 = vrot.slane %v1773, 5
      %v1776 = vsel %vm1342, %v1771, %v1775
      %v1778 = vshrl.u32 %v1533, 16
      %v1780 = vrot.slane %v1778, 4
      %v1781 = vshll.u32 %v1533, 16
      %v1783 = vrot.slane %v1781, 5
      %v1784 = vor.u32 %v1780, %v1783
      %v1785 = vrot.slane %v1784, 4
      %v1787 = vshll.u32 %v1534, 16
      %v1789 = vrot.slane %v1787, 5
      %v1790 = vsel %vm1342, %v1785, %v1789
      %v1792 = vshrl.u32 %v1535, 16
      %v1794 = vrot.slane %v1792, 4
      %v1795 = vshll.u32 %v1535, 16
      %v1797 = vrot.slane %v1795, 5
      %v1798 = vor.u32 %v1794, %v1797
      %v1799 = vrot.slane %v1798, 4
      %v1801 = vshll.u32 %v1536, 16
      %v1803 = vrot.slane %v1801, 5
      %v1804 = vsel %vm1342, %v1799, %v1803
      %s1805 = scalar_lea.vmem %s11, 10
      %v1806 = vld [vmem:[%s1805] sm:$0x3]
      %v1807 = vunpack.c.l.b16 %v1706
      %v1808 = vunpack.c.l.b16 %v1720
      %v1809 = vunpack.c.l.b16 %v1734
      %v1810 = vunpack.c.l.b16 %v1748
      %v1811 = vunpack.c.l.b16 %v1762
      %v1812 = vunpack.c.l.b16 %v1776
      %v1813 = vunpack.c.l.b16 %v1790
      %v1814 = vunpack.c.l.b16 %v1804
      %v1815 = vpack.c.b16 %v1808, %v1807
      %v1816 = vpack.c.b16 %v1810, %v1809
      %v1817 = vpack.c.b16 %v1812, %v1811
      %v1818 = vpack.c.b16 %v1814, %v1813
      %v1820 = vsel %vm979, %v1815, 0
      %v1823 = vsel %vm979, %v1816, 0
      %v1826 = vsel %vm979, %v1817, 0
      %v1829 = vsel %vm979, %v1818, 0
      %v1832 = vsel %vm992, %v1806, 0
      %1834 = vmatpush.bf16.msra.mxu0 0
      %1835 = vmatpush.bf16.msra.mxu0 0
      %1836 = vmatpush.bf16.msra.mxu0 0
      %1837 = vmatpush.bf16.msra.mxu0 0
      %1838 = vmatpush.bf16.msra.mxu0 0
      %1839 = vmatpush.bf16.msra.mxu0 0
      %1840 = vmatpush.bf16.msra.mxu0 0
      %1841 = vmatpush.bf16.msra.mxu0 %v1832
      %1842 = vmatmul.bf16.gmra.mxu0 %v1820
      %v1843 = vpop.f32.mrf.mxu0
      %v1844 = vadd.f32 0.0, %v1843
      %v1845 = vpop.f32.mrf.mxu0
      %v1846 = vadd.f32 0.0, %v1845
      %1847 = vmatmul.bf16.gmra.mxu0 %v1823
      %v1848 = vpop.f32.mrf.mxu0
      %v1849 = vadd.f32 0.0, %v1848
      %v1850 = vpop.f32.mrf.mxu0
      %v1851 = vadd.f32 0.0, %v1850
      %1852 = vmatmul.bf16.gmra.mxu0 %v1826
      %v1853 = vpop.f32.mrf.mxu0
      %v1854 = vadd.f32 0.0, %v1853
      %v1855 = vpop.f32.mrf.mxu0
      %v1856 = vadd.f32 0.0, %v1855
      %1857 = vmatmul.bf16.gmra.mxu0 %v1829
      %v1858 = vpop.f32.mrf.mxu0
      %v1859 = vadd.f32 0.0, %v1858
      %v1860 = vpop.f32.mrf.mxu0
      %v1861 = vadd.f32 0.0, %v1860
      %1862 = vdwg.mxu0
      %v1863 = vadd.f32 %v1685, %v1844
      %v1864 = vadd.f32 %v1686, %v1846
      %v1865 = vadd.f32 %v1687, %v1849
      %v1866 = vadd.f32 %v1688, %v1851
      %v1867 = vadd.f32 %v1689, %v1854
      %v1868 = vadd.f32 %v1690, %v1856
      %v1869 = vadd.f32 %v1691, %v1859
      %v1870 = vadd.f32 %v1692, %v1861
      %v1871 = vld [vmem:[%s826] sm:$0xf]
      %v1872 = vld [vmem:[%s826 + $0x4] sm:$0x1]
      %v1873 = vld [vmem:[%s826 + $0x8] sm:$0xf]
      %v1874 = vld [vmem:[%s826 + $0xc] sm:$0x1]
      %v1875 = vld [vmem:[%s826 + $0x10] sm:$0xf]
      %v1876 = vld [vmem:[%s826 + $0x14] sm:$0x1]
      %v1877 = vld [vmem:[%s826 + $0x18] sm:$0xf]
      %v1878 = vld [vmem:[%s826 + $0x1c] sm:$0x1]
      %v1879 = vld [vmem:[%s826 + $0x20] sm:$0xf]
      %v1880 = vld [vmem:[%s826 + $0x24] sm:$0x1]
      %v1881 = vld [vmem:[%s826 + $0x28] sm:$0xf]
      %v1882 = vld [vmem:[%s826 + $0x2c] sm:$0x1]
      %v1883 = vld [vmem:[%s826 + $0x30] sm:$0xf]
      %v1884 = vld [vmem:[%s826 + $0x34] sm:$0x1]
      %v1885 = vld [vmem:[%s826 + $0x38] sm:$0xf]
      %v1886 = vld [vmem:[%s826 + $0x3c] sm:$0x1]
      %v1887 = vld [vmem:[%s837] sm:$0xf]
      %v1888 = vld [vmem:[%s837 + $0x8] sm:$0xf]
      %v1889 = vld [vmem:[%s837 + $0x10] sm:$0xf]
      %v1890 = vld [vmem:[%s837 + $0x18] sm:$0xf]
      %v1891 = vld [vmem:[%s837 + $0x20] sm:$0xf]
      %v1892 = vld [vmem:[%s837 + $0x28] sm:$0xf]
      %v1893 = vld [vmem:[%s837 + $0x30] sm:$0xf]
      %v1894 = vld [vmem:[%s837 + $0x38] sm:$0xf]
      %s1895 = scalar_lea.vmem %s11, 12
      %v1896 = vld [vmem:[%s1895] sm:$0x3]
      %v1905 = vunpack.c.l.b16 %v1871
      %v1906 = vunpack.c.l.b16 %v1873
      %v1907 = vunpack.c.l.b16 %v1875
      %v1908 = vunpack.c.l.b16 %v1877
      %v1909 = vunpack.c.l.b16 %v1879
      %v1910 = vunpack.c.l.b16 %v1881
      %v1911 = vunpack.c.l.b16 %v1883
      %v1912 = vunpack.c.l.b16 %v1885
      %v1913 = vpack.c.b16 %v1906, %v1905
      %v1914 = vpack.c.b16 %v1908, %v1907
      %v1915 = vpack.c.b16 %v1910, %v1909
      %v1916 = vpack.c.b16 %v1912, %v1911
      %v1918 = vsel %vm979, %v1913, 0
      %v1921 = vsel %vm979, %v1914, 0
      %v1924 = vsel %vm979, %v1915, 0
      %v1927 = vsel %vm979, %v1916, 0
      %v1930 = vsel %vm992, %v1896, 0
      %1932 = vmatpush.bf16.msra.mxu0 0
      %1933 = vmatpush.bf16.msra.mxu0 0
      %1934 = vmatpush.bf16.msra.mxu0 0
      %1935 = vmatpush.bf16.msra.mxu0 0
      %1936 = vmatpush.bf16.msra.mxu0 0
      %1937 = vmatpush.bf16.msra.mxu0 0
      %1938 = vmatpush.bf16.msra.mxu0 0
      %1939 = vmatpush.bf16.msra.mxu0 %v1930
      %1940 = vmatmul.bf16.gmra.mxu0 %v1918
      %v1941 = vpop.f32.mrf.mxu0
      %v1942 = vadd.f32 0.0, %v1941
      %v1943 = vpop.f32.mrf.mxu0
      %v1944 = vadd.f32 0.0, %v1943
      %1945 = vmatmul.bf16.gmra.mxu0 %v1921
      %v1946 = vpop.f32.mrf.mxu0
      %v1947 = vadd.f32 0.0, %v1946
      %v1948 = vpop.f32.mrf.mxu0
      %v1949 = vadd.f32 0.0, %v1948
      %1950 = vmatmul.bf16.gmra.mxu0 %v1924
      %v1951 = vpop.f32.mrf.mxu0
      %v1952 = vadd.f32 0.0, %v1951
      %v1953 = vpop.f32.mrf.mxu0
      %v1954 = vadd.f32 0.0, %v1953
      %1955 = vmatmul.bf16.gmra.mxu0 %v1927
      %v1956 = vpop.f32.mrf.mxu0
      %v1957 = vadd.f32 0.0, %v1956
      %v1958 = vpop.f32.mrf.mxu0
      %v1959 = vadd.f32 0.0, %v1958
      %1960 = vdwg.mxu0
      %v1961 = vadd.f32 %v1863, %v1942
      %v1962 = vadd.f32 %v1864, %v1944
      %v1963 = vadd.f32 %v1865, %v1947
      %v1964 = vadd.f32 %v1866, %v1949
      %v1965 = vadd.f32 %v1867, %v1952
      %v1966 = vadd.f32 %v1868, %v1954
      %v1967 = vadd.f32 %v1869, %v1957
      %v1968 = vadd.f32 %v1870, %v1959
      %s1969 = scalar_lea.vmem %s11, 14
      %v1970 = vld [vmem:[%s1969] sm:$0x3]
      %v1979 = vunpack.c.l.b16 %v1887
      %v1980 = vunpack.c.l.b16 %v1888
      %v1981 = vunpack.c.l.b16 %v1889
      %v1982 = vunpack.c.l.b16 %v1890
      %v1983 = vunpack.c.l.b16 %v1891
      %v1984 = vunpack.c.l.b16 %v1892
      %v1985 = vunpack.c.l.b16 %v1893
      %v1986 = vunpack.c.l.b16 %v1894
      %v1987 = vpack.c.b16 %v1980, %v1979
      %v1988 = vpack.c.b16 %v1982, %v1981
      %v1989 = vpack.c.b16 %v1984, %v1983
      %v1990 = vpack.c.b16 %v1986, %v1985
      %v1992 = vsel %vm979, %v1987, 0
      %v1995 = vsel %vm979, %v1988, 0
      %v1998 = vsel %vm979, %v1989, 0
      %v2001 = vsel %vm979, %v1990, 0
      %v2004 = vsel %vm992, %v1970, 0
      %2006 = vmatpush.bf16.msra.mxu0 0
      %2007 = vmatpush.bf16.msra.mxu0 0
      %2008 = vmatpush.bf16.msra.mxu0 0
      %2009 = vmatpush.bf16.msra.mxu0 0
      %2010 = vmatpush.bf16.msra.mxu0 0
      %2011 = vmatpush.bf16.msra.mxu0 0
      %2012 = vmatpush.bf16.msra.mxu0 0
      %2013 = vmatpush.bf16.msra.mxu0 %v2004
      %2014 = vmatmul.bf16.gmra.mxu0 %v1992
      %v2015 = vpop.f32.mrf.mxu0
      %v2016 = vadd.f32 0.0, %v2015
      %v2017 = vpop.f32.mrf.mxu0
      %v2018 = vadd.f32 0.0, %v2017
      %2019 = vmatmul.bf16.gmra.mxu0 %v1995
      %v2020 = vpop.f32.mrf.mxu0
      %v2021 = vadd.f32 0.0, %v2020
      %v2022 = vpop.f32.mrf.mxu0
      %v2023 = vadd.f32 0.0, %v2022
      %2024 = vmatmul.bf16.gmra.mxu0 %v1998
      %v2025 = vpop.f32.mrf.mxu0
      %v2026 = vadd.f32 0.0, %v2025
      %v2027 = vpop.f32.mrf.mxu0
      %v2028 = vadd.f32 0.0, %v2027
      %2029 = vmatmul.bf16.gmra.mxu0 %v2001
      %v2030 = vpop.f32.mrf.mxu0
      %v2031 = vadd.f32 0.0, %v2030
      %v2032 = vpop.f32.mrf.mxu0
      %v2033 = vadd.f32 0.0, %v2032
      %2034 = vdwg.mxu0
      %v2035 = vadd.f32 %v1961, %v2016
      %v2036 = vadd.f32 %v1962, %v2018
      %v2037 = vadd.f32 %v1963, %v2021
      %v2038 = vadd.f32 %v1964, %v2023
      %v2039 = vadd.f32 %v1965, %v2026
      %v2040 = vadd.f32 %v1966, %v2028
      %v2041 = vadd.f32 %v1967, %v2031
      %v2042 = vadd.f32 %v1968, %v2033
      %v2044 = vshrl.u32 %v1871, 16
      %v2046 = vrot.slane %v2044, 4
      %v2047 = vshll.u32 %v1871, 16
      %v2049 = vrot.slane %v2047, 5
      %v2050 = vor.u32 %v2046, %v2049
      %v2051 = vrot.slane %v2050, 4
      %v2053 = vshll.u32 %v1872, 16
      %v2055 = vrot.slane %v2053, 5
      %v2056 = vsel %vm1342, %v2051, %v2055
      %v2058 = vshrl.u32 %v1873, 16
      %v2060 = vrot.slane %v2058, 4
      %v2061 = vshll.u32 %v1873, 16
      %v2063 = vrot.slane %v2061, 5
      %v2064 = vor.u32 %v2060, %v2063
      %v2065 = vrot.slane %v2064, 4
      %v2067 = vshll.u32 %v1874, 16
      %v2069 = vrot.slane %v2067, 5
      %v2070 = vsel %vm1342, %v2065, %v2069
      %v2072 = vshrl.u32 %v1875, 16
      %v2074 = vrot.slane %v2072, 4
      %v2075 = vshll.u32 %v1875, 16
      %v2077 = vrot.slane %v2075, 5
      %v2078 = vor.u32 %v2074, %v2077
      %v2079 = vrot.slane %v2078, 4
      %v2081 = vshll.u32 %v1876, 16
      %v2083 = vrot.slane %v2081, 5
      %v2084 = vsel %vm1342, %v2079, %v2083
      %v2086 = vshrl.u32 %v1877, 16
      %v2088 = vrot.slane %v2086, 4
      %v2089 = vshll.u32 %v1877, 16
      %v2091 = vrot.slane %v2089, 5
      %v2092 = vor.u32 %v2088, %v2091
      %v2093 = vrot.slane %v2092, 4
      %v2095 = vshll.u32 %v1878, 16
      %v2097 = vrot.slane %v2095, 5
      %v2098 = vsel %vm1342, %v2093, %v2097
      %v2100 = vshrl.u32 %v1879, 16
      %v2102 = vrot.slane %v2100, 4
      %v2103 = vshll.u32 %v1879, 16
      %v2105 = vrot.slane %v2103, 5
      %v2106 = vor.u32 %v2102, %v2105
      %v2107 = vrot.slane %v2106, 4
      %v2109 = vshll.u32 %v1880, 16
      %v2111 = vrot.slane %v2109, 5
      %v2112 = vsel %vm1342, %v2107, %v2111
      %v2114 = vshrl.u32 %v1881, 16
      %v2116 = vrot.slane %v2114, 4
      %v2117 = vshll.u32 %v1881, 16
      %v2119 = vrot.slane %v2117, 5
      %v2120 = vor.u32 %v2116, %v2119
      %v2121 = vrot.slane %v2120, 4
      %v2123 = vshll.u32 %v1882, 16
      %v2125 = vrot.slane %v2123, 5
      %v2126 = vsel %vm1342, %v2121, %v2125
      %v2128 = vshrl.u32 %v1883, 16
      %v2130 = vrot.slane %v2128, 4
      %v2131 = vshll.u32 %v1883, 16
      %v2133 = vrot.slane %v2131, 5
      %v2134 = vor.u32 %v2130, %v2133
      %v2135 = vrot.slane %v2134, 4
      %v2137 = vshll.u32 %v1884, 16
      %v2139 = vrot.slane %v2137, 5
      %v2140 = vsel %vm1342, %v2135, %v2139
      %v2142 = vshrl.u32 %v1885, 16
      %v2144 = vrot.slane %v2142, 4
      %v2145 = vshll.u32 %v1885, 16
      %v2147 = vrot.slane %v2145, 5
      %v2148 = vor.u32 %v2144, %v2147
      %v2149 = vrot.slane %v2148, 4
      %v2151 = vshll.u32 %v1886, 16
      %v2153 = vrot.slane %v2151, 5
      %v2154 = vsel %vm1342, %v2149, %v2153
      %s2155 = scalar_lea.vmem %s11, 16
      %v2156 = vld [vmem:[%s2155] sm:$0x3]
      %v2157 = vunpack.c.l.b16 %v2056
      %v2158 = vunpack.c.l.b16 %v2070
      %v2159 = vunpack.c.l.b16 %v2084
      %v2160 = vunpack.c.l.b16 %v2098
      %v2161 = vunpack.c.l.b16 %v2112
      %v2162 = vunpack.c.l.b16 %v2126
      %v2163 = vunpack.c.l.b16 %v2140
      %v2164 = vunpack.c.l.b16 %v2154
      %v2165 = vpack.c.b16 %v2158, %v2157
      %v2166 = vpack.c.b16 %v2160, %v2159
      %v2167 = vpack.c.b16 %v2162, %v2161
      %v2168 = vpack.c.b16 %v2164, %v2163
      %v2170 = vsel %vm979, %v2165, 0
      %v2173 = vsel %vm979, %v2166, 0
      %v2176 = vsel %vm979, %v2167, 0
      %v2179 = vsel %vm979, %v2168, 0
      %v2182 = vsel %vm992, %v2156, 0
      %2184 = vmatpush.bf16.msra.mxu0 0
      %2185 = vmatpush.bf16.msra.mxu0 0
      %2186 = vmatpush.bf16.msra.mxu0 0
      %2187 = vmatpush.bf16.msra.mxu0 0
      %2188 = vmatpush.bf16.msra.mxu0 0
      %2189 = vmatpush.bf16.msra.mxu0 0
      %2190 = vmatpush.bf16.msra.mxu0 0
      %2191 = vmatpush.bf16.msra.mxu0 %v2182
      %2192 = vmatmul.bf16.gmra.mxu0 %v2170
      %v2193 = vpop.f32.mrf.mxu0
      %v2194 = vadd.f32 0.0, %v2193
      %v2195 = vpop.f32.mrf.mxu0
      %v2196 = vadd.f32 0.0, %v2195
      %2197 = vmatmul.bf16.gmra.mxu0 %v2173
      %v2198 = vpop.f32.mrf.mxu0
      %v2199 = vadd.f32 0.0, %v2198
      %v2200 = vpop.f32.mrf.mxu0
      %v2201 = vadd.f32 0.0, %v2200
      %2202 = vmatmul.bf16.gmra.mxu0 %v2176
      %v2203 = vpop.f32.mrf.mxu0
      %v2204 = vadd.f32 0.0, %v2203
      %v2205 = vpop.f32.mrf.mxu0
      %v2206 = vadd.f32 0.0, %v2205
      %2207 = vmatmul.bf16.gmra.mxu0 %v2179
      %v2208 = vpop.f32.mrf.mxu0
      %v2209 = vadd.f32 0.0, %v2208
      %v2210 = vpop.f32.mrf.mxu0
      %v2211 = vadd.f32 0.0, %v2210
      %2212 = vdwg.mxu0
      %v2213 = vadd.f32 %v2035, %v2194
      %v2214 = vadd.f32 %v2036, %v2196
      %v2215 = vadd.f32 %v2037, %v2199
      %v2216 = vadd.f32 %v2038, %v2201
      %v2217 = vadd.f32 %v2039, %v2204
      %v2218 = vadd.f32 %v2040, %v2206
      %v2219 = vadd.f32 %v2041, %v2209
      %v2220 = vadd.f32 %v2042, %v2211
      %v2221 = vld [vmem:[%s13] sm:$0x1]
      %v2223 = vperm.slane %v2221, 0
      %v2225 = vadd.f32 %v2213, %v2223
      %v2226 = vadd.f32 %v2214, %v2223
      %v2227 = vadd.f32 %v2215, %v2223
      %v2228 = vadd.f32 %v2216, %v2223
      %v2229 = vadd.f32 %v2217, %v2223
      %v2230 = vadd.f32 %v2218, %v2223
      %v2231 = vadd.f32 %v2219, %v2223
      %v2232 = vadd.f32 %v2220, %v2223
      %v2233 = vxor.u32 %v2225, 2147483648
      %v2234 = vxor.u32 %v2226, 2147483648
      %v2235 = vxor.u32 %v2227, 2147483648
      %v2236 = vxor.u32 %v2228, 2147483648
      %v2237 = vxor.u32 %v2229, 2147483648
      %v2238 = vxor.u32 %v2230, 2147483648
      %v2239 = vxor.u32 %v2231, 2147483648
      %v2240 = vxor.u32 %v2232, 2147483648
      %v2241 = vmul.f32 %v2233, 1.442695
      %v2242 = vpow.pop %v2241
      %v2243 = vmul.f32 %v2234, 1.442695
      %v2244 = vpow.pop %v2243
      %v2245 = vmul.f32 %v2235, 1.442695
      %v2246 = vpow.pop %v2245
      %v2247 = vmul.f32 %v2236, 1.442695
      %v2248 = vpow.pop %v2247
      %v2249 = vmul.f32 %v2237, 1.442695
      %v2250 = vpow.pop %v2249
      %v2251 = vmul.f32 %v2238, 1.442695
      %v2252 = vpow.pop %v2251
      %v2253 = vmul.f32 %v2239, 1.442695
      %v2254 = vpow.pop %v2253
      %v2255 = vmul.f32 %v2240, 1.442695
      %v2256 = vpow.pop %v2255
      %v2257 = vadd.f32 %v2242, 1.0
      %v2258 = vadd.f32 %v2244, 1.0
      %v2259 = vadd.f32 %v2246, 1.0
      %v2260 = vadd.f32 %v2248, 1.0
      %v2261 = vadd.f32 %v2250, 1.0
      %v2262 = vadd.f32 %v2252, 1.0
      %v2263 = vadd.f32 %v2254, 1.0
      %v2264 = vadd.f32 %v2256, 1.0
      %v2265 = vrcp.pop %v2257
      %v2266 = vmul.f32 %v2257, %v2265
      %v2267 = vsub.f32 1.0, %v2266
      %v2268 = vmul.f32 %v2265, %v2267
      %v2269 = vadd.f32 %v2265, %v2268
      %vm2270 = vweird.f32 %v2257
      %vm2271 = vweird.f32 %v2265
      %vm2272 = vmor %vm2270, %vm2271
      %v2273 = vsel %vm2272, %v2265, %v2269
      %v2274 = vand.u32 2147483647, %v2257
      %vm2275 = vcmp.eq.f32.partialorder %v2274, 8.507059e+37
      %v2276 = vand.u32 %v2257, 2147483648
      %v2277 = vor.u32 1.1754944e-38, %v2276
      %v2278 = vsel %vm2275, %v2277, %v2273
      %v2279 = vmul.f32 1.0, %v2278
      %v2280 = vrcp.pop %v2258
      %v2281 = vmul.f32 %v2258, %v2280
      %v2282 = vsub.f32 1.0, %v2281
      %v2283 = vmul.f32 %v2280, %v2282
      %v2284 = vadd.f32 %v2280, %v2283
      %vm2285 = vweird.f32 %v2258
      %vm2286 = vweird.f32 %v2280
      %vm2287 = vmor %vm2285, %vm2286
      %v2288 = vsel %vm2287, %v2280, %v2284
      %v2289 = vand.u32 2147483647, %v2258
      %vm2290 = vcmp.eq.f32.partialorder %v2289, 8.507059e+37
      %v2291 = vand.u32 %v2258, 2147483648
      %v2292 = vor.u32 1.1754944e-38, %v2291
      %v2293 = vsel %vm2290, %v2292, %v2288
      %v2294 = vmul.f32 1.0, %v2293
      %v2295 = vrcp.pop %v2259
      %v2296 = vmul.f32 %v2259, %v2295
      %v2297 = vsub.f32 1.0, %v2296
      %v2298 = vmul.f32 %v2295, %v2297
      %v2299 = vadd.f32 %v2295, %v2298
      %vm2300 = vweird.f32 %v2259
      %vm2301 = vweird.f32 %v2295
      %vm2302 = vmor %vm2300, %vm2301
      %v2303 = vsel %vm2302, %v2295, %v2299
      %v2304 = vand.u32 2147483647, %v2259
      %vm2305 = vcmp.eq.f32.partialorder %v2304, 8.507059e+37
      %v2306 = vand.u32 %v2259, 2147483648
      %v2307 = vor.u32 1.1754944e-38, %v2306
      %v2308 = vsel %vm2305, %v2307, %v2303
      %v2309 = vmul.f32 1.0, %v2308
      %v2310 = vrcp.pop %v2260
      %v2311 = vmul.f32 %v2260, %v2310
      %v2312 = vsub.f32 1.0, %v2311
      %v2313 = vmul.f32 %v2310, %v2312
      %v2314 = vadd.f32 %v2310, %v2313
      %vm2315 = vweird.f32 %v2260
      %vm2316 = vweird.f32 %v2310
      %vm2317 = vmor %vm2315, %vm2316
      %v2318 = vsel %vm2317, %v2310, %v2314
      %v2319 = vand.u32 2147483647, %v2260
      %vm2320 = vcmp.eq.f32.partialorder %v2319, 8.507059e+37
      %v2321 = vand.u32 %v2260, 2147483648
      %v2322 = vor.u32 1.1754944e-38, %v2321
      %v2323 = vsel %vm2320, %v2322, %v2318
      %v2324 = vmul.f32 1.0, %v2323
      %v2325 = vrcp.pop %v2261
      %v2326 = vmul.f32 %v2261, %v2325
      %v2327 = vsub.f32 1.0, %v2326
      %v2328 = vmul.f32 %v2325, %v2327
      %v2329 = vadd.f32 %v2325, %v2328
      %vm2330 = vweird.f32 %v2261
      %vm2331 = vweird.f32 %v2325
      %vm2332 = vmor %vm2330, %vm2331
      %v2333 = vsel %vm2332, %v2325, %v2329
      %v2334 = vand.u32 2147483647, %v2261
      %vm2335 = vcmp.eq.f32.partialorder %v2334, 8.507059e+37
      %v2336 = vand.u32 %v2261, 2147483648
      %v2337 = vor.u32 1.1754944e-38, %v2336
      %v2338 = vsel %vm2335, %v2337, %v2333
      %v2339 = vmul.f32 1.0, %v2338
      %v2340 = vrcp.pop %v2262
      %v2341 = vmul.f32 %v2262, %v2340
      %v2342 = vsub.f32 1.0, %v2341
      %v2343 = vmul.f32 %v2340, %v2342
      %v2344 = vadd.f32 %v2340, %v2343
      %vm2345 = vweird.f32 %v2262
      %vm2346 = vweird.f32 %v2340
      %vm2347 = vmor %vm2345, %vm2346
      %v2348 = vsel %vm2347, %v2340, %v2344
      %v2349 = vand.u32 2147483647, %v2262
      %vm2350 = vcmp.eq.f32.partialorder %v2349, 8.507059e+37
      %v2351 = vand.u32 %v2262, 2147483648
      %v2352 = vor.u32 1.1754944e-38, %v2351
      %v2353 = vsel %vm2350, %v2352, %v2348
      %v2354 = vmul.f32 1.0, %v2353
      %v2355 = vrcp.pop %v2263
      %v2356 = vmul.f32 %v2263, %v2355
      %v2357 = vsub.f32 1.0, %v2356
      %v2358 = vmul.f32 %v2355, %v2357
      %v2359 = vadd.f32 %v2355, %v2358
      %vm2360 = vweird.f32 %v2263
      %vm2361 = vweird.f32 %v2355
      %vm2362 = vmor %vm2360, %vm2361
      %v2363 = vsel %vm2362, %v2355, %v2359
      %v2364 = vand.u32 2147483647, %v2263
      %vm2365 = vcmp.eq.f32.partialorder %v2364, 8.507059e+37
      %v2366 = vand.u32 %v2263, 2147483648
      %v2367 = vor.u32 1.1754944e-38, %v2366
      %v2368 = vsel %vm2365, %v2367, %v2363
      %v2369 = vmul.f32 1.0, %v2368
      %v2370 = vrcp.pop %v2264
      %v2371 = vmul.f32 %v2264, %v2370
      %v2372 = vsub.f32 1.0, %v2371
      %v2373 = vmul.f32 %v2370, %v2372
      %v2374 = vadd.f32 %v2370, %v2373
      %vm2375 = vweird.f32 %v2264
      %vm2376 = vweird.f32 %v2370
      %vm2377 = vmor %vm2375, %vm2376
      %v2378 = vsel %vm2377, %v2370, %v2374
      %v2379 = vand.u32 2147483647, %v2264
      %vm2380 = vcmp.eq.f32.partialorder %v2379, 8.507059e+37
      %v2381 = vand.u32 %v2264, 2147483648
      %v2382 = vor.u32 1.1754944e-38, %v2381
      %v2383 = vsel %vm2380, %v2382, %v2378
      %v2384 = vmul.f32 1.0, %v2383
      %v2385 = vmul.f32 %v2225, %v2279
      %v2386 = vmul.f32 %v2226, %v2294
      %v2387 = vmul.f32 %v2227, %v2309
      %v2388 = vmul.f32 %v2228, %v2324
      %v2389 = vmul.f32 %v2229, %v2339
      %v2390 = vmul.f32 %v2230, %v2354
      %v2391 = vmul.f32 %v2231, %v2369
      %v2392 = vmul.f32 %v2232, %v2384
      %2401 = vrot.lane.b32.xlu0 %v2385, 4
      %v2402 = vpop.permute.xlu0 %2401
      %2403 = vrot.lane.b32.xlu0 %v2386, 4
      %v2404 = vpop.permute.xlu0 %2403
      %2405 = vrot.lane.b32.xlu0 %v2387, 4
      %v2406 = vpop.permute.xlu0 %2405
      %2407 = vrot.lane.b32.xlu0 %v2388, 4
      %v2408 = vpop.permute.xlu0 %2407
      %2409 = vrot.lane.b32.xlu0 %v2389, 4
      %v2410 = vpop.permute.xlu0 %2409
      %2411 = vrot.lane.b32.xlu0 %v2390, 4
      %v2412 = vpop.permute.xlu0 %2411
      %2413 = vrot.lane.b32.xlu0 %v2391, 4
      %v2414 = vpop.permute.xlu0 %2413
      %2415 = vrot.lane.b32.xlu0 %v2392, 4
      %v2416 = vpop.permute.xlu0 %2415
      %v2425 = vsel %vm979, %v1177, %v2402
      %v2426 = vsel %vm979, %v1178, %v2404
      %v2427 = vsel %vm979, %v1179, %v2406
      %v2428 = vsel %vm979, %v1180, %v2408
      %v2429 = vsel %vm979, %v1181, %v2410
      %v2430 = vsel %vm979, %v1182, %v2412
      %v2431 = vsel %vm979, %v1183, %v2414
      %v2432 = vsel %vm979, %v1184, %v2416
      %vm2433 = vcmask 64512
      %2434 = vst.msk [vmem:[%s847] sm:$0xff] %vm2433, %v2425
      %2435 = vst.msk [vmem:[%s847 + $0x8] sm:$0xff] %vm2433, %v2426
      %2436 = vst.msk [vmem:[%s847 + $0x10] sm:$0xff] %vm2433, %v2427
      %2437 = vst.msk [vmem:[%s847 + $0x18] sm:$0xff] %vm2433, %v2428
      %2438 = vst.msk [vmem:[%s847 + $0x20] sm:$0xff] %vm2433, %v2429
      %2439 = vst.msk [vmem:[%s847 + $0x28] sm:$0xff] %vm2433, %v2430
      %2440 = vst.msk [vmem:[%s847 + $0x30] sm:$0xff] %vm2433, %v2431
      %2441 = vst.msk [vmem:[%s847 + $0x38] sm:$0xff] %vm2433, %v2432
      %s2442 = smul.u32 8, %s30
      %p2443 = scmp.lt.s32.totalorder %s29, 1
      %s2444 = scalar_select %p2443, %s29, 1
      %p2445 = scmp.lt.s32.totalorder %s2442, 7
      %s2446 = scalar_select %p2445, %s2442, 7
      %s2447 = smul.addr %s2444, 8
      %s2448 = sadd.s32 %s2446, %s2447
      %s2449 = smul.addr %s2448, 8
      %s2450 = scalar_lea.vmem %s14, %s2449
      // Predicated region
      $region77: #{downsample_pallas.3} parent=75 // pred_check
        %p2451 = pneg %p421
      $region78: #{downsample_pallas.3} parent=75 // pred_check_branch
        %2453 = sbr.rel (%p2451) target = $region80
      $region79: #{downsample_pallas.3} parent=75 // pred_region
        %s2454 = smul.u32 8, %s30
      $region80: #{downsample_pallas.3} parent=75 // pred_fallthru
        _
    $region76: #{downsample_pallas.3} parent=5 // pred_fallthru
      _
    %p2455 = scmp.le.s32.totalorder 2, %s20
    // Predicated region
    $region81: #{downsample_pallas.3} parent=5 // pred_check
      %p2456 = pneg %p2455
    $region82: #{downsample_pallas.3} parent=5 // pred_check_branch
      %2458 = sbr.rel (%p2456) target = $region84
    $region83: #{downsample_pallas.3} parent=5 // pred_region
      %s2459 = ssub.s32 %s20, 2
      // Predicated region
      $region85: #{downsample_pallas.3} parent=83 // pred_check
        %p2460 = pneg %p427
      $region86: #{downsample_pallas.3} parent=83 // pred_check_branch
        %2462 = sbr.rel (%p2460) target = $region88
      $region87: #{downsample_pallas.3} parent=83 // pred_region
        %s2463 = smul.u32 8, %s32
        %p2464 = scmp.lt.s32.totalorder %s31, 1
        %s2465 = scalar_select %p2464, %s31, 1
        %p2466 = scmp.lt.s32.totalorder %s2463, 7
        %s2467 = scalar_select %p2466, %s2463, 7
        %s2468 = smul.addr %s2465, 8
        %s2469 = sadd.s32 %s2467, %s2468
        %s2470 = smul.addr %s2469, 8
        %s2471 = scalar_lea.vmem %s14, %s2470
      $region88: #{downsample_pallas.3} parent=83 // pred_fallthru
        _
    $region84: #{downsample_pallas.3} parent=5 // pred_fallthru
      _
  $region6: #{downsample_pallas.3} parent=0 // loop_footer
    %s24 = sadd.s32 1, %s20
  $region7: #{downsample_pallas.3} parent=0 // loop_footer_branch
    %19 = sbr.rel target = $region3
  $region8: #{downsample_pallas.3} parent=0 // loop_exit
    _

</llo_original>
